<compile_context>
chip_gen: v6e
topology: v6e:2x2x1
jax: 0.10.0
libtpu: 0.0.40
codegen_flags: <defaults>
</compile_context>

<pallas_src>
import functools

import jax
import jax.numpy as jnp
from jax.experimental import pallas as pl
from jax.experimental.pallas import tpu as pltpu


# ---------------------------------------------------------------------------
# Generation-aware VMEM / tile budgets
# ---------------------------------------------------------------------------
@functools.lru_cache(maxsize=1)
def _tpu_budgets():
    try:
        cap = int(pltpu.get_tpu_info().vmem_capacity_bytes)
    except Exception:                                     # pragma: no cover - conservative fallback
        cap = 64 << 20
    vmem_limit = max(32 << 20, min(int(cap * 0.8), cap - (8 << 20)))
    tile_target = max(2 << 20, cap // 16)                 # ~4 MiB on v7x, ~8 MiB on v5e/v6e
    return vmem_limit, tile_target


def _conv_row_bytes(W, cin, cout, out_mult=1):
    """Rough per-activation-row working set inside a conv kernel (bf16 padded rows +
    bf16 im2col patches + double-buffered f32 input, f32 acc + double-buffered f32 output)."""
    return W * (cin * (2 + 6 + 8) + cout * (4 + 8 * out_mult))


def _pick_tile_h(H, per_row_bytes, target_bytes):
    """Largest divisor of H whose estimated working set fits the budget (th == H allowed)."""
    cap = max(1, min(target_bytes // max(per_row_bytes, 1), H))
    th = 1
    for d in range(1, H + 1):
        if H % d == 0 and d <= cap:
            th = d
    return th


# ---------------------------------------------------------------------------
# Shared in-kernel helpers
# ---------------------------------------------------------------------------
def _norm_act_bf16(v, scale, shift):
    """GroupNorm-apply (precomputed per-channel scale/shift) + SiLU in f32, result in bf16."""
    y = v.astype(jnp.float32) * scale + shift
    return (y * jax.nn.sigmoid(y)).astype(jnp.bfloat16)


def _build_padded_rows(cur, top, bot, i, nh, th, W, C):
    """Assemble the zero-padded (th+2, W+2, C) bf16 tile from the center tile + 1-row halos."""
    top = jnp.where(i > 0, top, jnp.zeros_like(top))          # image-edge halos are zero pad
    bot = jnp.where(i < nh - 1, bot, jnp.zeros_like(bot))
    rows = jnp.concatenate([top, cur, bot], axis=0)           # (th+2, W, C)
    zcol = jnp.zeros((th + 2, 1, C), rows.dtype)
    return jnp.concatenate([zcol, rows, zcol], axis=1)        # (th+2, W+2, C)


def _conv3x3_taps(rows, w_ref, th, W, cin, cout):
    """3 MXU matmuls with K = 3*Cin (bf16 operands, f32 accumulation)."""
    acc = jnp.zeros((th * W, cout), jnp.float32)
    for kh in range(3):
        win = rows[kh:kh + th]                                # (th, W+2, cin) bf16
        patch = jnp.concatenate(
            [win[:, 0:W], win[:, 1:W + 1], win[:, 2:W + 2]], axis=-1)   # (th, W, 3*cin)
        acc = acc + jnp.dot(patch.reshape(th * W, 3 * cin), w_ref[kh],
                            preferred_element_type=jnp.float32)
    return acc


# ---------------------------------------------------------------------------
# Kernel 1: tiled partial GroupNorm statistics (finished with a tiny XLA epilogue)
# ---------------------------------------------------------------------------
def _gn_stats_kernel(x_ref, psum_ref, pssq_ref):
    x = x_ref[0].astype(jnp.float32)                          # (th, W, C)
    psum_ref[...] = jnp.sum(x, axis=(0, 1)).reshape(1, 1, 1, -1)
    pssq_ref[...] = jnp.sum(x * x, axis=(0, 1)).reshape(1, 1, 1, -1)


def gn_partial_stats(x, th, vmem_limit):
    B, H, W, C = x.shape
    nh = H // th
    return pl.pallas_call(
        _gn_stats_kernel,
        out_shape=(jax.ShapeDtypeStruct((B, nh, 1, C), jnp.float32),
                   jax.ShapeDtypeStruct((B, nh, 1, C), jnp.float32)),
        grid=(B, nh),
        in_specs=[pl.BlockSpec((1, th, W, C), lambda b, i: (b, i, 0, 0))],
        out_specs=(pl.BlockSpec((1, 1, 1, C), lambda b, i: (b, i, 0, 0)),
                   pl.BlockSpec((1, 1, 1, C), lambda b, i: (b, i, 0, 0))),
        compiler_params=pltpu.CompilerParams(
            dimension_semantics=("parallel", "parallel"),
            vmem_limit_bytes=vmem_limit),
    )(x)


def _finish_group_norm(psum, pssq, gamma, beta, groups, eps, hw):
    """Per-(batch, channel) scale/shift so that GN(x)*g+b == x*scale + shift. O(B*C) work."""
    B, _, _, C = psum.shape
    cg = C // groups
    count = float(hw * cg)
    s = psum.sum(axis=(1, 2)).reshape(B, groups, cg)
    ss = pssq.sum(axis=(1, 2)).reshape(B, groups, cg)
    mean = s.sum(-1, keepdims=True) / count
    var = jnp.maximum(ss.sum(-1, keepdims=True) / count - mean * mean, 0.0)
    rstd = jax.lax.rsqrt(var + eps)
    mean_c = jnp.broadcast_to(mean, (B, groups, cg)).reshape(B, 1, C)
    rstd_c = jnp.broadcast_to(rstd, (B, groups, cg)).reshape(B, 1, C)
    scale = gamma.reshape(1, 1, C).astype(jnp.float32) * rstd_c
    shift = beta.reshape(1, 1, C).astype(jnp.float32) - mean_c * scale
    return scale, shift


# ---------------------------------------------------------------------------
# Kernel 2: GN-apply + SiLU + conv1 3x3, emitting GN2 partial statistics of its output
# ---------------------------------------------------------------------------
def _gn_act_conv_stats_kernel(th, W, cin, cout,
                              xc_ref, xt_ref, xb_ref, sc_ref, sh_ref, w_ref, b_ref,
                              o_ref, psum_ref, pssq_ref):
    i = pl.program_id(1)
    nh = pl.num_programs(1)
    scale = sc_ref[0].reshape(1, 1, cin)
    shift = sh_ref[0].reshape(1, 1, cin)
    rows = _build_padded_rows(_norm_act_bf16(xc_ref[0], scale, shift),
                              _norm_act_bf16(xt_ref[0], scale, shift),
                              _norm_act_bf16(xb_ref[0], scale, shift),
                              i, nh, th, W, cin)
    y = _conv3x3_taps(rows, w_ref, th, W, cin, cout) + b_ref[...]       # (th*W, cout) f32
    o_ref[0] = y.reshape(th, W, cout).astype(o_ref.dtype)
    psum_ref[...] = jnp.sum(y, axis=0).reshape(1, 1, 1, cout)
    pssq_ref[...] = jnp.sum(y * y, axis=0).reshape(1, 1, 1, cout)


def gn_silu_conv3x3_stats(x, scale, shift, w_hwio, bias, th, vmem_limit):
    B, H, W, Cin = x.shape
    Cout = w_hwio.shape[-1]
    nh = H // th
    w3 = w_hwio.reshape(3, 3 * Cin, Cout).astype(jnp.bfloat16)
    kernel = functools.partial(_gn_act_conv_stats_kernel, th, W, Cin, Cout)
    return pl.pallas_call(
        kernel,
        out_shape=(jax.ShapeDtypeStruct((B, H, W, Cout), x.dtype),
                   jax.ShapeDtypeStruct((B, nh, 1, Cout), jnp.float32),
                   jax.ShapeDtypeStruct((B, nh, 1, Cout), jnp.float32)),
        grid=(B, nh),
        in_specs=[
            pl.BlockSpec((1, th, W, Cin), lambda b, i: (b, i, 0, 0)),
            pl.BlockSpec((1, 1, W, Cin), lambda b, i: (b, jnp.maximum(i * th - 1, 0), 0, 0)),
            pl.BlockSpec((1, 1, W, Cin), lambda b, i: (b, jnp.minimum((i + 1) * th, H - 1), 0, 0)),
            pl.BlockSpec((1, 1, Cin), lambda b, i: (b, 0, 0)),
            pl.BlockSpec((1, 1, Cin), lambda b, i: (b, 0, 0)),
            pl.BlockSpec((3, 3 * Cin, Cout), lambda b, i: (0, 0, 0)),
            pl.BlockSpec((1, Cout), lambda b, i: (0, 0)),
        ],
        out_specs=(pl.BlockSpec((1, th, W, Cout), lambda b, i: (b, i, 0, 0)),
                   pl.BlockSpec((1, 1, 1, Cout), lambda b, i: (b, i, 0, 0)),
                   pl.BlockSpec((1, 1, 1, Cout), lambda b, i: (b, i, 0, 0))),
        compiler_params=pltpu.CompilerParams(
            dimension_semantics=("parallel", "parallel"),
            vmem_limit_bytes=vmem_limit),
    )(x, x, x, scale, shift, w3, bias.reshape(1, Cout).astype(jnp.float32))


# ---------------------------------------------------------------------------
# Kernel 3a: GN-apply + SiLU + conv2 3x3 + identity residual add (Cin == Cout)
# Kernel 3b: GN-apply + SiLU + conv2 3x3 + 1x1-conv shortcut + residual add
# ---------------------------------------------------------------------------
def _gn_act_conv_residual_kernel(th, W, cin, cout,
                                 hc_ref, ht_ref, hb_ref, sc_ref, sh_ref, w_ref, b_ref,
                                 x0_ref, o_ref):
    i = pl.program_id(1)
    nh = pl.num_programs(1)
    scale = sc_ref[0].reshape(1, 1, cin)
    shift = sh_ref[0].reshape(1, 1, cin)
    rows = _build_padded_rows(_norm_act_bf16(hc_ref[0], scale, shift),
                              _norm_act_bf16(ht_ref[0], scale, shift),
                              _norm_act_bf16(hb_ref[0], scale, shift),
                              i, nh, th, W, cin)
    acc = _conv3x3_taps(rows, w_ref, th, W, cin, cout) + b_ref[...]
    out = acc.reshape(th, W, cout) + x0_ref[0].astype(jnp.float32)      # identity shortcut
    o_ref[0] = out.astype(o_ref.dtype)


def _gn_act_conv_shortcut_kernel(th, W, cin, cout, cx,
                                 hc_ref, ht_ref, hb_ref, sc_ref, sh_ref, w_ref, b_ref,
                                 x0_ref, wsc_ref, bsc_ref, o_ref):
    i = pl.program_id(1)
    nh = pl.num_programs(1)
    scale = sc_ref[0].reshape(1, 1, cin)
    shift = sh_ref[0].reshape(1, 1, cin)
    rows = _build_padded_rows(_norm_act_bf16(hc_ref[0], scale, shift),
                              _norm_act_bf16(ht_ref[0], scale, shift),
                              _norm_act_bf16(hb_ref[0], scale, shift),
                              i, nh, th, W, cin)
    acc = _conv3x3_taps(rows, w_ref, th, W, cin, cout)
    x0 = x0_ref[0].astype(jnp.bfloat16).reshape(th * W, cx)
    acc = acc + jnp.dot(x0, wsc_ref[...], preferred_element_type=jnp.float32)
    acc = acc + b_ref[...] + bsc_ref[...]
    o_ref[0] = acc.reshape(th, W, cout).astype(o_ref.dtype)


def gn_silu_conv3x3_add(h, scale, shift, w_hwio, bias, x0, sc_w, sc_b, th, vmem_limit):
    """conv2 of the resnet block. If sc_w is None the shortcut is the identity (Cin == Cout)."""
    B, H, W, Cin = h.shape
    Cout = w_hwio.shape[-1]
    nh = H // th
    w3 = w_hwio.reshape(3, 3 * Cin, Cout).astype(jnp.bfloat16)
    bias2 = bias.reshape(1, Cout).astype(jnp.float32)

    base_specs = [
        pl.BlockSpec((1, th, W, Cin), lambda b, i: (b, i, 0, 0)),
        pl.BlockSpec((1, 1, W, Cin), lambda b, i: (b, jnp.maximum(i * th - 1, 0), 0, 0)),
        pl.BlockSpec((1, 1, W, Cin), lambda b, i: (b, jnp.minimum((i + 1) * th, H - 1), 0, 0)),
        pl.BlockSpec((1, 1, Cin), lambda b, i: (b, 0, 0)),
        pl.BlockSpec((1, 1, Cin), lambda b, i: (b, 0, 0)),
        pl.BlockSpec((3, 3 * Cin, Cout), lambda b, i: (0, 0, 0)),
        pl.BlockSpec((1, Cout), lambda b, i: (0, 0)),
    ]
    cparams = pltpu.CompilerParams(dimension_semantics=("parallel", "parallel"),
                                   vmem_limit_bytes=vmem_limit)
    out_shape = jax.ShapeDtypeStruct((B, H, W, Cout), h.dtype)
    out_spec = pl.BlockSpec((1, th, W, Cout), lambda b, i: (b, i, 0, 0))

    if sc_w is None:
        assert x0.shape[-1] == Cout
        kernel = functools.partial(_gn_act_conv_residual_kernel, th, W, Cin, Cout)
        return pl.pallas_call(
            kernel, out_shape=out_shape, grid=(B, nh),
            in_specs=base_specs + [pl.BlockSpec((1, th, W, Cout), lambda b, i: (b, i, 0, 0))],
            out_specs=out_spec, compiler_params=cparams,
        )(h, h, h, scale, shift, w3, bias2, x0)

    Cx = x0.shape[-1]
    kernel = functools.partial(_gn_act_conv_shortcut_kernel, th, W, Cin, Cout, Cx)
    return pl.pallas_call(
        kernel, out_shape=out_shape, grid=(B, nh),
        in_specs=base_specs + [
            pl.BlockSpec((1, th, W, Cx), lambda b, i: (b, i, 0, 0)),
            pl.BlockSpec((Cx, Cout), lambda b, i: (0, 0)),
            pl.BlockSpec((1, Cout), lambda b, i: (0, 0)),
        ],
        out_specs=out_spec, compiler_params=cparams,
    )(h, h, h, scale, shift, w3, bias2,
      x0, sc_w.astype(jnp.bfloat16), sc_b.reshape(1, Cout).astype(jnp.float32))


# ---------------------------------------------------------------------------
# Kernel 4: fused nearest-2x upsample + 3x3 conv as 4 sub-pixel 2x2 convs.
#           Output stored as (B, H, 2, W, 2*Cout) — a free reshape of (B, 2H, 2W, Cout) —
#           written with one contiguous lane-dense store per tile.
# ---------------------------------------------------------------------------
def _upsample_conv_kernel(th, W, cin, cout,
                          rc_ref, rt_ref, rb_ref, w_ref, b_ref, o_ref):
    i = pl.program_id(1)
    nh = pl.num_programs(1)
    rows = _build_padded_rows(rc_ref[0].astype(jnp.bfloat16),
                              rt_ref[0].astype(jnp.bfloat16),
                              rb_ref[0].astype(jnp.bfloat16), i, nh, th, W, cin)
    bias = b_ref[...]
    phases = []
    for a in range(2):                                        # output row sub-pixel phase
        halves = []
        for bcol in range(2):                                 # output col sub-pixel phase
            acc = jnp.zeros((th * W, cout), jnp.float32)
            for p in range(2):                                # combined 2x2 row taps
                win = rows[a + p:a + p + th]                  # (th, W+2, cin)
                patch = jnp.concatenate(
                    [win[:, bcol:bcol + W], win[:, bcol + 1:bcol + 1 + W]], axis=-1)
                acc = acc + jnp.dot(patch.reshape(th * W, 2 * cin), w_ref[a, bcol, p],
                                    preferred_element_type=jnp.float32)
            halves.append((acc + bias).reshape(th, W, cout))
        phases.append(jnp.concatenate(halves, axis=-1))       # (th, W, 2*cout)
    slab = jnp.stack(phases, axis=1)                          # (th, 2, W, 2*cout)
    o_ref[0] = slab.astype(o_ref.dtype)                       # single lane-dense store


def upsample2x_conv3x3(x, w_hwio, bias, th, vmem_limit):
    B, H, W, Cin = x.shape
    Cout = w_hwio.shape[-1]
    nh = H // th

    # Sub-pixel decomposition of (nearest 2x upsample -> 3x3 conv, pad 1): for output phase
    # a/b in {0,1}, the effective kernel on the low-res input is 2x2 with taps formed by
    # summing the original 3x3 taps that land on the same low-res pixel.
    tap_groups = (([0], [1, 2]), ([0, 1], [2]))               # [phase][tap] -> original kh/kw
    chunks = []
    for a in range(2):
        for bcol in range(2):
            for p in range(2):
                blocks = []
                for q in range(2):
                    wk = jnp.zeros((Cin, Cout), jnp.float32)
                    for kh in tap_groups[a][p]:
                        for kw in tap_groups[bcol][q]:
                            wk = wk + w_hwio[kh, kw].astype(jnp.float32)
                    blocks.append(wk)
                chunks.append(jnp.concatenate(blocks, axis=0))          # (2*Cin, Cout)
    wsub = jnp.stack(chunks, axis=0).reshape(2, 2, 2, 2 * Cin, Cout).astype(jnp.bfloat16)

    kernel = functools.partial(_upsample_conv_kernel, th, W, Cin, Cout)
    out = pl.pallas_call(
        kernel,
        out_shape=jax.ShapeDtypeStruct((B, H, 2, W, 2 * Cout), x.dtype),
        grid=(B, nh),
        in_specs=[
            pl.BlockSpec((1, th, W, Cin), lambda b, i: (b, i, 0, 0)),
            pl.BlockSpec((1, 1, W, Cin), lambda b, i: (b, jnp.maximum(i * th - 1, 0), 0, 0)),
            pl.BlockSpec((1, 1, W, Cin), lambda b, i: (b, jnp.minimum((i + 1) * th, H - 1), 0, 0)),
            pl.BlockSpec((2, 2, 2, 2 * Cin, Cout), lambda b, i: (0, 0, 0, 0, 0)),
            pl.BlockSpec((1, Cout), lambda b, i: (0, 0)),
        ],
        out_specs=pl.BlockSpec((1, th, 2, W, 2 * Cout), lambda b, i: (b, i, 0, 0, 0)),
        compiler_params=pltpu.CompilerParams(
            dimension_semantics=("parallel", "parallel"),
            vmem_limit_bytes=vmem_limit),
    )(x, x, x, wsub, bias.reshape(1, Cout).astype(jnp.float32))
    # (B, H, 2, W, 2*Cout) and (B, 2H, 2W, Cout) share the same row-major layout.
    return out.reshape(B, 2 * H, 2 * W, Cout)


# ---------------------------------------------------------------------------
# Full UpDecoderBlock2D forward (num_layers=1, add_upsample=True, no temp conv)
# ---------------------------------------------------------------------------
def up_decoder_block_2d(x_nchw, params, groups=32, eps=1e-6):
    x = jnp.transpose(x_nchw, (0, 2, 3, 1))                   # NCHW -> NHWC (interface glue)
    B, H, W, Cin = x.shape
    Cout = params["conv1_w"].shape[-1]
    assert Cin % groups == 0 and Cout % groups == 0

    vmem_limit, tile_target = _tpu_budgets()

    # --- ResnetBlock2D (pre_norm, temb=None, output_scale_factor=1.0, eval-mode dropout) ---
    th1 = _pick_tile_h(H, _conv_row_bytes(W, Cin, Cout), tile_target)
    ps1, ss1 = gn_partial_stats(x, th1, vmem_limit)
    sc1, sh1 = _finish_group_norm(ps1, ss1, params["gn1_g"], params["gn1_b"], groups, eps, H * W)

    h, ps2, ss2 = gn_silu_conv3x3_stats(x, sc1, sh1, params["conv1_w"], params["conv1_b"],
                                        th1, vmem_limit)
    sc2, sh2 = _finish_group_norm(ps2, ss2, params["gn2_g"], params["gn2_b"], groups, eps, H * W)

    sw = params.get("sc_w")
    if sw is None:
        assert Cin == Cout                                    # identity shortcut
        sb = None
    else:
        sb = params["sc_b"]
    th2 = _pick_tile_h(H, _conv_row_bytes(W, Cout, Cout) + 12 * W * Cin, tile_target)
    res = gn_silu_conv3x3_add(h, sc2, sh2, params["conv2_w"], params["conv2_b"],
                              x, sw, sb, th2, vmem_limit)

    # --- Upsample2D(use_conv=True): nearest 2x + conv3x3, fully fused ---
    th3 = _pick_tile_h(H, _conv_row_bytes(W, Cout, Cout, out_mult=4), tile_target)
    up = upsample2x_conv3x3(res, params["up_w"], params["up_b"], th3, vmem_limit)

    return jnp.transpose(up, (0, 3, 1, 2))                    # NHWC -> NCHW (interface glue)


# ---------------------------------------------------------------------------
# Pure-JAX reference (f32) for a correctness sanity check
# ---------------------------------------------------------------------------
def _group_norm_ref(v, gamma, beta, groups, eps):
    B, H, W, C = v.shape
    vg = v.reshape(B, H, W, groups, C // groups)
    mean = jnp.mean(vg, axis=(1, 2, 4), keepdims=True)
    var = jnp.mean((vg - mean) ** 2, axis=(1, 2, 4), keepdims=True)
    vn = ((vg - mean) * jax.lax.rsqrt(var + eps)).reshape(B, H, W, C)
    return vn * gamma.reshape(1, 1, 1, C) + beta.reshape(1, 1, 1, C)


def _conv3x3_ref(v, w, b):
    out = jax.lax.conv_general_dilated(v, w, (1, 1), "SAME",
                                       dimension_numbers=("NHWC", "HWIO", "NHWC"))
    return out + b.reshape(1, 1, 1, -1)


def up_decoder_block_2d_reference(x_nchw, params, groups=32, eps=1e-6):
    x = jnp.transpose(x_nchw, (0, 2, 3, 1)).astype(jnp.float32)
    h = _conv3x3_ref(jax.nn.silu(_group_norm_ref(x, params["gn1_g"], params["gn1_b"], groups, eps)),
                     params["conv1_w"], params["conv1_b"])
    h = _conv3x3_ref(jax.nn.silu(_group_norm_ref(h, params["gn2_g"], params["gn2_b"], groups, eps)),
                     params["conv2_w"], params["conv2_b"])
    if params.get("sc_w") is not None:
        sc = jnp.einsum("bhwc,cd->bhwd", x, params["sc_w"]) + params["sc_b"].reshape(1, 1, 1, -1)
    else:
        sc = x
    out = sc + h
    up = jnp.repeat(jnp.repeat(out, 2, axis=1), 2, axis=2)
    up = _conv3x3_ref(up, params["up_w"], params["up_b"])
    return jnp.transpose(up, (0, 3, 1, 2))


def init_params(key, c_in, c_out, with_shortcut):
    ks = jax.random.split(key, 12)
    f32 = jnp.float32

    def conv_w(k, kh, kw, ci, co):
        scale = 1.0 / jnp.sqrt(f32(kh * kw * ci))
        return jax.random.normal(k, (kh, kw, ci, co), f32) * scale

    p = {
        "gn1_g": 1.0 + 0.1 * jax.random.normal(ks[0], (c_in,), f32),
        "gn1_b": 0.1 * jax.random.normal(ks[1], (c_in,), f32),
        "conv1_w": conv_w(ks[2], 3, 3, c_in, c_out),
        "conv1_b": 0.05 * jax.random.normal(ks[3], (c_out,), f32),
        "gn2_g": 1.0 + 0.1 * jax.random.normal(ks[4], (c_out,), f32),
        "gn2_b": 0.1 * jax.random.normal(ks[5], (c_out,), f32),
        "conv2_w": conv_w(ks[6], 3, 3, c_out, c_out),
        "conv2_b": 0.05 * jax.random.normal(ks[7], (c_out,), f32),
        "up_w": conv_w(ks[10], 3, 3, c_out, c_out),
        "up_b": 0.05 * jax.random.normal(ks[11], (c_out,), f32),
    }
    if with_shortcut:
        p["sc_w"] = conv_w(ks[8], 1, 1, c_in, c_out)[0, 0]     # (c_in, c_out)
        p["sc_b"] = 0.05 * jax.random.normal(ks[9], (c_out,), f32)
    return p


if __name__ == "__main__":
    key = jax.random.PRNGKey(0)
    fwd = jax.jit(up_decoder_block_2d)

    # Channels must be multiples of the 32 GroupNorm groups.
    configs = [
        (2, 64, 32, 8, 8),   # in != out: exercises the 1x1 conv-shortcut kernel
        (1, 32, 32, 8, 8),   # in == out: exercises the fused identity-residual kernel
    ]
    for (B, C_IN, C_OUT, H, W) in configs:
        key, kx, kp = jax.random.split(key, 3)
        x = jax.random.normal(kx, (B, C_IN, H, W), jnp.float32)        # NCHW, like PyTorch
        params = init_params(kp, C_IN, C_OUT, with_shortcut=(C_IN != C_OUT))

        out = jax.block_until_ready(fwd(x, params))
        assert out.shape == (B, C_OUT, 2 * H, 2 * W), out.shape
        assert out.dtype == jnp.float32
        assert bool(jnp.all(jnp.isfinite(out)))

        ref = jax.block_until_ready(up_decoder_block_2d_reference(x, params))
        assert bool(jnp.allclose(out, ref, atol=5e-2, rtol=5e-2)), (
            "config %s: max abs diff vs reference = %f"
            % ((B, C_IN, C_OUT, H, W), float(jnp.max(jnp.abs(out - ref)))))

    print("KERNEL_OK")
</pallas_src>

<mosaic_0001>
module attributes {stable_mosaic.version = 11 : i64} {
  func.func @_gn_stats_kernel(%arg0: i32, %arg1: i32, %arg2: memref<1x8x8x64xf32, #tpu.memory_space<vmem>>, %arg3: memref<1x1x1x64xf32, #tpu.memory_space<vmem>>, %arg4: memref<1x1x1x64xf32, #tpu.memory_space<vmem>>) attributes {dimension_semantics = [#tpu.dimension_semantics<parallel>, #tpu.dimension_semantics<parallel>], iteration_bounds = array<i64: 2, 1>, scalar_prefetch = 0 : i64, scratch_operands = 0 : i64, tpu.core_type = #tpu.core_type<tc>, window_params = [{transform_indices = @transform_0, window_bounds = array<i64: 1, 8, 8, 64>}, {transform_indices = @transform_1, window_bounds = array<i64: 1, 1, 1, 64>}, {transform_indices = @transform_2, window_bounds = array<i64: 1, 1, 1, 64>}]} {
    %c0 = arith.constant 0 : index
    %c0_0 = arith.constant 0 : index
    %c0_1 = arith.constant 0 : index
    %c0_2 = arith.constant 0 : index
    %0 = vector.load %arg2[%c0, %c0_0, %c0_1, %c0_2] : memref<1x8x8x64xf32, #tpu.memory_space<vmem>>, vector<1x8x8x64xf32>
    %1 = vector.shape_cast %0 : vector<1x8x8x64xf32> to vector<8x8x64xf32>
    %cst = arith.constant dense<0.000000e+00> : vector<64xf32>
    %2 = vector.multi_reduction <add>, %1, %cst [0, 1] : vector<8x8x64xf32> to vector<64xf32>
    %3 = vector.shape_cast %2 : vector<64xf32> to vector<1x1x1x64xf32>
    %c0_3 = arith.constant 0 : index
    %c0_4 = arith.constant 0 : index
    %c0_5 = arith.constant 0 : index
    %c0_6 = arith.constant 0 : index
    %4 = vector.load %arg3[%c0_3, %c0_4, %c0_5, %c0_6] : memref<1x1x1x64xf32, #tpu.memory_space<vmem>>, vector<1x1x1x64xf32>
    tpu.vector_store %arg3[%c0_3, %c0_4, %c0_5, %c0_6], %3 {strides = array<i32>} : memref<1x1x1x64xf32, #tpu.memory_space<vmem>>, vector<1x1x1x64xf32>,
    %5 = arith.mulf %1, %1 : vector<8x8x64xf32>
    %cst_7 = arith.constant dense<0.000000e+00> : vector<64xf32>
    %6 = vector.multi_reduction <add>, %5, %cst_7 [0, 1] : vector<8x8x64xf32> to vector<64xf32>
    %7 = vector.shape_cast %6 : vector<64xf32> to vector<1x1x1x64xf32>
    %c0_8 = arith.constant 0 : index
    %c0_9 = arith.constant 0 : index
    %c0_10 = arith.constant 0 : index
    %c0_11 = arith.constant 0 : index
    %8 = vector.load %arg4[%c0_8, %c0_9, %c0_10, %c0_11] : memref<1x1x1x64xf32, #tpu.memory_space<vmem>>, vector<1x1x1x64xf32>
    tpu.vector_store %arg4[%c0_8, %c0_9, %c0_10, %c0_11], %7 {strides = array<i32>} : memref<1x1x1x64xf32, #tpu.memory_space<vmem>>, vector<1x1x1x64xf32>,
    return
  }
  func.func @transform_0(%arg0: i32, %arg1: i32) -> (i32, i32, i32, i32) {
    %c0_i32 = arith.constant 0 : i32
    %c0_i32_0 = arith.constant 0 : i32
    %c0_i32_1 = arith.constant 0 : i32
    return %arg0, %arg1, %c0_i32, %c0_i32_0 : i32, i32, i32, i32
  }
  func.func @transform_1(%arg0: i32, %arg1: i32) -> (i32, i32, i32, i32) {
    %c0_i32 = arith.constant 0 : i32
    %c0_i32_0 = arith.constant 0 : i32
    %c0_i32_1 = arith.constant 0 : i32
    return %arg0, %arg1, %c0_i32, %c0_i32_0 : i32, i32, i32, i32
  }
  func.func @transform_2(%arg0: i32, %arg1: i32) -> (i32, i32, i32, i32) {
    %c0_i32 = arith.constant 0 : i32
    %c0_i32_0 = arith.constant 0 : i32
    %c0_i32_1 = arith.constant 0 : i32
    return %arg0, %arg1, %c0_i32, %c0_i32_0 : i32, i32, i32, i32
  }
}

module attributes {stable_mosaic.version = 11 : i64} {
  func.func @_gn_act_conv_stats_kernel(%arg0: i32, %arg1: i32, %arg2: memref<1x8x8x64xf32, #tpu.memory_space<vmem>>, %arg3: memref<1x1x8x64xf32, #tpu.memory_space<vmem>>, %arg4: memref<1x1x8x64xf32, #tpu.memory_space<vmem>>, %arg5: memref<1x1x64xf32, #tpu.memory_space<vmem>>, %arg6: memref<1x1x64xf32, #tpu.memory_space<vmem>>, %arg7: memref<3x192x32xbf16, #tpu.memory_space<vmem>>, %arg8: memref<1x32xf32, #tpu.memory_space<vmem>>, %arg9: memref<1x8x8x32xf32, #tpu.memory_space<vmem>>, %arg10: memref<1x1x1x32xf32, #tpu.memory_space<vmem>>, %arg11: memref<1x1x1x32xf32, #tpu.memory_space<vmem>>) attributes {dimension_semantics = [#tpu.dimension_semantics<parallel>, #tpu.dimension_semantics<parallel>], iteration_bounds = array<i64: 2, 1>, scalar_prefetch = 0 : i64, scratch_operands = 0 : i64, tpu.core_type = #tpu.core_type<tc>, window_params = [{transform_indices = @transform_0, window_bounds = array<i64: 1, 8, 8, 64>}, {transform_indices = @transform_1, window_bounds = array<i64: 1, 1, 8, 64>}, {transform_indices = @transform_2, window_bounds = array<i64: 1, 1, 8, 64>}, {transform_indices = @transform_3, window_bounds = array<i64: 1, 1, 64>}, {transform_indices = @transform_4, window_bounds = array<i64: 1, 1, 64>}, {pipeline_mode = #tpu.pipeline_mode<synchronous>, transform_indices = @transform_5, window_bounds = array<i64: 3, 192, 32>}, {pipeline_mode = #tpu.pipeline_mode<synchronous>, transform_indices = @transform_6, window_bounds = array<i64: 1, 32>}, {transform_indices = @transform_7, window_bounds = array<i64: 1, 8, 8, 32>}, {transform_indices = @transform_8, window_bounds = array<i64: 1, 1, 1, 32>}, {transform_indices = @transform_9, window_bounds = array<i64: 1, 1, 1, 32>}]} {
    %c0 = arith.constant 0 : index
    %c0_0 = arith.constant 0 : index
    %c0_1 = arith.constant 0 : index
    %0 = vector.load %arg5[%c0, %c0_0, %c0_1] : memref<1x1x64xf32, #tpu.memory_space<vmem>>, vector<1x1x64xf32>
    %1 = vector.shape_cast %0 : vector<1x1x64xf32> to vector<1x64xf32>
    %2 = vector.shape_cast %1 : vector<1x64xf32> to vector<1x1x64xf32>
    %c0_2 = arith.constant 0 : index
    %c0_3 = arith.constant 0 : index
    %c0_4 = arith.constant 0 : index
    %3 = vector.load %arg6[%c0_2, %c0_3, %c0_4] : memref<1x1x64xf32, #tpu.memory_space<vmem>>, vector<1x1x64xf32>
    %4 = vector.shape_cast %3 : vector<1x1x64xf32> to vector<1x64xf32>
    %5 = vector.shape_cast %4 : vector<1x64xf32> to vector<1x1x64xf32>
    %c0_5 = arith.constant 0 : index
    %c0_6 = arith.constant 0 : index
    %c0_7 = arith.constant 0 : index
    %c0_8 = arith.constant 0 : index
    %6 = vector.load %arg2[%c0_5, %c0_6, %c0_7, %c0_8] : memref<1x8x8x64xf32, #tpu.memory_space<vmem>>, vector<1x8x8x64xf32>
    %7 = vector.shape_cast %6 : vector<1x8x8x64xf32> to vector<8x8x64xf32>
    %8 = vector.broadcast %2 : vector<1x1x64xf32> to vector<8x8x64xf32>
    %9 = arith.mulf %7, %8 : vector<8x8x64xf32>
    %10 = vector.broadcast %5 : vector<1x1x64xf32> to vector<8x8x64xf32>
    %11 = arith.addf %9, %10 : vector<8x8x64xf32>
    %12 = arith.negf %11 : vector<8x8x64xf32>
    %13 = math.exp %12 : vector<8x8x64xf32>
    %cst = arith.constant 1.000000e+00 : f32
    %14 = vector.broadcast %cst : f32 to vector<8x8x64xf32>
    %15 = arith.addf %14, %13 : vector<8x8x64xf32>
    %16 = arith.divf %14, %15 : vector<8x8x64xf32>
    %17 = arith.mulf %11, %16 : vector<8x8x64xf32>
    %18 = arith.truncf %17 : vector<8x8x64xf32> to vector<8x8x64xbf16>
    %c0_9 = arith.constant 0 : index
    %c0_10 = arith.constant 0 : index
    %c0_11 = arith.constant 0 : index
    %c0_12 = arith.constant 0 : index
    %19 = vector.load %arg3[%c0_9, %c0_10, %c0_11, %c0_12] : memref<1x1x8x64xf32, #tpu.memory_space<vmem>>, vector<1x1x8x64xf32>
    %20 = vector.shape_cast %19 : vector<1x1x8x64xf32> to vector<1x8x64xf32>
    %21 = vector.broadcast %2 : vector<1x1x64xf32> to vector<1x8x64xf32>
    %22 = arith.mulf %20, %21 : vector<1x8x64xf32>
    %23 = vector.broadcast %5 : vector<1x1x64xf32> to vector<1x8x64xf32>
    %24 = arith.addf %22, %23 : vector<1x8x64xf32>
    %25 = arith.negf %24 : vector<1x8x64xf32>
    %26 = math.exp %25 : vector<1x8x64xf32>
    %cst_13 = arith.constant 1.000000e+00 : f32
    %27 = vector.broadcast %cst_13 : f32 to vector<1x8x64xf32>
    %28 = arith.addf %27, %26 : vector<1x8x64xf32>
    %29 = arith.divf %27, %28 : vector<1x8x64xf32>
    %30 = arith.mulf %24, %29 : vector<1x8x64xf32>
    %31 = arith.truncf %30 : vector<1x8x64xf32> to vector<1x8x64xbf16>
    %c0_14 = arith.constant 0 : index
    %c0_15 = arith.constant 0 : index
    %c0_16 = arith.constant 0 : index
    %c0_17 = arith.constant 0 : index
    %32 = vector.load %arg4[%c0_14, %c0_15, %c0_16, %c0_17] : memref<1x1x8x64xf32, #tpu.memory_space<vmem>>, vector<1x1x8x64xf32>
    %33 = vector.shape_cast %32 : vector<1x1x8x64xf32> to vector<1x8x64xf32>
    %34 = vector.broadcast %2 : vector<1x1x64xf32> to vector<1x8x64xf32>
    %35 = arith.mulf %33, %34 : vector<1x8x64xf32>
    %36 = vector.broadcast %5 : vector<1x1x64xf32> to vector<1x8x64xf32>
    %37 = arith.addf %35, %36 : vector<1x8x64xf32>
    %38 = arith.negf %37 : vector<1x8x64xf32>
    %39 = math.exp %38 : vector<1x8x64xf32>
    %cst_18 = arith.constant 1.000000e+00 : f32
    %40 = vector.broadcast %cst_18 : f32 to vector<1x8x64xf32>
    %41 = arith.addf %40, %39 : vector<1x8x64xf32>
    %42 = arith.divf %40, %41 : vector<1x8x64xf32>
    %43 = arith.mulf %37, %42 : vector<1x8x64xf32>
    %44 = arith.truncf %43 : vector<1x8x64xf32> to vector<1x8x64xbf16>
    %c0_i32 = arith.constant 0 : i32
    %45 = arith.cmpi sgt, %arg1, %c0_i32 : i32
    %cst_19 = arith.constant 0.000000e+00 : bf16
    %46 = vector.broadcast %cst_19 : bf16 to vector<1x8x64xbf16>
    %47 = arith.select %45, %31, %46 : vector<1x8x64xbf16>
    %c0_i32_20 = arith.constant 0 : i32
    %48 = arith.cmpi slt, %arg1, %c0_i32_20 : i32
    %cst_21 = arith.constant 0.000000e+00 : bf16
    %49 = vector.broadcast %cst_21 : bf16 to vector<1x8x64xbf16>
    %50 = arith.select %48, %44, %49 : vector<1x8x64xbf16>
    %51 = tpu.concatenate %47, %18, %50 in 0 : vector<1x8x64xbf16>, vector<8x8x64xbf16>, vector<1x8x64xbf16> -> vector<10x8x64xbf16>
    %cst_22 = arith.constant 0.000000e+00 : bf16
    %52 = vector.broadcast %cst_22 : bf16 to vector<10x1x64xbf16>
    %53 = tpu.concatenate %52, %51, %52 in 1 : vector<10x1x64xbf16>, vector<10x8x64xbf16>, vector<10x1x64xbf16> -> vector<10x10x64xbf16>
    %cst_23 = arith.constant 0.000000e+00 : f32
    %54 = vector.broadcast %cst_23 : f32 to vector<64x32xf32>
    %55 = vector.extract_strided_slice %53 {offsets = [0, 0, 0], sizes = [8, 10, 64], strides = [1, 1, 1]} : vector<10x10x64xbf16> to vector<8x10x64xbf16>
    %56 = vector.extract_strided_slice %55 {offsets = [0, 0, 0], sizes = [8, 8, 64], strides = [1, 1, 1]} : vector<8x10x64xbf16> to vector<8x8x64xbf16>
    %57 = vector.extract_strided_slice %55 {offsets = [0, 1, 0], sizes = [8, 8, 64], strides = [1, 1, 1]} : vector<8x10x64xbf16> to vector<8x8x64xbf16>
    %58 = vector.extract_strided_slice %55 {offsets = [0, 2, 0], sizes = [8, 8, 64], strides = [1, 1, 1]} : vector<8x10x64xbf16> to vector<8x8x64xbf16>
    %59 = tpu.concatenate %56, %57, %58 in 2 : vector<8x8x64xbf16>, vector<8x8x64xbf16>, vector<8x8x64xbf16> -> vector<8x8x192xbf16>
    %60 = vector.shape_cast %59 : vector<8x8x192xbf16> to vector<64x192xbf16>
    %c0_24 = arith.constant 0 : index
    %c0_25 = arith.constant 0 : index
    %c0_26 = arith.constant 0 : index
    %61 = vector.load %arg7[%c0_24, %c0_25, %c0_26] : memref<3x192x32xbf16, #tpu.memory_space<vmem>>, vector<1x192x32xbf16>
    %62 = vector.shape_cast %61 : vector<1x192x32xbf16> to vector<192x32xbf16>
    %cst_27 = arith.constant dense<0.000000e+00> : vector<64x32xf32>
    %63 = tpu.matmul %60, %62, %cst_27 {dimension_numbers = #tpu.dot_dimension_numbers<[1], [0], [0], [1], [0, 0, 1, 1], [], []>} : vector<64x192xbf16>, vector<192x32xbf16>, vector<64x32xf32> -> vector<64x32xf32>
    %64 = arith.addf %54, %63 : vector<64x32xf32>
    %65 = vector.extract_strided_slice %53 {offsets = [1, 0, 0], sizes = [8, 10, 64], strides = [1, 1, 1]} : vector<10x10x64xbf16> to vector<8x10x64xbf16>
    %66 = vector.extract_strided_slice %65 {offsets = [0, 0, 0], sizes = [8, 8, 64], strides = [1, 1, 1]} : vector<8x10x64xbf16> to vector<8x8x64xbf16>
    %67 = vector.extract_strided_slice %65 {offsets = [0, 1, 0], sizes = [8, 8, 64], strides = [1, 1, 1]} : vector<8x10x64xbf16> to vector<8x8x64xbf16>
    %68 = vector.extract_strided_slice %65 {offsets = [0, 2, 0], sizes = [8, 8, 64], strides = [1, 1, 1]} : vector<8x10x64xbf16> to vector<8x8x64xbf16>
    %69 = tpu.concatenate %66, %67, %68 in 2 : vector<8x8x64xbf16>, vector<8x8x64xbf16>, vector<8x8x64xbf16> -> vector<8x8x192xbf16>
    %70 = vector.shape_cast %69 : vector<8x8x192xbf16> to vector<64x192xbf16>
    %c1 = arith.constant 1 : index
    %c0_28 = arith.constant 0 : index
    %c0_29 = arith.constant 0 : index
    %71 = vector.load %arg7[%c1, %c0_28, %c0_29] : memref<3x192x32xbf16, #tpu.memory_space<vmem>>, vector<1x192x32xbf16>
    %72 = vector.shape_cast %71 : vector<1x192x32xbf16> to vector<192x32xbf16>
    %cst_30 = arith.constant dense<0.000000e+00> : vector<64x32xf32>
    %73 = tpu.matmul %70, %72, %cst_30 {dimension_numbers = #tpu.dot_dimension_numbers<[1], [0], [0], [1], [0, 0, 1, 1], [], []>} : vector<64x192xbf16>, vector<192x32xbf16>, vector<64x32xf32> -> vector<64x32xf32>
    %74 = arith.addf %64, %73 : vector<64x32xf32>
    %75 = vector.extract_strided_slice %53 {offsets = [2, 0, 0], sizes = [8, 10, 64], strides = [1, 1, 1]} : vector<10x10x64xbf16> to vector<8x10x64xbf16>
    %76 = vector.extract_strided_slice %75 {offsets = [0, 0, 0], sizes = [8, 8, 64], strides = [1, 1, 1]} : vector<8x10x64xbf16> to vector<8x8x64xbf16>
    %77 = vector.extract_strided_slice %75 {offsets = [0, 1, 0], sizes = [8, 8, 64], strides = [1, 1, 1]} : vector<8x10x64xbf16> to vector<8x8x64xbf16>
    %78 = vector.extract_strided_slice %75 {offsets = [0, 2, 0], sizes = [8, 8, 64], strides = [1, 1, 1]} : vector<8x10x64xbf16> to vector<8x8x64xbf16>
    %79 = tpu.concatenate %76, %77, %78 in 2 : vector<8x8x64xbf16>, vector<8x8x64xbf16>, vector<8x8x64xbf16> -> vector<8x8x192xbf16>
    %80 = vector.shape_cast %79 : vector<8x8x192xbf16> to vector<64x192xbf16>
    %c2 = arith.constant 2 : index
    %c0_31 = arith.constant 0 : index
    %c0_32 = arith.constant 0 : index
    %81 = vector.load %arg7[%c2, %c0_31, %c0_32] : memref<3x192x32xbf16, #tpu.memory_space<vmem>>, vector<1x192x32xbf16>
    %82 = vector.shape_cast %81 : vector<1x192x32xbf16> to vector<192x32xbf16>
    %cst_33 = arith.constant dense<0.000000e+00> : vector<64x32xf32>
    %83 = tpu.matmul %80, %82, %cst_33 {dimension_numbers = #tpu.dot_dimension_numbers<[1], [0], [0], [1], [0, 0, 1, 1], [], []>} : vector<64x192xbf16>, vector<192x32xbf16>, vector<64x32xf32> -> vector<64x32xf32>
    %84 = arith.addf %74, %83 : vector<64x32xf32>
    %c0_34 = arith.constant 0 : index
    %c0_35 = arith.constant 0 : index
    %85 = vector.load %arg8[%c0_34, %c0_35] : memref<1x32xf32, #tpu.memory_space<vmem>>, vector<1x32xf32>
    %86 = vector.broadcast %85 : vector<1x32xf32> to vector<64x32xf32>
    %87 = arith.addf %84, %86 : vector<64x32xf32>
    %88 = vector.shape_cast %87 : vector<64x32xf32> to vector<8x8x32xf32>
    %c0_36 = arith.constant 0 : index
    %c0_37 = arith.constant 0 : index
    %c0_38 = arith.constant 0 : index
    %c0_39 = arith.constant 0 : index
    %89 = vector.load %arg9[%c0_36, %c0_37, %c0_38, %c0_39] : memref<1x8x8x32xf32, #tpu.memory_space<vmem>>, vector<1x8x8x32xf32>
    %90 = vector.shape_cast %89 : vector<1x8x8x32xf32> to vector<8x8x32xf32>
    %91 = vector.shape_cast %88 : vector<8x8x32xf32> to vector<1x8x8x32xf32>
    tpu.vector_store %arg9[%c0_36, %c0_37, %c0_38, %c0_39], %91 {strides = array<i32>} : memref<1x8x8x32xf32, #tpu.memory_space<vmem>>, vector<1x8x8x32xf32>,
    %cst_40 = arith.constant dense<0.000000e+00> : vector<32xf32>
    %92 = vector.multi_reduction <add>, %87, %cst_40 [0] : vector<64x32xf32> to vector<32xf32>
    %93 = vector.shape_cast %92 : vector<32xf32> to vector<1x1x1x32xf32>
    %c0_41 = arith.constant 0 : index
    %c0_42 = arith.constant 0 : index
    %c0_43 = arith.constant 0 : index
    %c0_44 = arith.constant 0 : index
    %94 = vector.load %arg10[%c0_41, %c0_42, %c0_43, %c0_44] : memref<1x1x1x32xf32, #tpu.memory_space<vmem>>, vector<1x1x1x32xf32>
    tpu.vector_store %arg10[%c0_41, %c0_42, %c0_43, %c0_44], %93 {strides = array<i32>} : memref<1x1x1x32xf32, #tpu.memory_space<vmem>>, vector<1x1x1x32xf32>,
    %95 = arith.mulf %87, %87 : vector<64x32xf32>
    %cst_45 = arith.constant dense<0.000000e+00> : vector<32xf32>
    %96 = vector.multi_reduction <add>, %95, %cst_45 [0] : vector<64x32xf32> to vector<32xf32>
    %97 = vector.shape_cast %96 : vector<32xf32> to vector<1x1x1x32xf32>
    %c0_46 = arith.constant 0 : index
    %c0_47 = arith.constant 0 : index
    %c0_48 = arith.constant 0 : index
    %c0_49 = arith.constant 0 : index
    %98 = vector.load %arg11[%c0_46, %c0_47, %c0_48, %c0_49] : memref<1x1x1x32xf32, #tpu.memory_space<vmem>>, vector<1x1x1x32xf32>
    tpu.vector_store %arg11[%c0_46, %c0_47, %c0_48, %c0_49], %97 {strides = array<i32>} : memref<1x1x1x32xf32, #tpu.memory_space<vmem>>, vector<1x1x1x32xf32>,
    return
  }
  func.func @transform_0(%arg0: i32, %arg1: i32) -> (i32, i32, i32, i32) {
    %c0_i32 = arith.constant 0 : i32
    %c0_i32_0 = arith.constant 0 : i32
    %c0_i32_1 = arith.constant 0 : i32
    return %arg0, %arg1, %c0_i32, %c0_i32_0 : i32, i32, i32, i32
  }
  func.func @transform_1(%arg0: i32, %arg1: i32) -> (i32, i32, i32, i32) {
    %c8_i32 = arith.constant 8 : i32
    %0 = arith.muli %arg1, %c8_i32 : i32
    %c1_i32 = arith.constant 1 : i32
    %1 = arith.subi %0, %c1_i32 : i32
    %c0_i32 = arith.constant 0 : i32
    %2 = arith.maxsi %1, %c0_i32 : i32
    %c0_i32_0 = arith.constant 0 : i32
    %c0_i32_1 = arith.constant 0 : i32
    %c0_i32_2 = arith.constant 0 : i32
    return %arg0, %2, %c0_i32_0, %c0_i32_1 : i32, i32, i32, i32
  }
  func.func @transform_2(%arg0: i32, %arg1: i32) -> (i32, i32, i32, i32) {
    %c1_i32 = arith.constant 1 : i32
    %0 = arith.addi %arg1, %c1_i32 : i32
    %c8_i32 = arith.constant 8 : i32
    %1 = arith.muli %0, %c8_i32 : i32
    %c7_i32 = arith.constant 7 : i32
    %2 = arith.minsi %1, %c7_i32 : i32
    %c0_i32 = arith.constant 0 : i32
    %c0_i32_0 = arith.constant 0 : i32
    %c0_i32_1 = arith.constant 0 : i32
    return %arg0, %2, %c0_i32, %c0_i32_0 : i32, i32, i32, i32
  }
  func.func @transform_3(%arg0: i32, %arg1: i32) -> (i32, i32, i32) {
    %c0_i32 = arith.constant 0 : i32
    %c0_i32_0 = arith.constant 0 : i32
    %c0_i32_1 = arith.constant 0 : i32
    return %arg0, %c0_i32, %c0_i32_0 : i32, i32, i32
  }
  func.func @transform_4(%arg0: i32, %arg1: i32) -> (i32, i32, i32) {
    %c0_i32 = arith.constant 0 : i32
    %c0_i32_0 = arith.constant 0 : i32
    %c0_i32_1 = arith.constant 0 : i32
    return %arg0, %c0_i32, %c0_i32_0 : i32, i32, i32
  }
  func.func @transform_5(%arg0: i32, %arg1: i32) -> (i32, i32, i32) {
    %c0_i32 = arith.constant 0 : i32
    %c0_i32_0 = arith.constant 0 : i32
    %c0_i32_1 = arith.constant 0 : i32
    %c0_i32_2 = arith.constant 0 : i32
    return %c0_i32, %c0_i32_0, %c0_i32_1 : i32, i32, i32
  }
  func.func @transform_6(%arg0: i32, %arg1: i32) -> (i32, i32) {
    %c0_i32 = arith.constant 0 : i32
    %c0_i32_0 = arith.constant 0 : i32
    %c0_i32_1 = arith.constant 0 : i32
    return %c0_i32, %c0_i32_0 : i32, i32
  }
  func.func @transform_7(%arg0: i32, %arg1: i32) -> (i32, i32, i32, i32) {
    %c0_i32 = arith.constant 0 : i32
    %c0_i32_0 = arith.constant 0 : i32
    %c0_i32_1 = arith.constant 0 : i32
    return %arg0, %arg1, %c0_i32, %c0_i32_0 : i32, i32, i32, i32
  }
  func.func @transform_8(%arg0: i32, %arg1: i32) -> (i32, i32, i32, i32) {
    %c0_i32 = arith.constant 0 : i32
    %c0_i32_0 = arith.constant 0 : i32
    %c0_i32_1 = arith.constant 0 : i32
    return %arg0, %arg1, %c0_i32, %c0_i32_0 : i32, i32, i32, i32
  }
  func.func @transform_9(%arg0: i32, %arg1: i32) -> (i32, i32, i32, i32) {
    %c0_i32 = arith.constant 0 : i32
    %c0_i32_0 = arith.constant 0 : i32
    %c0_i32_1 = arith.constant 0 : i32
    return %arg0, %arg1, %c0_i32, %c0_i32_0 : i32, i32, i32, i32
  }
}

module attributes {stable_mosaic.version = 11 : i64} {
  func.func @_gn_act_conv_shortcut_kernel(%arg0: i32, %arg1: i32, %arg2: memref<1x8x8x32xf32, #tpu.memory_space<vmem>>, %arg3: memref<1x1x8x32xf32, #tpu.memory_space<vmem>>, %arg4: memref<1x1x8x32xf32, #tpu.memory_space<vmem>>, %arg5: memref<1x1x32xf32, #tpu.memory_space<vmem>>, %arg6: memref<1x1x32xf32, #tpu.memory_space<vmem>>, %arg7: memref<3x96x32xbf16, #tpu.memory_space<vmem>>, %arg8: memref<1x32xf32, #tpu.memory_space<vmem>>, %arg9: memref<1x8x8x64xf32, #tpu.memory_space<vmem>>, %arg10: memref<64x32xbf16, #tpu.memory_space<vmem>>, %arg11: memref<1x32xf32, #tpu.memory_space<vmem>>, %arg12: memref<1x8x8x32xf32, #tpu.memory_space<vmem>>) attributes {dimension_semantics = [#tpu.dimension_semantics<parallel>, #tpu.dimension_semantics<parallel>], iteration_bounds = array<i64: 2, 1>, scalar_prefetch = 0 : i64, scratch_operands = 0 : i64, tpu.core_type = #tpu.core_type<tc>, window_params = [{transform_indices = @transform_0, window_bounds = array<i64: 1, 8, 8, 32>}, {transform_indices = @transform_1, window_bounds = array<i64: 1, 1, 8, 32>}, {transform_indices = @transform_2, window_bounds = array<i64: 1, 1, 8, 32>}, {transform_indices = @transform_3, window_bounds = array<i64: 1, 1, 32>}, {transform_indices = @transform_4, window_bounds = array<i64: 1, 1, 32>}, {pipeline_mode = #tpu.pipeline_mode<synchronous>, transform_indices = @transform_5, window_bounds = array<i64: 3, 96, 32>}, {pipeline_mode = #tpu.pipeline_mode<synchronous>, transform_indices = @transform_6, window_bounds = array<i64: 1, 32>}, {transform_indices = @transform_7, window_bounds = array<i64: 1, 8, 8, 64>}, {pipeline_mode = #tpu.pipeline_mode<synchronous>, transform_indices = @transform_8, window_bounds = array<i64: 64, 32>}, {pipeline_mode = #tpu.pipeline_mode<synchronous>, transform_indices = @transform_9, window_bounds = array<i64: 1, 32>}, {transform_indices = @transform_10, window_bounds = array<i64: 1, 8, 8, 32>}]} {
    %c0 = arith.constant 0 : index
    %c0_0 = arith.constant 0 : index
    %c0_1 = arith.constant 0 : index
    %0 = vector.load %arg5[%c0, %c0_0, %c0_1] : memref<1x1x32xf32, #tpu.memory_space<vmem>>, vector<1x1x32xf32>
    %1 = vector.shape_cast %0 : vector<1x1x32xf32> to vector<1x32xf32>
    %2 = vector.shape_cast %1 : vector<1x32xf32> to vector<1x1x32xf32>
    %c0_2 = arith.constant 0 : index
    %c0_3 = arith.constant 0 : index
    %c0_4 = arith.constant 0 : index
    %3 = vector.load %arg6[%c0_2, %c0_3, %c0_4] : memref<1x1x32xf32, #tpu.memory_space<vmem>>, vector<1x1x32xf32>
    %4 = vector.shape_cast %3 : vector<1x1x32xf32> to vector<1x32xf32>
    %5 = vector.shape_cast %4 : vector<1x32xf32> to vector<1x1x32xf32>
    %c0_5 = arith.constant 0 : index
    %c0_6 = arith.constant 0 : index
    %c0_7 = arith.constant 0 : index
    %c0_8 = arith.constant 0 : index
    %6 = vector.load %arg2[%c0_5, %c0_6, %c0_7, %c0_8] : memref<1x8x8x32xf32, #tpu.memory_space<vmem>>, vector<1x8x8x32xf32>
    %7 = vector.shape_cast %6 : vector<1x8x8x32xf32> to vector<8x8x32xf32>
    %8 = vector.broadcast %2 : vector<1x1x32xf32> to vector<8x8x32xf32>
    %9 = arith.mulf %7, %8 : vector<8x8x32xf32>
    %10 = vector.broadcast %5 : vector<1x1x32xf32> to vector<8x8x32xf32>
    %11 = arith.addf %9, %10 : vector<8x8x32xf32>
    %12 = arith.negf %11 : vector<8x8x32xf32>
    %13 = math.exp %12 : vector<8x8x32xf32>
    %cst = arith.constant 1.000000e+00 : f32
    %14 = vector.broadcast %cst : f32 to vector<8x8x32xf32>
    %15 = arith.addf %14, %13 : vector<8x8x32xf32>
    %16 = arith.divf %14, %15 : vector<8x8x32xf32>
    %17 = arith.mulf %11, %16 : vector<8x8x32xf32>
    %18 = arith.truncf %17 : vector<8x8x32xf32> to vector<8x8x32xbf16>
    %c0_9 = arith.constant 0 : index
    %c0_10 = arith.constant 0 : index
    %c0_11 = arith.constant 0 : index
    %c0_12 = arith.constant 0 : index
    %19 = vector.load %arg3[%c0_9, %c0_10, %c0_11, %c0_12] : memref<1x1x8x32xf32, #tpu.memory_space<vmem>>, vector<1x1x8x32xf32>
    %20 = vector.shape_cast %19 : vector<1x1x8x32xf32> to vector<1x8x32xf32>
    %21 = vector.broadcast %2 : vector<1x1x32xf32> to vector<1x8x32xf32>
    %22 = arith.mulf %20, %21 : vector<1x8x32xf32>
    %23 = vector.broadcast %5 : vector<1x1x32xf32> to vector<1x8x32xf32>
    %24 = arith.addf %22, %23 : vector<1x8x32xf32>
    %25 = arith.negf %24 : vector<1x8x32xf32>
    %26 = math.exp %25 : vector<1x8x32xf32>
    %cst_13 = arith.constant 1.000000e+00 : f32
    %27 = vector.broadcast %cst_13 : f32 to vector<1x8x32xf32>
    %28 = arith.addf %27, %26 : vector<1x8x32xf32>
    %29 = arith.divf %27, %28 : vector<1x8x32xf32>
    %30 = arith.mulf %24, %29 : vector<1x8x32xf32>
    %31 = arith.truncf %30 : vector<1x8x32xf32> to vector<1x8x32xbf16>
    %c0_14 = arith.constant 0 : index
    %c0_15 = arith.constant 0 : index
    %c0_16 = arith.constant 0 : index
    %c0_17 = arith.constant 0 : index
    %32 = vector.load %arg4[%c0_14, %c0_15, %c0_16, %c0_17] : memref<1x1x8x32xf32, #tpu.memory_space<vmem>>, vector<1x1x8x32xf32>
    %33 = vector.shape_cast %32 : vector<1x1x8x32xf32> to vector<1x8x32xf32>
    %34 = vector.broadcast %2 : vector<1x1x32xf32> to vector<1x8x32xf32>
    %35 = arith.mulf %33, %34 : vector<1x8x32xf32>
    %36 = vector.broadcast %5 : vector<1x1x32xf32> to vector<1x8x32xf32>
    %37 = arith.addf %35, %36 : vector<1x8x32xf32>
    %38 = arith.negf %37 : vector<1x8x32xf32>
    %39 = math.exp %38 : vector<1x8x32xf32>
    %cst_18 = arith.constant 1.000000e+00 : f32
    %40 = vector.broadcast %cst_18 : f32 to vector<1x8x32xf32>
    %41 = arith.addf %40, %39 : vector<1x8x32xf32>
    %42 = arith.divf %40, %41 : vector<1x8x32xf32>
    %43 = arith.mulf %37, %42 : vector<1x8x32xf32>
    %44 = arith.truncf %43 : vector<1x8x32xf32> to vector<1x8x32xbf16>
    %c0_i32 = arith.constant 0 : i32
    %45 = arith.cmpi sgt, %arg1, %c0_i32 : i32
    %cst_19 = arith.constant 0.000000e+00 : bf16
    %46 = vector.broadcast %cst_19 : bf16 to vector<1x8x32xbf16>
    %47 = arith.select %45, %31, %46 : vector<1x8x32xbf16>
    %c0_i32_20 = arith.constant 0 : i32
    %48 = arith.cmpi slt, %arg1, %c0_i32_20 : i32
    %cst_21 = arith.constant 0.000000e+00 : bf16
    %49 = vector.broadcast %cst_21 : bf16 to vector<1x8x32xbf16>
    %50 = arith.select %48, %44, %49 : vector<1x8x32xbf16>
    %51 = tpu.concatenate %47, %18, %50 in 0 : vector<1x8x32xbf16>, vector<8x8x32xbf16>, vector<1x8x32xbf16> -> vector<10x8x32xbf16>
    %cst_22 = arith.constant 0.000000e+00 : bf16
    %52 = vector.broadcast %cst_22 : bf16 to vector<10x1x32xbf16>
    %53 = tpu.concatenate %52, %51, %52 in 1 : vector<10x1x32xbf16>, vector<10x8x32xbf16>, vector<10x1x32xbf16> -> vector<10x10x32xbf16>
    %cst_23 = arith.constant 0.000000e+00 : f32
    %54 = vector.broadcast %cst_23 : f32 to vector<64x32xf32>
    %55 = vector.extract_strided_slice %53 {offsets = [0, 0, 0], sizes = [8, 10, 32], strides = [1, 1, 1]} : vector<10x10x32xbf16> to vector<8x10x32xbf16>
    %56 = vector.extract_strided_slice %55 {offsets = [0, 0, 0], sizes = [8, 8, 32], strides = [1, 1, 1]} : vector<8x10x32xbf16> to vector<8x8x32xbf16>
    %57 = vector.extract_strided_slice %55 {offsets = [0, 1, 0], sizes = [8, 8, 32], strides = [1, 1, 1]} : vector<8x10x32xbf16> to vector<8x8x32xbf16>
    %58 = vector.extract_strided_slice %55 {offsets = [0, 2, 0], sizes = [8, 8, 32], strides = [1, 1, 1]} : vector<8x10x32xbf16> to vector<8x8x32xbf16>
    %59 = tpu.concatenate %56, %57, %58 in 2 : vector<8x8x32xbf16>, vector<8x8x32xbf16>, vector<8x8x32xbf16> -> vector<8x8x96xbf16>
    %60 = vector.shape_cast %59 : vector<8x8x96xbf16> to vector<64x96xbf16>
    %c0_24 = arith.constant 0 : index
    %c0_25 = arith.constant 0 : index
    %c0_26 = arith.constant 0 : index
    %61 = vector.load %arg7[%c0_24, %c0_25, %c0_26] : memref<3x96x32xbf16, #tpu.memory_space<vmem>>, vector<1x96x32xbf16>
    %62 = vector.shape_cast %61 : vector<1x96x32xbf16> to vector<96x32xbf16>
    %cst_27 = arith.constant dense<0.000000e+00> : vector<64x32xf32>
    %63 = tpu.matmul %60, %62, %cst_27 {dimension_numbers = #tpu.dot_dimension_numbers<[1], [0], [0], [1], [0, 0, 1, 1], [], []>} : vector<64x96xbf16>, vector<96x32xbf16>, vector<64x32xf32> -> vector<64x32xf32>
    %64 = arith.addf %54, %63 : vector<64x32xf32>
    %65 = vector.extract_strided_slice %53 {offsets = [1, 0, 0], sizes = [8, 10, 32], strides = [1, 1, 1]} : vector<10x10x32xbf16> to vector<8x10x32xbf16>
    %66 = vector.extract_strided_slice %65 {offsets = [0, 0, 0], sizes = [8, 8, 32], strides = [1, 1, 1]} : vector<8x10x32xbf16> to vector<8x8x32xbf16>
    %67 = vector.extract_strided_slice %65 {offsets = [0, 1, 0], sizes = [8, 8, 32], strides = [1, 1, 1]} : vector<8x10x32xbf16> to vector<8x8x32xbf16>
    %68 = vector.extract_strided_slice %65 {offsets = [0, 2, 0], sizes = [8, 8, 32], strides = [1, 1, 1]} : vector<8x10x32xbf16> to vector<8x8x32xbf16>
    %69 = tpu.concatenate %66, %67, %68 in 2 : vector<8x8x32xbf16>, vector<8x8x32xbf16>, vector<8x8x32xbf16> -> vector<8x8x96xbf16>
    %70 = vector.shape_cast %69 : vector<8x8x96xbf16> to vector<64x96xbf16>
    %c1 = arith.constant 1 : index
    %c0_28 = arith.constant 0 : index
    %c0_29 = arith.constant 0 : index
    %71 = vector.load %arg7[%c1, %c0_28, %c0_29] : memref<3x96x32xbf16, #tpu.memory_space<vmem>>, vector<1x96x32xbf16>
    %72 = vector.shape_cast %71 : vector<1x96x32xbf16> to vector<96x32xbf16>
    %cst_30 = arith.constant dense<0.000000e+00> : vector<64x32xf32>
    %73 = tpu.matmul %70, %72, %cst_30 {dimension_numbers = #tpu.dot_dimension_numbers<[1], [0], [0], [1], [0, 0, 1, 1], [], []>} : vector<64x96xbf16>, vector<96x32xbf16>, vector<64x32xf32> -> vector<64x32xf32>
    %74 = arith.addf %64, %73 : vector<64x32xf32>
    %75 = vector.extract_strided_slice %53 {offsets = [2, 0, 0], sizes = [8, 10, 32], strides = [1, 1, 1]} : vector<10x10x32xbf16> to vector<8x10x32xbf16>
    %76 = vector.extract_strided_slice %75 {offsets = [0, 0, 0], sizes = [8, 8, 32], strides = [1, 1, 1]} : vector<8x10x32xbf16> to vector<8x8x32xbf16>
    %77 = vector.extract_strided_slice %75 {offsets = [0, 1, 0], sizes = [8, 8, 32], strides = [1, 1, 1]} : vector<8x10x32xbf16> to vector<8x8x32xbf16>
    %78 = vector.extract_strided_slice %75 {offsets = [0, 2, 0], sizes = [8, 8, 32], strides = [1, 1, 1]} : vector<8x10x32xbf16> to vector<8x8x32xbf16>
    %79 = tpu.concatenate %76, %77, %78 in 2 : vector<8x8x32xbf16>, vector<8x8x32xbf16>, vector<8x8x32xbf16> -> vector<8x8x96xbf16>
    %80 = vector.shape_cast %79 : vector<8x8x96xbf16> to vector<64x96xbf16>
    %c2 = arith.constant 2 : index
    %c0_31 = arith.constant 0 : index
    %c0_32 = arith.constant 0 : index
    %81 = vector.load %arg7[%c2, %c0_31, %c0_32] : memref<3x96x32xbf16, #tpu.memory_space<vmem>>, vector<1x96x32xbf16>
    %82 = vector.shape_cast %81 : vector<1x96x32xbf16> to vector<96x32xbf16>
    %cst_33 = arith.constant dense<0.000000e+00> : vector<64x32xf32>
    %83 = tpu.matmul %80, %82, %cst_33 {dimension_numbers = #tpu.dot_dimension_numbers<[1], [0], [0], [1], [0, 0, 1, 1], [], []>} : vector<64x96xbf16>, vector<96x32xbf16>, vector<64x32xf32> -> vector<64x32xf32>
    %84 = arith.addf %74, %83 : vector<64x32xf32>
    %c0_34 = arith.constant 0 : index
    %c0_35 = arith.constant 0 : index
    %c0_36 = arith.constant 0 : index
    %c0_37 = arith.constant 0 : index
    %85 = vector.load %arg9[%c0_34, %c0_35, %c0_36, %c0_37] : memref<1x8x8x64xf32, #tpu.memory_space<vmem>>, vector<1x8x8x64xf32>
    %86 = vector.shape_cast %85 : vector<1x8x8x64xf32> to vector<8x8x64xf32>
    %87 = arith.truncf %86 : vector<8x8x64xf32> to vector<8x8x64xbf16>
    %88 = vector.shape_cast %87 : vector<8x8x64xbf16> to vector<64x64xbf16>
    %c0_38 = arith.constant 0 : index
    %c0_39 = arith.constant 0 : index
    %89 = vector.load %arg10[%c0_38, %c0_39] : memref<64x32xbf16, #tpu.memory_space<vmem>>, vector<64x32xbf16>
    %cst_40 = arith.constant dense<0.000000e+00> : vector<64x32xf32>
    %90 = tpu.matmul %88, %89, %cst_40 {dimension_numbers = #tpu.dot_dimension_numbers<[1], [0], [0], [1], [0, 0, 1, 1], [], []>} : vector<64x64xbf16>, vector<64x32xbf16>, vector<64x32xf32> -> vector<64x32xf32>
    %91 = arith.addf %84, %90 : vector<64x32xf32>
    %c0_41 = arith.constant 0 : index
    %c0_42 = arith.constant 0 : index
    %92 = vector.load %arg8[%c0_41, %c0_42] : memref<1x32xf32, #tpu.memory_space<vmem>>, vector<1x32xf32>
    %93 = vector.broadcast %92 : vector<1x32xf32> to vector<64x32xf32>
    %94 = arith.addf %91, %93 : vector<64x32xf32>
    %c0_43 = arith.constant 0 : index
    %c0_44 = arith.constant 0 : index
    %95 = vector.load %arg11[%c0_43, %c0_44] : memref<1x32xf32, #tpu.memory_space<vmem>>, vector<1x32xf32>
    %96 = vector.broadcast %95 : vector<1x32xf32> to vector<64x32xf32>
    %97 = arith.addf %94, %96 : vector<64x32xf32>
    %98 = vector.shape_cast %97 : vector<64x32xf32> to vector<8x8x32xf32>
    %c0_45 = arith.constant 0 : index
    %c0_46 = arith.constant 0 : index
    %c0_47 = arith.constant 0 : index
    %c0_48 = arith.constant 0 : index
    %99 = vector.load %arg12[%c0_45, %c0_46, %c0_47, %c0_48] : memref<1x8x8x32xf32, #tpu.memory_space<vmem>>, vector<1x8x8x32xf32>
    %100 = vector.shape_cast %99 : vector<1x8x8x32xf32> to vector<8x8x32xf32>
    %101 = vector.shape_cast %98 : vector<8x8x32xf32> to vector<1x8x8x32xf32>
    tpu.vector_store %arg12[%c0_45, %c0_46, %c0_47, %c0_48], %101 {strides = array<i32>} : memref<1x8x8x32xf32, #tpu.memory_space<vmem>>, vector<1x8x8x32xf32>,
    return
  }
  func.func @transform_0(%arg0: i32, %arg1: i32) -> (i32, i32, i32, i32) {
    %c0_i32 = arith.constant 0 : i32
    %c0_i32_0 = arith.constant 0 : i32
    %c0_i32_1 = arith.constant 0 : i32
    return %arg0, %arg1, %c0_i32, %c0_i32_0 : i32, i32, i32, i32
  }
  func.func @transform_1(%arg0: i32, %arg1: i32) -> (i32, i32, i32, i32) {
    %c8_i32 = arith.constant 8 : i32
    %0 = arith.muli %arg1, %c8_i32 : i32
    %c1_i32 = arith.constant 1 : i32
    %1 = arith.subi %0, %c1_i32 : i32
    %c0_i32 = arith.constant 0 : i32
    %2 = arith.maxsi %1, %c0_i32 : i32
    %c0_i32_0 = arith.constant 0 : i32
    %c0_i32_1 = arith.constant 0 : i32
    %c0_i32_2 = arith.constant 0 : i32
    return %arg0, %2, %c0_i32_0, %c0_i32_1 : i32, i32, i32, i32
  }
  func.func @transform_2(%arg0: i32, %arg1: i32) -> (i32, i32, i32, i32) {
    %c1_i32 = arith.constant 1 : i32
    %0 = arith.addi %arg1, %c1_i32 : i32
    %c8_i32 = arith.constant 8 : i32
    %1 = arith.muli %0, %c8_i32 : i32
    %c7_i32 = arith.constant 7 : i32
    %2 = arith.minsi %1, %c7_i32 : i32
    %c0_i32 = arith.constant 0 : i32
    %c0_i32_0 = arith.constant 0 : i32
    %c0_i32_1 = arith.constant 0 : i32
    return %arg0, %2, %c0_i32, %c0_i32_0 : i32, i32, i32, i32
  }
  func.func @transform_3(%arg0: i32, %arg1: i32) -> (i32, i32, i32) {
    %c0_i32 = arith.constant 0 : i32
    %c0_i32_0 = arith.constant 0 : i32
    %c0_i32_1 = arith.constant 0 : i32
    return %arg0, %c0_i32, %c0_i32_0 : i32, i32, i32
  }
  func.func @transform_4(%arg0: i32, %arg1: i32) -> (i32, i32, i32) {
    %c0_i32 = arith.constant 0 : i32
    %c0_i32_0 = arith.constant 0 : i32
    %c0_i32_1 = arith.constant 0 : i32
    return %arg0, %c0_i32, %c0_i32_0 : i32, i32, i32
  }
  func.func @transform_5(%arg0: i32, %arg1: i32) -> (i32, i32, i32) {
    %c0_i32 = arith.constant 0 : i32
    %c0_i32_0 = arith.constant 0 : i32
    %c0_i32_1 = arith.constant 0 : i32
    %c0_i32_2 = arith.constant 0 : i32
    return %c0_i32, %c0_i32_0, %c0_i32_1 : i32, i32, i32
  }
  func.func @transform_6(%arg0: i32, %arg1: i32) -> (i32, i32) {
    %c0_i32 = arith.constant 0 : i32
    %c0_i32_0 = arith.constant 0 : i32
    %c0_i32_1 = arith.constant 0 : i32
    return %c0_i32, %c0_i32_0 : i32, i32
  }
  func.func @transform_7(%arg0: i32, %arg1: i32) -> (i32, i32, i32, i32) {
    %c0_i32 = arith.constant 0 : i32
    %c0_i32_0 = arith.constant 0 : i32
    %c0_i32_1 = arith.constant 0 : i32
    return %arg0, %arg1, %c0_i32, %c0_i32_0 : i32, i32, i32, i32
  }
  func.func @transform_8(%arg0: i32, %arg1: i32) -> (i32, i32) {
    %c0_i32 = arith.constant 0 : i32
    %c0_i32_0 = arith.constant 0 : i32
    %c0_i32_1 = arith.constant 0 : i32
    return %c0_i32, %c0_i32_0 : i32, i32
  }
  func.func @transform_9(%arg0: i32, %arg1: i32) -> (i32, i32) {
    %c0_i32 = arith.constant 0 : i32
    %c0_i32_0 = arith.constant 0 : i32
    %c0_i32_1 = arith.constant 0 : i32
    return %c0_i32, %c0_i32_0 : i32, i32
  }
  func.func @transform_10(%arg0: i32, %arg1: i32) -> (i32, i32, i32, i32) {
    %c0_i32 = arith.constant 0 : i32
    %c0_i32_0 = arith.constant 0 : i32
    %c0_i32_1 = arith.constant 0 : i32
    return %arg0, %arg1, %c0_i32, %c0_i32_0 : i32, i32, i32, i32
  }
}

module attributes {stable_mosaic.version = 11 : i64} {
  func.func @_upsample_conv_kernel(%arg0: i32, %arg1: i32, %arg2: memref<1x8x8x32xf32, #tpu.memory_space<vmem>>, %arg3: memref<1x1x8x32xf32, #tpu.memory_space<vmem>>, %arg4: memref<1x1x8x32xf32, #tpu.memory_space<vmem>>, %arg5: memref<2x2x2x64x32xbf16, #tpu.memory_space<vmem>>, %arg6: memref<1x32xf32, #tpu.memory_space<vmem>>, %arg7: memref<1x8x2x8x64xf32, #tpu.memory_space<vmem>>) attributes {dimension_semantics = [#tpu.dimension_semantics<parallel>, #tpu.dimension_semantics<parallel>], iteration_bounds = array<i64: 2, 1>, scalar_prefetch = 0 : i64, scratch_operands = 0 : i64, tpu.core_type = #tpu.core_type<tc>, window_params = [{transform_indices = @transform_0, window_bounds = array<i64: 1, 8, 8, 32>}, {transform_indices = @transform_1, window_bounds = array<i64: 1, 1, 8, 32>}, {transform_indices = @transform_2, window_bounds = array<i64: 1, 1, 8, 32>}, {pipeline_mode = #tpu.pipeline_mode<synchronous>, transform_indices = @transform_3, window_bounds = array<i64: 2, 2, 2, 64, 32>}, {pipeline_mode = #tpu.pipeline_mode<synchronous>, transform_indices = @transform_4, window_bounds = array<i64: 1, 32>}, {transform_indices = @transform_5, window_bounds = array<i64: 1, 8, 2, 8, 64>}]} {
    %c0 = arith.constant 0 : index
    %c0_0 = arith.constant 0 : index
    %c0_1 = arith.constant 0 : index
    %c0_2 = arith.constant 0 : index
    %0 = vector.load %arg2[%c0, %c0_0, %c0_1, %c0_2] : memref<1x8x8x32xf32, #tpu.memory_space<vmem>>, vector<1x8x8x32xf32>
    %1 = vector.shape_cast %0 : vector<1x8x8x32xf32> to vector<8x8x32xf32>
    %2 = arith.truncf %1 : vector<8x8x32xf32> to vector<8x8x32xbf16>
    %c0_3 = arith.constant 0 : index
    %c0_4 = arith.constant 0 : index
    %c0_5 = arith.constant 0 : index
    %c0_6 = arith.constant 0 : index
    %3 = vector.load %arg3[%c0_3, %c0_4, %c0_5, %c0_6] : memref<1x1x8x32xf32, #tpu.memory_space<vmem>>, vector<1x1x8x32xf32>
    %4 = vector.shape_cast %3 : vector<1x1x8x32xf32> to vector<1x8x32xf32>
    %5 = arith.truncf %4 : vector<1x8x32xf32> to vector<1x8x32xbf16>
    %c0_7 = arith.constant 0 : index
    %c0_8 = arith.constant 0 : index
    %c0_9 = arith.constant 0 : index
    %c0_10 = arith.constant 0 : index
    %6 = vector.load %arg4[%c0_7, %c0_8, %c0_9, %c0_10] : memref<1x1x8x32xf32, #tpu.memory_space<vmem>>, vector<1x1x8x32xf32>
    %7 = vector.shape_cast %6 : vector<1x1x8x32xf32> to vector<1x8x32xf32>
    %8 = arith.truncf %7 : vector<1x8x32xf32> to vector<1x8x32xbf16>
    %c0_i32 = arith.constant 0 : i32
    %9 = arith.cmpi sgt, %arg1, %c0_i32 : i32
    %cst = arith.constant 0.000000e+00 : bf16
    %10 = vector.broadcast %cst : bf16 to vector<1x8x32xbf16>
    %11 = arith.select %9, %5, %10 : vector<1x8x32xbf16>
    %c0_i32_11 = arith.constant 0 : i32
    %12 = arith.cmpi slt, %arg1, %c0_i32_11 : i32
    %cst_12 = arith.constant 0.000000e+00 : bf16
    %13 = vector.broadcast %cst_12 : bf16 to vector<1x8x32xbf16>
    %14 = arith.select %12, %8, %13 : vector<1x8x32xbf16>
    %15 = tpu.concatenate %11, %2, %14 in 0 : vector<1x8x32xbf16>, vector<8x8x32xbf16>, vector<1x8x32xbf16> -> vector<10x8x32xbf16>
    %cst_13 = arith.constant 0.000000e+00 : bf16
    %16 = vector.broadcast %cst_13 : bf16 to vector<10x1x32xbf16>
    %17 = tpu.concatenate %16, %15, %16 in 1 : vector<10x1x32xbf16>, vector<10x8x32xbf16>, vector<10x1x32xbf16> -> vector<10x10x32xbf16>
    %c0_14 = arith.constant 0 : index
    %c0_15 = arith.constant 0 : index
    %18 = vector.load %arg6[%c0_14, %c0_15] : memref<1x32xf32, #tpu.memory_space<vmem>>, vector<1x32xf32>
    %cst_16 = arith.constant 0.000000e+00 : f32
    %19 = vector.broadcast %cst_16 : f32 to vector<64x32xf32>
    %20 = vector.extract_strided_slice %17 {offsets = [0, 0, 0], sizes = [8, 10, 32], strides = [1, 1, 1]} : vector<10x10x32xbf16> to vector<8x10x32xbf16>
    %21 = vector.extract_strided_slice %20 {offsets = [0, 0, 0], sizes = [8, 8, 32], strides = [1, 1, 1]} : vector<8x10x32xbf16> to vector<8x8x32xbf16>
    %22 = vector.extract_strided_slice %20 {offsets = [0, 1, 0], sizes = [8, 8, 32], strides = [1, 1, 1]} : vector<8x10x32xbf16> to vector<8x8x32xbf16>
    %23 = tpu.concatenate %21, %22 in 2 : vector<8x8x32xbf16>, vector<8x8x32xbf16> -> vector<8x8x64xbf16>
    %24 = vector.shape_cast %23 : vector<8x8x64xbf16> to vector<64x64xbf16>
    %c0_17 = arith.constant 0 : index
    %c0_18 = arith.constant 0 : index
    %c0_19 = arith.constant 0 : index
    %c0_20 = arith.constant 0 : index
    %c0_21 = arith.constant 0 : index
    %25 = vector.load %arg5[%c0_17, %c0_18, %c0_19, %c0_20, %c0_21] : memref<2x2x2x64x32xbf16, #tpu.memory_space<vmem>>, vector<1x1x1x64x32xbf16>
    %26 = vector.shape_cast %25 : vector<1x1x1x64x32xbf16> to vector<64x32xbf16>
    %cst_22 = arith.constant dense<0.000000e+00> : vector<64x32xf32>
    %27 = tpu.matmul %24, %26, %cst_22 {dimension_numbers = #tpu.dot_dimension_numbers<[1], [0], [0], [1], [0, 0, 1, 1], [], []>} : vector<64x64xbf16>, vector<64x32xbf16>, vector<64x32xf32> -> vector<64x32xf32>
    %28 = arith.addf %19, %27 : vector<64x32xf32>
    %29 = vector.extract_strided_slice %17 {offsets = [1, 0, 0], sizes = [8, 10, 32], strides = [1, 1, 1]} : vector<10x10x32xbf16> to vector<8x10x32xbf16>
    %30 = vector.extract_strided_slice %29 {offsets = [0, 0, 0], sizes = [8, 8, 32], strides = [1, 1, 1]} : vector<8x10x32xbf16> to vector<8x8x32xbf16>
    %31 = vector.extract_strided_slice %29 {offsets = [0, 1, 0], sizes = [8, 8, 32], strides = [1, 1, 1]} : vector<8x10x32xbf16> to vector<8x8x32xbf16>
    %32 = tpu.concatenate %30, %31 in 2 : vector<8x8x32xbf16>, vector<8x8x32xbf16> -> vector<8x8x64xbf16>
    %33 = vector.shape_cast %32 : vector<8x8x64xbf16> to vector<64x64xbf16>
    %c0_23 = arith.constant 0 : index
    %c0_24 = arith.constant 0 : index
    %c1 = arith.constant 1 : index
    %c0_25 = arith.constant 0 : index
    %c0_26 = arith.constant 0 : index
    %34 = vector.load %arg5[%c0_23, %c0_24, %c1, %c0_25, %c0_26] : memref<2x2x2x64x32xbf16, #tpu.memory_space<vmem>>, vector<1x1x1x64x32xbf16>
    %35 = vector.shape_cast %34 : vector<1x1x1x64x32xbf16> to vector<64x32xbf16>
    %cst_27 = arith.constant dense<0.000000e+00> : vector<64x32xf32>
    %36 = tpu.matmul %33, %35, %cst_27 {dimension_numbers = #tpu.dot_dimension_numbers<[1], [0], [0], [1], [0, 0, 1, 1], [], []>} : vector<64x64xbf16>, vector<64x32xbf16>, vector<64x32xf32> -> vector<64x32xf32>
    %37 = arith.addf %28, %36 : vector<64x32xf32>
    %38 = vector.broadcast %18 : vector<1x32xf32> to vector<64x32xf32>
    %39 = arith.addf %37, %38 : vector<64x32xf32>
    %40 = vector.shape_cast %39 : vector<64x32xf32> to vector<8x8x32xf32>
    %cst_28 = arith.constant 0.000000e+00 : f32
    %41 = vector.broadcast %cst_28 : f32 to vector<64x32xf32>
    %42 = vector.extract_strided_slice %17 {offsets = [0, 0, 0], sizes = [8, 10, 32], strides = [1, 1, 1]} : vector<10x10x32xbf16> to vector<8x10x32xbf16>
    %43 = vector.extract_strided_slice %42 {offsets = [0, 1, 0], sizes = [8, 8, 32], strides = [1, 1, 1]} : vector<8x10x32xbf16> to vector<8x8x32xbf16>
    %44 = vector.extract_strided_slice %42 {offsets = [0, 2, 0], sizes = [8, 8, 32], strides = [1, 1, 1]} : vector<8x10x32xbf16> to vector<8x8x32xbf16>
    %45 = tpu.concatenate %43, %44 in 2 : vector<8x8x32xbf16>, vector<8x8x32xbf16> -> vector<8x8x64xbf16>
    %46 = vector.shape_cast %45 : vector<8x8x64xbf16> to vector<64x64xbf16>
    %c0_29 = arith.constant 0 : index
    %c1_30 = arith.constant 1 : index
    %c0_31 = arith.constant 0 : index
    %c0_32 = arith.constant 0 : index
    %c0_33 = arith.constant 0 : index
    %47 = vector.load %arg5[%c0_29, %c1_30, %c0_31, %c0_32, %c0_33] : memref<2x2x2x64x32xbf16, #tpu.memory_space<vmem>>, vector<1x1x1x64x32xbf16>
    %48 = vector.shape_cast %47 : vector<1x1x1x64x32xbf16> to vector<64x32xbf16>
    %cst_34 = arith.constant dense<0.000000e+00> : vector<64x32xf32>
    %49 = tpu.matmul %46, %48, %cst_34 {dimension_numbers = #tpu.dot_dimension_numbers<[1], [0], [0], [1], [0, 0, 1, 1], [], []>} : vector<64x64xbf16>, vector<64x32xbf16>, vector<64x32xf32> -> vector<64x32xf32>
    %50 = arith.addf %41, %49 : vector<64x32xf32>
    %51 = vector.extract_strided_slice %17 {offsets = [1, 0, 0], sizes = [8, 10, 32], strides = [1, 1, 1]} : vector<10x10x32xbf16> to vector<8x10x32xbf16>
    %52 = vector.extract_strided_slice %51 {offsets = [0, 1, 0], sizes = [8, 8, 32], strides = [1, 1, 1]} : vector<8x10x32xbf16> to vector<8x8x32xbf16>
    %53 = vector.extract_strided_slice %51 {offsets = [0, 2, 0], sizes = [8, 8, 32], strides = [1, 1, 1]} : vector<8x10x32xbf16> to vector<8x8x32xbf16>
    %54 = tpu.concatenate %52, %53 in 2 : vector<8x8x32xbf16>, vector<8x8x32xbf16> -> vector<8x8x64xbf16>
    %55 = vector.shape_cast %54 : vector<8x8x64xbf16> to vector<64x64xbf16>
    %c0_35 = arith.constant 0 : index
    %c1_36 = arith.constant 1 : index
    %c1_37 = arith.constant 1 : index
    %c0_38 = arith.constant 0 : index
    %c0_39 = arith.constant 0 : index
    %56 = vector.load %arg5[%c0_35, %c1_36, %c1_37, %c0_38, %c0_39] : memref<2x2x2x64x32xbf16, #tpu.memory_space<vmem>>, vector<1x1x1x64x32xbf16>
    %57 = vector.shape_cast %56 : vector<1x1x1x64x32xbf16> to vector<64x32xbf16>
    %cst_40 = arith.constant dense<0.000000e+00> : vector<64x32xf32>
    %58 = tpu.matmul %55, %57, %cst_40 {dimension_numbers = #tpu.dot_dimension_numbers<[1], [0], [0], [1], [0, 0, 1, 1], [], []>} : vector<64x64xbf16>, vector<64x32xbf16>, vector<64x32xf32> -> vector<64x32xf32>
    %59 = arith.addf %50, %58 : vector<64x32xf32>
    %60 = vector.broadcast %18 : vector<1x32xf32> to vector<64x32xf32>
    %61 = arith.addf %59, %60 : vector<64x32xf32>
    %62 = vector.shape_cast %61 : vector<64x32xf32> to vector<8x8x32xf32>
    %63 = tpu.concatenate %40, %62 in 2 : vector<8x8x32xf32>, vector<8x8x32xf32> -> vector<8x8x64xf32>
    %cst_41 = arith.constant 0.000000e+00 : f32
    %64 = vector.broadcast %cst_41 : f32 to vector<64x32xf32>
    %65 = vector.extract_strided_slice %17 {offsets = [1, 0, 0], sizes = [8, 10, 32], strides = [1, 1, 1]} : vector<10x10x32xbf16> to vector<8x10x32xbf16>
    %66 = vector.extract_strided_slice %65 {offsets = [0, 0, 0], sizes = [8, 8, 32], strides = [1, 1, 1]} : vector<8x10x32xbf16> to vector<8x8x32xbf16>
    %67 = vector.extract_strided_slice %65 {offsets = [0, 1, 0], sizes = [8, 8, 32], strides = [1, 1, 1]} : vector<8x10x32xbf16> to vector<8x8x32xbf16>
    %68 = tpu.concatenate %66, %67 in 2 : vector<8x8x32xbf16>, vector<8x8x32xbf16> -> vector<8x8x64xbf16>
    %69 = vector.shape_cast %68 : vector<8x8x64xbf16> to vector<64x64xbf16>
    %c1_42 = arith.constant 1 : index
    %c0_43 = arith.constant 0 : index
    %c0_44 = arith.constant 0 : index
    %c0_45 = arith.constant 0 : index
    %c0_46 = arith.constant 0 : index
    %70 = vector.load %arg5[%c1_42, %c0_43, %c0_44, %c0_45, %c0_46] : memref<2x2x2x64x32xbf16, #tpu.memory_space<vmem>>, vector<1x1x1x64x32xbf16>
    %71 = vector.shape_cast %70 : vector<1x1x1x64x32xbf16> to vector<64x32xbf16>
    %cst_47 = arith.constant dense<0.000000e+00> : vector<64x32xf32>
    %72 = tpu.matmul %69, %71, %cst_47 {dimension_numbers = #tpu.dot_dimension_numbers<[1], [0], [0], [1], [0, 0, 1, 1], [], []>} : vector<64x64xbf16>, vector<64x32xbf16>, vector<64x32xf32> -> vector<64x32xf32>
    %73 = arith.addf %64, %72 : vector<64x32xf32>
    %74 = vector.extract_strided_slice %17 {offsets = [2, 0, 0], sizes = [8, 10, 32], strides = [1, 1, 1]} : vector<10x10x32xbf16> to vector<8x10x32xbf16>
    %75 = vector.extract_strided_slice %74 {offsets = [0, 0, 0], sizes = [8, 8, 32], strides = [1, 1, 1]} : vector<8x10x32xbf16> to vector<8x8x32xbf16>
    %76 = vector.extract_strided_slice %74 {offsets = [0, 1, 0], sizes = [8, 8, 32], strides = [1, 1, 1]} : vector<8x10x32xbf16> to vector<8x8x32xbf16>
    %77 = tpu.concatenate %75, %76 in 2 : vector<8x8x32xbf16>, vector<8x8x32xbf16> -> vector<8x8x64xbf16>
    %78 = vector.shape_cast %77 : vector<8x8x64xbf16> to vector<64x64xbf16>
    %c1_48 = arith.constant 1 : index
    %c0_49 = arith.constant 0 : index
    %c1_50 = arith.constant 1 : index
    %c0_51 = arith.constant 0 : index
    %c0_52 = arith.constant 0 : index
    %79 = vector.load %arg5[%c1_48, %c0_49, %c1_50, %c0_51, %c0_52] : memref<2x2x2x64x32xbf16, #tpu.memory_space<vmem>>, vector<1x1x1x64x32xbf16>
    %80 = vector.shape_cast %79 : vector<1x1x1x64x32xbf16> to vector<64x32xbf16>
    %cst_53 = arith.constant dense<0.000000e+00> : vector<64x32xf32>
    %81 = tpu.matmul %78, %80, %cst_53 {dimension_numbers = #tpu.dot_dimension_numbers<[1], [0], [0], [1], [0, 0, 1, 1], [], []>} : vector<64x64xbf16>, vector<64x32xbf16>, vector<64x32xf32> -> vector<64x32xf32>
    %82 = arith.addf %73, %81 : vector<64x32xf32>
    %83 = vector.broadcast %18 : vector<1x32xf32> to vector<64x32xf32>
    %84 = arith.addf %82, %83 : vector<64x32xf32>
    %85 = vector.shape_cast %84 : vector<64x32xf32> to vector<8x8x32xf32>
    %cst_54 = arith.constant 0.000000e+00 : f32
    %86 = vector.broadcast %cst_54 : f32 to vector<64x32xf32>
    %87 = vector.extract_strided_slice %17 {offsets = [1, 0, 0], sizes = [8, 10, 32], strides = [1, 1, 1]} : vector<10x10x32xbf16> to vector<8x10x32xbf16>
    %88 = vector.extract_strided_slice %87 {offsets = [0, 1, 0], sizes = [8, 8, 32], strides = [1, 1, 1]} : vector<8x10x32xbf16> to vector<8x8x32xbf16>
    %89 = vector.extract_strided_slice %87 {offsets = [0, 2, 0], sizes = [8, 8, 32], strides = [1, 1, 1]} : vector<8x10x32xbf16> to vector<8x8x32xbf16>
    %90 = tpu.concatenate %88, %89 in 2 : vector<8x8x32xbf16>, vector<8x8x32xbf16> -> vector<8x8x64xbf16>
    %91 = vector.shape_cast %90 : vector<8x8x64xbf16> to vector<64x64xbf16>
    %c1_55 = arith.constant 1 : index
    %c1_56 = arith.constant 1 : index
    %c0_57 = arith.constant 0 : index
    %c0_58 = arith.constant 0 : index
    %c0_59 = arith.constant 0 : index
    %92 = vector.load %arg5[%c1_55, %c1_56, %c0_57, %c0_58, %c0_59] : memref<2x2x2x64x32xbf16, #tpu.memory_space<vmem>>, vector<1x1x1x64x32xbf16>
    %93 = vector.shape_cast %92 : vector<1x1x1x64x32xbf16> to vector<64x32xbf16>
    %cst_60 = arith.constant dense<0.000000e+00> : vector<64x32xf32>
    %94 = tpu.matmul %91, %93, %cst_60 {dimension_numbers = #tpu.dot_dimension_numbers<[1], [0], [0], [1], [0, 0, 1, 1], [], []>} : vector<64x64xbf16>, vector<64x32xbf16>, vector<64x32xf32> -> vector<64x32xf32>
    %95 = arith.addf %86, %94 : vector<64x32xf32>
    %96 = vector.extract_strided_slice %17 {offsets = [2, 0, 0], sizes = [8, 10, 32], strides = [1, 1, 1]} : vector<10x10x32xbf16> to vector<8x10x32xbf16>
    %97 = vector.extract_strided_slice %96 {offsets = [0, 1, 0], sizes = [8, 8, 32], strides = [1, 1, 1]} : vector<8x10x32xbf16> to vector<8x8x32xbf16>
    %98 = vector.extract_strided_slice %96 {offsets = [0, 2, 0], sizes = [8, 8, 32], strides = [1, 1, 1]} : vector<8x10x32xbf16> to vector<8x8x32xbf16>
    %99 = tpu.concatenate %97, %98 in 2 : vector<8x8x32xbf16>, vector<8x8x32xbf16> -> vector<8x8x64xbf16>
    %100 = vector.shape_cast %99 : vector<8x8x64xbf16> to vector<64x64xbf16>
    %c1_61 = arith.constant 1 : index
    %c1_62 = arith.constant 1 : index
    %c1_63 = arith.constant 1 : index
    %c0_64 = arith.constant 0 : index
    %c0_65 = arith.constant 0 : index
    %101 = vector.load %arg5[%c1_61, %c1_62, %c1_63, %c0_64, %c0_65] : memref<2x2x2x64x32xbf16, #tpu.memory_space<vmem>>, vector<1x1x1x64x32xbf16>
    %102 = vector.shape_cast %101 : vector<1x1x1x64x32xbf16> to vector<64x32xbf16>
    %cst_66 = arith.constant dense<0.000000e+00> : vector<64x32xf32>
    %103 = tpu.matmul %100, %102, %cst_66 {dimension_numbers = #tpu.dot_dimension_numbers<[1], [0], [0], [1], [0, 0, 1, 1], [], []>} : vector<64x64xbf16>, vector<64x32xbf16>, vector<64x32xf32> -> vector<64x32xf32>
    %104 = arith.addf %95, %103 : vector<64x32xf32>
    %105 = vector.broadcast %18 : vector<1x32xf32> to vector<64x32xf32>
    %106 = arith.addf %104, %105 : vector<64x32xf32>
    %107 = vector.shape_cast %106 : vector<64x32xf32> to vector<8x8x32xf32>
    %108 = tpu.concatenate %85, %107 in 2 : vector<8x8x32xf32>, vector<8x8x32xf32> -> vector<8x8x64xf32>
    %109 = vector.shape_cast %63 : vector<8x8x64xf32> to vector<8x1x8x64xf32>
    %110 = vector.shape_cast %108 : vector<8x8x64xf32> to vector<8x1x8x64xf32>
    %111 = tpu.concatenate %109, %110 in 1 : vector<8x1x8x64xf32>, vector<8x1x8x64xf32> -> vector<8x2x8x64xf32>
    %c0_67 = arith.constant 0 : index
    %c0_68 = arith.constant 0 : index
    %c0_69 = arith.constant 0 : index
    %c0_70 = arith.constant 0 : index
    %c0_71 = arith.constant 0 : index
    %112 = vector.load %arg7[%c0_67, %c0_68, %c0_69, %c0_70, %c0_71] : memref<1x8x2x8x64xf32, #tpu.memory_space<vmem>>, vector<1x8x2x8x64xf32>
    %113 = vector.shape_cast %112 : vector<1x8x2x8x64xf32> to vector<8x2x8x64xf32>
    %114 = vector.shape_cast %111 : vector<8x2x8x64xf32> to vector<1x8x2x8x64xf32>
    tpu.vector_store %arg7[%c0_67, %c0_68, %c0_69, %c0_70, %c0_71], %114 {strides = array<i32>} : memref<1x8x2x8x64xf32, #tpu.memory_space<vmem>>, vector<1x8x2x8x64xf32>,
    return
  }
  func.func @transform_0(%arg0: i32, %arg1: i32) -> (i32, i32, i32, i32) {
    %c0_i32 = arith.constant 0 : i32
    %c0_i32_0 = arith.constant 0 : i32
    %c0_i32_1 = arith.constant 0 : i32
    return %arg0, %arg1, %c0_i32, %c0_i32_0 : i32, i32, i32, i32
  }
  func.func @transform_1(%arg0: i32, %arg1: i32) -> (i32, i32, i32, i32) {
    %c8_i32 = arith.constant 8 : i32
    %0 = arith.muli %arg1, %c8_i32 : i32
    %c1_i32 = arith.constant 1 : i32
    %1 = arith.subi %0, %c1_i32 : i32
    %c0_i32 = arith.constant 0 : i32
    %2 = arith.maxsi %1, %c0_i32 : i32
    %c0_i32_0 = arith.constant 0 : i32
    %c0_i32_1 = arith.constant 0 : i32
    %c0_i32_2 = arith.constant 0 : i32
    return %arg0, %2, %c0_i32_0, %c0_i32_1 : i32, i32, i32, i32
  }
  func.func @transform_2(%arg0: i32, %arg1: i32) -> (i32, i32, i32, i32) {
    %c1_i32 = arith.constant 1 : i32
    %0 = arith.addi %arg1, %c1_i32 : i32
    %c8_i32 = arith.constant 8 : i32
    %1 = arith.muli %0, %c8_i32 : i32
    %c7_i32 = arith.constant 7 : i32
    %2 = arith.minsi %1, %c7_i32 : i32
    %c0_i32 = arith.constant 0 : i32
    %c0_i32_0 = arith.constant 0 : i32
    %c0_i32_1 = arith.constant 0 : i32
    return %arg0, %2, %c0_i32, %c0_i32_0 : i32, i32, i32, i32
  }
  func.func @transform_3(%arg0: i32, %arg1: i32) -> (i32, i32, i32, i32, i32) {
    %c0_i32 = arith.constant 0 : i32
    %c0_i32_0 = arith.constant 0 : i32
    %c0_i32_1 = arith.constant 0 : i32
    %c0_i32_2 = arith.constant 0 : i32
    %c0_i32_3 = arith.constant 0 : i32
    %c0_i32_4 = arith.constant 0 : i32
    return %c0_i32, %c0_i32_0, %c0_i32_1, %c0_i32_2, %c0_i32_3 : i32, i32, i32, i32, i32
  }
  func.func @transform_4(%arg0: i32, %arg1: i32) -> (i32, i32) {
    %c0_i32 = arith.constant 0 : i32
    %c0_i32_0 = arith.constant 0 : i32
    %c0_i32_1 = arith.constant 0 : i32
    return %c0_i32, %c0_i32_0 : i32, i32
  }
  func.func @transform_5(%arg0: i32, %arg1: i32) -> (i32, i32, i32, i32, i32) {
    %c0_i32 = arith.constant 0 : i32
    %c0_i32_0 = arith.constant 0 : i32
    %c0_i32_1 = arith.constant 0 : i32
    %c0_i32_2 = arith.constant 0 : i32
    return %arg0, %arg1, %c0_i32, %c0_i32_0, %c0_i32_1 : i32, i32, i32, i32, i32
  }
}

</mosaic_0001>

<llo_original>
// kernel: up_decoder_block_2d.4
$region0: #{up_decoder_block_2d.4}
  #allocation0 [shape = 'u32[]', space=smem, size = 0x4, offset = 0x4, fixed_abs, tag = 'smem constant byte address 0x4 - core index']
  #allocation1 [shape = 'u32[144,128]{1,0:T(1,128)}', space=vmem, size = 0x12000, scoped, tag = 'internal scratch']
  %s0 = inlined_call_operand.hbm [shape: f32[2,8,8,64], index: 0, kind: input, shape index: {}]
  %s1 = inlined_call_operand.vmem [shape: f32[2,1,1,64], index: 1, kind: output, shape index: {0}]
  %s2 = inlined_call_operand.vmem [shape: f32[2,1,1,64], index: 2, kind: output, shape index: {1}]
  %3 = xla_tuple %s1, %s2
  %s4 = sld [smem:[#allocation0]]
  $region49: #{up_decoder_block_2d.4} parent=0
    _
  %s6 = ssub.s32 1, %s4
  %s7 = scalar_select 0, %s6, %s4
  $region1: #{up_decoder_block_2d.4} parent=0
    #allocation2 [shape = 'u8[65536]{0}', space=vmem, size = 0x10000, scoped, tag = 'input window, operand 0']
    #allocation3 [shape = 's32[2]{0}', space=sflag, size = 0x8, scoped, tag = 'scoped memory for up_decoder_block_2d.4']
    %8 = vsyncpa [#allocation3], 0
    %s9 = scalar_lea.sflag [#allocation3], 1
    %10 = vsyncpa %s9, 0
    loop: start=0, step=1, limit=4
    $region2: #{up_decoder_block_2d.4} parent=1 // loop_pre_header
      _
    $region3: #{up_decoder_block_2d.4} parent=1 // loop_header
      %s12 = sphi 0, %s16
      %p13 = scmp.ge.s32.totalorder %s12, 4
      %s19 = sphi 0, %s31
      %s20 = sphi 0, %s27
      %s21 = sphi 0, %s19
      %s22 = sphi 0, %s20
      %s23 = sphi 0, %s21
      %s24 = sphi 0, %s22
      %s36 = sphi 0, %s38
      %s39 = sphi 0, %s36
      %s40 = sphi 0, %s39
      %s56 = sphi 0, %s40
      %s64 = sphi 0, %s66
      %s67 = sphi 0, %s64
      %s68 = sphi 0, %s67
      %s84 = sphi 0, %s68
      %s92 = sphi 0, %s94
      %s95 = sphi 0, %s92
      %s96 = sphi 0, %s95
      %s112 = sphi 0, %s96
    $region4: #{up_decoder_block_2d.4} parent=1 // loop_header_branch
      %15 = sbr.rel (%p13) target = $region8
    $region5: #{up_decoder_block_2d.4} parent=1 // loop_body
      %s17 = ssub.s32 %s12, 1
      %s18 = ssub.s32 %s12, 2
      %s25 = sadd.s32 1, %s20
      %p26 = scmp.ge.s32.totalorder %s25, 1
      %s27 = scalar_select %p26, 0, %s25
      %s28 = sadd.s32 1, %s19
      %s29 = scalar_select %p26, %s28, %s19
      %p30 = scmp.ge.s32.totalorder %s29, 2
      %s31 = scalar_select %p30, 0, %s29
      %s32 = ssub.s32 %s19, %s31
      %s33 = ssub.s32 %s20, %s27
      %s34 = sor.u32 %s32, %s33
      %p35 = scmp.eq.s32.totalorder %s34, 0
      %s37 = sadd.s32 %s36, 1
      %s38 = scalar_select %p35, %s36, %s37
      %p41 = pneg %p35
      %p42 = scmp.eq.s32.totalorder %s12, 1
      %p43 = por %p41, %p42
      %p44 = scmp.ne.s32.totalorder %s36, %s39
      %p45 = scmp.eq.s32.totalorder %s12, 0
      %p46 = por %p44, %p45
      %p47 = scmp.ne.s32.totalorder %s36, %s39
      %p48 = scmp.eq.s32.totalorder %s17, 1
      %p49 = por %p47, %p48
      %p50 = scmp.ne.s32.totalorder %s39, %s40
      %p51 = scmp.eq.s32.totalorder %s17, 0
      %p52 = por %p50, %p51
      %p53 = scmp.ne.s32.totalorder %s39, %s40
      %p54 = scmp.eq.s32.totalorder %s18, 1
      %p55 = por %p53, %p54
      %p57 = scmp.ne.s32.totalorder %s40, %s56
      %p58 = scmp.eq.s32.totalorder %s18, 0
      %p59 = por %p57, %p58
      %s60 = ssub.s32 %s19, %s31
      %s61 = ssub.s32 %s20, %s27
      %s62 = sor.u32 %s60, %s61
      %p63 = scmp.eq.s32.totalorder %s62, 0
      %s65 = sadd.s32 %s64, 1
      %s66 = scalar_select %p63, %s64, %s65
      %p69 = pneg %p63
      %p70 = scmp.eq.s32.totalorder %s12, 1
      %p71 = por %p69, %p70
      %p72 = scmp.ne.s32.totalorder %s64, %s67
      %p73 = scmp.eq.s32.totalorder %s12, 0
      %p74 = por %p72, %p73
      %p75 = scmp.ne.s32.totalorder %s64, %s67
      %p76 = scmp.eq.s32.totalorder %s17, 1
      %p77 = por %p75, %p76
      %p78 = scmp.ne.s32.totalorder %s67, %s68
      %p79 = scmp.eq.s32.totalorder %s17, 0
      %p80 = por %p78, %p79
      %p81 = scmp.ne.s32.totalorder %s67, %s68
      %p82 = scmp.eq.s32.totalorder %s18, 1
      %p83 = por %p81, %p82
      %p85 = scmp.ne.s32.totalorder %s68, %s84
      %p86 = scmp.eq.s32.totalorder %s18, 0
      %p87 = por %p85, %p86
      %s88 = ssub.s32 %s19, %s31
      %s89 = ssub.s32 %s20, %s27
      %s90 = sor.u32 %s88, %s89
      %p91 = scmp.eq.s32.totalorder %s90, 0
      %s93 = sadd.s32 %s92, 1
      %s94 = scalar_select %p91, %s92, %s93
      %p97 = pneg %p91
      %p98 = scmp.eq.s32.totalorder %s12, 1
      %p99 = por %p97, %p98
      %p100 = scmp.ne.s32.totalorder %s92, %s95
      %p101 = scmp.eq.s32.totalorder %s12, 0
      %p102 = por %p100, %p101
      %p103 = scmp.ne.s32.totalorder %s92, %s95
      %p104 = scmp.eq.s32.totalorder %s17, 1
      %p105 = por %p103, %p104
      %p106 = scmp.ne.s32.totalorder %s95, %s96
      %p107 = scmp.eq.s32.totalorder %s17, 0
      %p108 = por %p106, %p107
      %p109 = scmp.ne.s32.totalorder %s95, %s96
      %p110 = scmp.eq.s32.totalorder %s18, 1
      %p111 = por %p109, %p110
      %p113 = scmp.ne.s32.totalorder %s96, %s112
      %p114 = scmp.eq.s32.totalorder %s18, 0
      %p115 = por %p113, %p114
      %p116 = scmp.le.s32.totalorder 1, %s12
      %p117 = scmp.lt.s32.totalorder %s12, 3
      %p118 = pnand %p116, %p117
      %p119 = pneg %p118
      // Predicated region
      $region9: #{up_decoder_block_2d.4} parent=5 // pred_check
        _
      $region10: #{up_decoder_block_2d.4} parent=5 // pred_check_branch
        %121 = sbr.rel (%p118) target = $region12
      $region11: #{up_decoder_block_2d.4} parent=5 // pred_region
        %s122 = ssub.s32 %s12, 1
      $region12: #{up_decoder_block_2d.4} parent=5 // pred_fallthru
        _
      %p123 = scmp.lt.s32.totalorder %s12, 2
      // Predicated region
      $region13: #{up_decoder_block_2d.4} parent=5 // pred_check
        %p124 = pneg %p123
      $region14: #{up_decoder_block_2d.4} parent=5 // pred_check_branch
        %126 = sbr.rel (%p124) target = $region16
      $region15: #{up_decoder_block_2d.4} parent=5 // pred_region
        // Predicated region
        $region17: #{up_decoder_block_2d.4} parent=15 // pred_check
          %p127 = pneg %p46
        $region18: #{up_decoder_block_2d.4} parent=15 // pred_check_branch
          %129 = sbr.rel (%p127) target = $region20
        $region19: #{up_decoder_block_2d.4} parent=15 // pred_region
          %s130 = sand.u32 %s36, 1
          %s131 = scalar_lea.sflag [#allocation3], %s130
          %s132 = sand.u32 %s36, 1
          %s133 = smul.addr %s132, 64
          %s134 = scalar_lea.vmem [#allocation2], %s133
          %s135 = smul.u32 8, %s20
          %s137 = ssub.s32 1024, 1024
          %138 = vsyncadd %s131, %s137
          %s139 = smul.addr %s19, 8
          %s140 = sadd.s32 %s135, %s139
          %s141 = smul.addr %s140, 128
          %s142 = scalar_lea.hbm %s0, %s141
          %s143 = sshll.u32 %s134, 4
          %s144 = int_to_ptr.vmem [resolvable:$true] %s143
          %149 = dma.hbm_to_vmem [thread:$0]  %s142, 1024, %s144, %s131, 128, 128, 8
        $region20: #{up_decoder_block_2d.4} parent=15 // pred_fallthru
          _
      $region16: #{up_decoder_block_2d.4} parent=5 // pred_fallthru
        _
      %p150 = scmp.le.s32.totalorder 1, %s12
      %p151 = scmp.lt.s32.totalorder %s12, 3
      %p152 = pnand %p150, %p151
      %p153 = pneg %p152
      // Predicated region
      $region21: #{up_decoder_block_2d.4} parent=5 // pred_check
        _
      $region22: #{up_decoder_block_2d.4} parent=5 // pred_check_branch
        %155 = sbr.rel (%p152) target = $region24
      $region23: #{up_decoder_block_2d.4} parent=5 // pred_region
        %s156 = ssub.s32 %s12, 1
        %s157 = sand.u32 %s39, 1
        %s158 = scalar_lea.sflag [#allocation3], %s157
        %s159 = sand.u32 %s39, 1
        %s160 = smul.addr %s159, 64
        %s161 = scalar_lea.vmem [#allocation2], %s160
        // Predicated region
        $region25: #{up_decoder_block_2d.4} parent=23 // pred_check
          %p162 = pneg %p52
        $region26: #{up_decoder_block_2d.4} parent=23 // pred_check_branch
          %164 = sbr.rel (%p162) target = $region28
        $region27: #{up_decoder_block_2d.4} parent=23 // pred_region
          %165 = dma.done %s158, 1024
        $region28: #{up_decoder_block_2d.4} parent=23 // pred_fallthru
          _
        %s166 = sand.u32 %s39, 1
        %s167 = scalar_lea.sflag [#allocation3], %s166
        %s168 = sand.u32 %s39, 1
        %s169 = smul.addr %s168, 64
        %s170 = scalar_lea.vmem [#allocation2], %s169
        %p171 = pneg %p52
        %p172 = pneg %p49
        %p173 = pneg %p80
        %p174 = pneg %p77
        %p175 = scmp.lt.s32.totalorder %s21, 1
        %s176 = scalar_select %p175, %s21, 1
        %p177 = scmp.lt.s32.totalorder %s22, 0
        %s178 = scalar_select %p177, %s22, 0
        %s179 = sadd.s32 %s178, %s176
        %s180 = scalar_lea.vmem %s1, %s179
        %p181 = pneg %p108
        %p182 = pneg %p105
        %p183 = scmp.lt.s32.totalorder %s21, 1
        %s184 = scalar_select %p183, %s21, 1
        %p185 = scmp.lt.s32.totalorder %s22, 0
        %s186 = scalar_select %p185, %s22, 0
        %s187 = sadd.s32 %s186, %s184
        %s188 = scalar_lea.vmem %s2, %s187
        %s189 = smul.u32 8, %s22
        %p190 = scmp.lt.s32.totalorder %s21, 1
        %s191 = scalar_select %p190, %s21, 1
        %p192 = scmp.lt.s32.totalorder %s22, 0
        %s193 = scalar_select %p192, %s22, 0
        %s194 = sadd.s32 %s193, %s191
        %s195 = scalar_lea.vmem %s1, %s194
        %p196 = scmp.lt.s32.totalorder %s21, 1
        %s197 = scalar_select %p196, %s21, 1
        %p198 = scmp.lt.s32.totalorder %s22, 0
        %s199 = scalar_select %p198, %s22, 0
        %s200 = sadd.s32 %s199, %s197
        %s201 = scalar_lea.vmem %s2, %s200
        %v202 = vld [vmem:[%s161] sm:$0xff]
        %v203 = vld [vmem:[%s161 + $0x8] sm:$0xff]
        %v204 = vld [vmem:[%s161 + $0x10] sm:$0xff]
        %v205 = vld [vmem:[%s161 + $0x18] sm:$0xff]
        %v206 = vld [vmem:[%s161 + $0x20] sm:$0xff]
        %v207 = vld [vmem:[%s161 + $0x28] sm:$0xff]
        %v208 = vld [vmem:[%s161 + $0x30] sm:$0xff]
        %v209 = vld [vmem:[%s161 + $0x38] sm:$0xff]
        %vm210 = vcmask 523264
        %v211 = vsel %vm210, %v202, 0.0
        %v212 = vsel %vm210, %v203, 0.0
        %v213 = vadd.f32 %v211, %v212
        %v214 = vsel %vm210, %v204, 0.0
        %v215 = vadd.f32 %v213, %v214
        %v216 = vsel %vm210, %v205, 0.0
        %v217 = vadd.f32 %v215, %v216
        %v218 = vsel %vm210, %v206, 0.0
        %v219 = vadd.f32 %v217, %v218
        %v220 = vsel %vm210, %v207, 0.0
        %v221 = vadd.f32 %v219, %v220
        %v222 = vsel %vm210, %v208, 0.0
        %v223 = vadd.f32 %v221, %v222
        %v224 = vsel %vm210, %v209, 0.0
        %v225 = vadd.f32 %v223, %v224
        %v226 = vrot.slane %v225, 4
        %v227 = vadd.f32 %v225, %v226
        %v228 = vrot.slane %v227, 2
        %v229 = vadd.f32 %v227, %v228
        %v230 = vrot.slane %v229, 1
        %v231 = vadd.f32 %v229, %v230
        %vm232 = vcmask 516096
        %233 = vst.msk [vmem:[%s195] sm:$0x1] %vm232, %v231
        %v234 = vmul.f32 %v202, %v202
        %v235 = vmul.f32 %v203, %v203
        %v236 = vmul.f32 %v204, %v204
        %v237 = vmul.f32 %v205, %v205
        %v238 = vmul.f32 %v206, %v206
        %v239 = vmul.f32 %v207, %v207
        %v240 = vmul.f32 %v208, %v208
        %v241 = vmul.f32 %v209, %v209
        %v242 = vsel %vm210, %v234, 0.0
        %v243 = vsel %vm210, %v235, 0.0
        %v244 = vadd.f32 %v242, %v243
        %v245 = vsel %vm210, %v236, 0.0
        %v246 = vadd.f32 %v244, %v245
        %v247 = vsel %vm210, %v237, 0.0
        %v248 = vadd.f32 %v246, %v247
        %v249 = vsel %vm210, %v238, 0.0
        %v250 = vadd.f32 %v248, %v249
        %v251 = vsel %vm210, %v239, 0.0
        %v252 = vadd.f32 %v250, %v251
        %v253 = vsel %vm210, %v240, 0.0
        %v254 = vadd.f32 %v252, %v253
        %v255 = vsel %vm210, %v241, 0.0
        %v256 = vadd.f32 %v254, %v255
        %v257 = vrot.slane %v256, 4
        %v258 = vadd.f32 %v256, %v257
        %v259 = vrot.slane %v258, 2
        %v260 = vadd.f32 %v258, %v259
        %v261 = vrot.slane %v260, 1
        %v262 = vadd.f32 %v260, %v261
        %263 = vst.msk [vmem:[%s201] sm:$0x1] %vm232, %v262
        %p264 = scmp.lt.s32.totalorder %s21, 1
        %s265 = scalar_select %p264, %s21, 1
        %p266 = scmp.lt.s32.totalorder %s22, 0
        %s267 = scalar_select %p266, %s22, 0
        %s268 = sadd.s32 %s267, %s265
        %s269 = scalar_lea.vmem %s1, %s268
        %p270 = scmp.lt.s32.totalorder %s21, 1
        %s271 = scalar_select %p270, %s21, 1
        %p272 = scmp.lt.s32.totalorder %s22, 0
        %s273 = scalar_select %p272, %s22, 0
        %s274 = sadd.s32 %s273, %s271
        %s275 = scalar_lea.vmem %s2, %s274
        // Predicated region
        $region29: #{up_decoder_block_2d.4} parent=23 // pred_check
          %p276 = pneg %p77
        $region30: #{up_decoder_block_2d.4} parent=23 // pred_check_branch
          %278 = sbr.rel (%p276) target = $region32
        $region31: #{up_decoder_block_2d.4} parent=23 // pred_region
          _
        $region32: #{up_decoder_block_2d.4} parent=23 // pred_fallthru
          _
        // Predicated region
        $region33: #{up_decoder_block_2d.4} parent=23 // pred_check
          %p279 = pneg %p105
        $region34: #{up_decoder_block_2d.4} parent=23 // pred_check_branch
          %281 = sbr.rel (%p279) target = $region36
        $region35: #{up_decoder_block_2d.4} parent=23 // pred_region
          _
        $region36: #{up_decoder_block_2d.4} parent=23 // pred_fallthru
          _
      $region24: #{up_decoder_block_2d.4} parent=5 // pred_fallthru
        _
      %p282 = scmp.le.s32.totalorder 2, %s12
      // Predicated region
      $region37: #{up_decoder_block_2d.4} parent=5 // pred_check
        %p283 = pneg %p282
      $region38: #{up_decoder_block_2d.4} parent=5 // pred_check_branch
        %285 = sbr.rel (%p283) target = $region40
      $region39: #{up_decoder_block_2d.4} parent=5 // pred_region
        %s286 = ssub.s32 %s12, 2
        // Predicated region
        $region41: #{up_decoder_block_2d.4} parent=39 // pred_check
          %p287 = pneg %p83
        $region42: #{up_decoder_block_2d.4} parent=39 // pred_check_branch
          %289 = sbr.rel (%p287) target = $region44
        $region43: #{up_decoder_block_2d.4} parent=39 // pred_region
          %p290 = scmp.lt.s32.totalorder %s23, 1
          %s291 = scalar_select %p290, %s23, 1
          %p292 = scmp.lt.s32.totalorder %s24, 0
          %s293 = scalar_select %p292, %s24, 0
          %s294 = sadd.s32 %s293, %s291
          %s295 = scalar_lea.vmem %s1, %s294
        $region44: #{up_decoder_block_2d.4} parent=39 // pred_fallthru
          _
        // Predicated region
        $region45: #{up_decoder_block_2d.4} parent=39 // pred_check
          %p296 = pneg %p111
        $region46: #{up_decoder_block_2d.4} parent=39 // pred_check_branch
          %298 = sbr.rel (%p296) target = $region48
        $region47: #{up_decoder_block_2d.4} parent=39 // pred_region
          %p299 = scmp.lt.s32.totalorder %s23, 1
          %s300 = scalar_select %p299, %s23, 1
          %p301 = scmp.lt.s32.totalorder %s24, 0
          %s302 = scalar_select %p301, %s24, 0
          %s303 = sadd.s32 %s302, %s300
          %s304 = scalar_lea.vmem %s2, %s303
        $region48: #{up_decoder_block_2d.4} parent=39 // pred_fallthru
          _
      $region40: #{up_decoder_block_2d.4} parent=5 // pred_fallthru
        _
    $region6: #{up_decoder_block_2d.4} parent=1 // loop_footer
      %s16 = sadd.s32 1, %s12
    $region7: #{up_decoder_block_2d.4} parent=1 // loop_footer_branch
      %11 = sbr.rel target = $region3
    $region8: #{up_decoder_block_2d.4} parent=1 // loop_exit
      _
    %305 = vsyncpa [#allocation3], 1
    %s306 = scalar_lea.sflag [#allocation3], 1
    %307 = vsyncpa %s306, 1

// kernel: up_decoder_block_2d.5
$region0: #{up_decoder_block_2d.5}
  #allocation0 [shape = 'u32[]', space=smem, size = 0x4, offset = 0x4, fixed_abs, tag = 'smem constant byte address 0x4 - core index']
  #allocation1 [shape = 'u32[144,128]{1,0:T(1,128)}', space=vmem, size = 0x12000, scoped, tag = 'internal scratch']
  %s0 = inlined_call_operand.vmem [shape: f32[2,8,8,64], index: 0, kind: input, shape index: {}, may-alias: {0,1,2}]
  %s1 = inlined_call_operand.vmem [shape: f32[2,8,8,64], index: 1, kind: input, shape index: {}, may-alias: {0,1,2}]
  %s2 = inlined_call_operand.vmem [shape: f32[2,8,8,64], index: 2, kind: input, shape index: {}, may-alias: {0,1,2}]
  %s3 = inlined_call_operand.vmem [shape: f32[2,1,64], index: 3, kind: input, shape index: {}]
  %s4 = inlined_call_operand.vmem [shape: f32[2,1,64], index: 4, kind: input, shape index: {}]
  %s5 = inlined_call_operand.vmem [shape: bf16[3,192,32], index: 5, kind: input, shape index: {}]
  %s6 = inlined_call_operand.vmem [shape: f32[1,32], index: 6, kind: input, shape index: {}]
  %s7 = inlined_call_operand.vmem [shape: f32[2,8,8,32], index: 7, kind: output, shape index: {0}]
  %s8 = inlined_call_operand.vmem [shape: f32[2,1,1,32], index: 8, kind: output, shape index: {1}]
  %s9 = inlined_call_operand.vmem [shape: f32[2,1,1,32], index: 9, kind: output, shape index: {2}]
  %10 = xla_tuple %s7, %s8, %s9
  %s11 = sld [smem:[#allocation0]]
  $region77: #{up_decoder_block_2d.5} parent=0
    _
  %s13 = ssub.s32 1, %s11
  %s14 = scalar_select 0, %s13, %s11
  loop: start=0, step=1, limit=4
  $region2: #{up_decoder_block_2d.5} parent=0 // loop_pre_header
    _
  $region3: #{up_decoder_block_2d.5} parent=0 // loop_header
    %s16 = sphi 0, %s20
    %p17 = scmp.ge.s32.totalorder %s16, 4
    %s23 = sphi 0, %s35
    %s24 = sphi 0, %s31
    %s25 = sphi 0, %s23
    %s26 = sphi 0, %s24
    %s27 = sphi 0, %s25
    %s28 = sphi 0, %s26
    %s40 = sphi 0, %s42
    %s43 = sphi 0, %s40
    %s44 = sphi 0, %s43
    %s60 = sphi 0, %s44
    %s76 = sphi 0, %s78
    %s79 = sphi 0, %s76
    %s80 = sphi 0, %s79
    %s96 = sphi 0, %s80
    %s112 = sphi 0, %s114
    %s115 = sphi 0, %s112
    %s116 = sphi 0, %s115
    %s132 = sphi 0, %s116
    %s138 = sphi 0, %s140
    %s141 = sphi 0, %s138
    %s142 = sphi 0, %s141
    %s158 = sphi 0, %s142
    %s164 = sphi 0, %s166
    %s167 = sphi 0, %s164
    %s168 = sphi 0, %s167
    %s184 = sphi 0, %s168
    %s188 = sphi 0, %s188
    %s190 = sphi 0, %s188
    %s191 = sphi 0, %s190
    %s205 = sphi 0, %s191
    %s209 = sphi 0, %s209
    %s211 = sphi 0, %s209
    %s212 = sphi 0, %s211
    %s226 = sphi 0, %s212
    %s234 = sphi 0, %s236
    %s237 = sphi 0, %s234
    %s238 = sphi 0, %s237
    %s254 = sphi 0, %s238
    %s262 = sphi 0, %s264
    %s265 = sphi 0, %s262
    %s266 = sphi 0, %s265
    %s282 = sphi 0, %s266
    %s290 = sphi 0, %s292
    %s293 = sphi 0, %s290
    %s294 = sphi 0, %s293
    %s310 = sphi 0, %s294
  $region4: #{up_decoder_block_2d.5} parent=0 // loop_header_branch
    %19 = sbr.rel (%p17) target = $region8
  $region5: #{up_decoder_block_2d.5} parent=0 // loop_body
    %s21 = ssub.s32 %s16, 1
    %s22 = ssub.s32 %s16, 2
    %s29 = sadd.s32 1, %s24
    %p30 = scmp.ge.s32.totalorder %s29, 1
    %s31 = scalar_select %p30, 0, %s29
    %s32 = sadd.s32 1, %s23
    %s33 = scalar_select %p30, %s32, %s23
    %p34 = scmp.ge.s32.totalorder %s33, 2
    %s35 = scalar_select %p34, 0, %s33
    %s36 = ssub.s32 %s23, %s35
    %s37 = ssub.s32 %s24, %s31
    %s38 = sor.u32 %s36, %s37
    %p39 = scmp.eq.s32.totalorder %s38, 0
    %s41 = sadd.s32 %s40, 1
    %s42 = scalar_select %p39, %s40, %s41
    %p45 = pneg %p39
    %p46 = scmp.eq.s32.totalorder %s16, 1
    %p47 = por %p45, %p46
    %p48 = scmp.ne.s32.totalorder %s40, %s43
    %p49 = scmp.eq.s32.totalorder %s16, 0
    %p50 = por %p48, %p49
    %p51 = scmp.ne.s32.totalorder %s40, %s43
    %p52 = scmp.eq.s32.totalorder %s21, 1
    %p53 = por %p51, %p52
    %p54 = scmp.ne.s32.totalorder %s43, %s44
    %p55 = scmp.eq.s32.totalorder %s21, 0
    %p56 = por %p54, %p55
    %p57 = scmp.ne.s32.totalorder %s43, %s44
    %p58 = scmp.eq.s32.totalorder %s22, 1
    %p59 = por %p57, %p58
    %p61 = scmp.ne.s32.totalorder %s44, %s60
    %p62 = scmp.eq.s32.totalorder %s22, 0
    %p63 = por %p61, %p62
    %s64 = smul.u32 %s24, 8
    %s65 = ssub.s32 %s64, 1
    %p66 = scmp.gt.s32.totalorder %s65, 0
    %s67 = scalar_select %p66, %s65, 0
    %s68 = smul.u32 %s31, 8
    %s69 = ssub.s32 %s68, 1
    %p70 = scmp.gt.s32.totalorder %s69, 0
    %s71 = scalar_select %p70, %s69, 0
    %s72 = ssub.s32 %s23, %s35
    %s73 = ssub.s32 %s67, %s71
    %s74 = sor.u32 %s72, %s73
    %p75 = scmp.eq.s32.totalorder %s74, 0
    %s77 = sadd.s32 %s76, 1
    %s78 = scalar_select %p75, %s76, %s77
    %p81 = pneg %p75
    %p82 = scmp.eq.s32.totalorder %s16, 1
    %p83 = por %p81, %p82
    %p84 = scmp.ne.s32.totalorder %s76, %s79
    %p85 = scmp.eq.s32.totalorder %s16, 0
    %p86 = por %p84, %p85
    %p87 = scmp.ne.s32.totalorder %s76, %s79
    %p88 = scmp.eq.s32.totalorder %s21, 1
    %p89 = por %p87, %p88
    %p90 = scmp.ne.s32.totalorder %s79, %s80
    %p91 = scmp.eq.s32.totalorder %s21, 0
    %p92 = por %p90, %p91
    %p93 = scmp.ne.s32.totalorder %s79, %s80
    %p94 = scmp.eq.s32.totalorder %s22, 1
    %p95 = por %p93, %p94
    %p97 = scmp.ne.s32.totalorder %s80, %s96
    %p98 = scmp.eq.s32.totalorder %s22, 0
    %p99 = por %p97, %p98
    %s100 = sadd.s32 %s24, 1
    %s101 = smul.u32 %s100, 8
    %p102 = scmp.lt.s32.totalorder %s101, 7
    %s103 = scalar_select %p102, %s101, 7
    %s104 = sadd.s32 %s31, 1
    %s105 = smul.u32 %s104, 8
    %p106 = scmp.lt.s32.totalorder %s105, 7
    %s107 = scalar_select %p106, %s105, 7
    %s108 = ssub.s32 %s23, %s35
    %s109 = ssub.s32 %s103, %s107
    %s110 = sor.u32 %s108, %s109
    %p111 = scmp.eq.s32.totalorder %s110, 0
    %s113 = sadd.s32 %s112, 1
    %s114 = scalar_select %p111, %s112, %s113
    %p117 = pneg %p111
    %p118 = scmp.eq.s32.totalorder %s16, 1
    %p119 = por %p117, %p118
    %p120 = scmp.ne.s32.totalorder %s112, %s115
    %p121 = scmp.eq.s32.totalorder %s16, 0
    %p122 = por %p120, %p121
    %p123 = scmp.ne.s32.totalorder %s112, %s115
    %p124 = scmp.eq.s32.totalorder %s21, 1
    %p125 = por %p123, %p124
    %p126 = scmp.ne.s32.totalorder %s115, %s116
    %p127 = scmp.eq.s32.totalorder %s21, 0
    %p128 = por %p126, %p127
    %p129 = scmp.ne.s32.totalorder %s115, %s116
    %p130 = scmp.eq.s32.totalorder %s22, 1
    %p131 = por %p129, %p130
    %p133 = scmp.ne.s32.totalorder %s116, %s132
    %p134 = scmp.eq.s32.totalorder %s22, 0
    %p135 = por %p133, %p134
    %s136 = ssub.s32 %s23, %s35
    %p137 = scmp.eq.s32.totalorder %s136, 0
    %s139 = sadd.s32 %s138, 1
    %s140 = scalar_select %p137, %s138, %s139
    %p143 = pneg %p137
    %p144 = scmp.eq.s32.totalorder %s16, 1
    %p145 = por %p143, %p144
    %p146 = scmp.ne.s32.totalorder %s138, %s141
    %p147 = scmp.eq.s32.totalorder %s16, 0
    %p148 = por %p146, %p147
    %p149 = scmp.ne.s32.totalorder %s138, %s141
    %p150 = scmp.eq.s32.totalorder %s21, 1
    %p151 = por %p149, %p150
    %p152 = scmp.ne.s32.totalorder %s141, %s142
    %p153 = scmp.eq.s32.totalorder %s21, 0
    %p154 = por %p152, %p153
    %p155 = scmp.ne.s32.totalorder %s141, %s142
    %p156 = scmp.eq.s32.totalorder %s22, 1
    %p157 = por %p155, %p156
    %p159 = scmp.ne.s32.totalorder %s142, %s158
    %p160 = scmp.eq.s32.totalorder %s22, 0
    %p161 = por %p159, %p160
    %s162 = ssub.s32 %s23, %s35
    %p163 = scmp.eq.s32.totalorder %s162, 0
    %s165 = sadd.s32 %s164, 1
    %s166 = scalar_select %p163, %s164, %s165
    %p169 = pneg %p163
    %p170 = scmp.eq.s32.totalorder %s16, 1
    %p171 = por %p169, %p170
    %p172 = scmp.ne.s32.totalorder %s164, %s167
    %p173 = scmp.eq.s32.totalorder %s16, 0
    %p174 = por %p172, %p173
    %p175 = scmp.ne.s32.totalorder %s164, %s167
    %p176 = scmp.eq.s32.totalorder %s21, 1
    %p177 = por %p175, %p176
    %p178 = scmp.ne.s32.totalorder %s167, %s168
    %p179 = scmp.eq.s32.totalorder %s21, 0
    %p180 = por %p178, %p179
    %p181 = scmp.ne.s32.totalorder %s167, %s168
    %p182 = scmp.eq.s32.totalorder %s22, 1
    %p183 = por %p181, %p182
    %p185 = scmp.ne.s32.totalorder %s168, %s184
    %p186 = scmp.eq.s32.totalorder %s22, 0
    %p187 = por %p185, %p186
    %s189 = sadd.s32 %s188, 1
    %p192 = scmp.eq.s32.totalorder %s16, 1
    %p193 = scmp.ne.s32.totalorder %s188, %s190
    %p194 = scmp.eq.s32.totalorder %s16, 0
    %p195 = por %p193, %p194
    %p196 = scmp.ne.s32.totalorder %s188, %s190
    %p197 = scmp.eq.s32.totalorder %s21, 1
    %p198 = por %p196, %p197
    %p199 = scmp.ne.s32.totalorder %s190, %s191
    %p200 = scmp.eq.s32.totalorder %s21, 0
    %p201 = por %p199, %p200
    %p202 = scmp.ne.s32.totalorder %s190, %s191
    %p203 = scmp.eq.s32.totalorder %s22, 1
    %p204 = por %p202, %p203
    %p206 = scmp.ne.s32.totalorder %s191, %s205
    %p207 = scmp.eq.s32.totalorder %s22, 0
    %p208 = por %p206, %p207
    %s210 = sadd.s32 %s209, 1
    %p213 = scmp.eq.s32.totalorder %s16, 1
    %p214 = scmp.ne.s32.totalorder %s209, %s211
    %p215 = scmp.eq.s32.totalorder %s16, 0
    %p216 = por %p214, %p215
    %p217 = scmp.ne.s32.totalorder %s209, %s211
    %p218 = scmp.eq.s32.totalorder %s21, 1
    %p219 = por %p217, %p218
    %p220 = scmp.ne.s32.totalorder %s211, %s212
    %p221 = scmp.eq.s32.totalorder %s21, 0
    %p222 = por %p220, %p221
    %p223 = scmp.ne.s32.totalorder %s211, %s212
    %p224 = scmp.eq.s32.totalorder %s22, 1
    %p225 = por %p223, %p224
    %p227 = scmp.ne.s32.totalorder %s212, %s226
    %p228 = scmp.eq.s32.totalorder %s22, 0
    %p229 = por %p227, %p228
    %s230 = ssub.s32 %s23, %s35
    %s231 = ssub.s32 %s24, %s31
    %s232 = sor.u32 %s230, %s231
    %p233 = scmp.eq.s32.totalorder %s232, 0
    %s235 = sadd.s32 %s234, 1
    %s236 = scalar_select %p233, %s234, %s235
    %p239 = pneg %p233
    %p240 = scmp.eq.s32.totalorder %s16, 1
    %p241 = por %p239, %p240
    %p242 = scmp.ne.s32.totalorder %s234, %s237
    %p243 = scmp.eq.s32.totalorder %s16, 0
    %p244 = por %p242, %p243
    %p245 = scmp.ne.s32.totalorder %s234, %s237
    %p246 = scmp.eq.s32.totalorder %s21, 1
    %p247 = por %p245, %p246
    %p248 = scmp.ne.s32.totalorder %s237, %s238
    %p249 = scmp.eq.s32.totalorder %s21, 0
    %p250 = por %p248, %p249
    %p251 = scmp.ne.s32.totalorder %s237, %s238
    %p252 = scmp.eq.s32.totalorder %s22, 1
    %p253 = por %p251, %p252
    %p255 = scmp.ne.s32.totalorder %s238, %s254
    %p256 = scmp.eq.s32.totalorder %s22, 0
    %p257 = por %p255, %p256
    %s258 = ssub.s32 %s23, %s35
    %s259 = ssub.s32 %s24, %s31
    %s260 = sor.u32 %s258, %s259
    %p261 = scmp.eq.s32.totalorder %s260, 0
    %s263 = sadd.s32 %s262, 1
    %s264 = scalar_select %p261, %s262, %s263
    %p267 = pneg %p261
    %p268 = scmp.eq.s32.totalorder %s16, 1
    %p269 = por %p267, %p268
    %p270 = scmp.ne.s32.totalorder %s262, %s265
    %p271 = scmp.eq.s32.totalorder %s16, 0
    %p272 = por %p270, %p271
    %p273 = scmp.ne.s32.totalorder %s262, %s265
    %p274 = scmp.eq.s32.totalorder %s21, 1
    %p275 = por %p273, %p274
    %p276 = scmp.ne.s32.totalorder %s265, %s266
    %p277 = scmp.eq.s32.totalorder %s21, 0
    %p278 = por %p276, %p277
    %p279 = scmp.ne.s32.totalorder %s265, %s266
    %p280 = scmp.eq.s32.totalorder %s22, 1
    %p281 = por %p279, %p280
    %p283 = scmp.ne.s32.totalorder %s266, %s282
    %p284 = scmp.eq.s32.totalorder %s22, 0
    %p285 = por %p283, %p284
    %s286 = ssub.s32 %s23, %s35
    %s287 = ssub.s32 %s24, %s31
    %s288 = sor.u32 %s286, %s287
    %p289 = scmp.eq.s32.totalorder %s288, 0
    %s291 = sadd.s32 %s290, 1
    %s292 = scalar_select %p289, %s290, %s291
    %p295 = pneg %p289
    %p296 = scmp.eq.s32.totalorder %s16, 1
    %p297 = por %p295, %p296
    %p298 = scmp.ne.s32.totalorder %s290, %s293
    %p299 = scmp.eq.s32.totalorder %s16, 0
    %p300 = por %p298, %p299
    %p301 = scmp.ne.s32.totalorder %s290, %s293
    %p302 = scmp.eq.s32.totalorder %s21, 1
    %p303 = por %p301, %p302
    %p304 = scmp.ne.s32.totalorder %s293, %s294
    %p305 = scmp.eq.s32.totalorder %s21, 0
    %p306 = por %p304, %p305
    %p307 = scmp.ne.s32.totalorder %s293, %s294
    %p308 = scmp.eq.s32.totalorder %s22, 1
    %p309 = por %p307, %p308
    %p311 = scmp.ne.s32.totalorder %s294, %s310
    %p312 = scmp.eq.s32.totalorder %s22, 0
    %p313 = por %p311, %p312
    %p314 = scmp.le.s32.totalorder 1, %s16
    %p315 = scmp.lt.s32.totalorder %s16, 3
    %p316 = pnand %p314, %p315
    %p317 = pneg %p316
    // Predicated region
    $region9: #{up_decoder_block_2d.5} parent=5 // pred_check
      _
    $region10: #{up_decoder_block_2d.5} parent=5 // pred_check_branch
      %319 = sbr.rel (%p316) target = $region12
    $region11: #{up_decoder_block_2d.5} parent=5 // pred_region
      %s320 = ssub.s32 %s16, 1
      // Predicated region
      $region13: #{up_decoder_block_2d.5} parent=11 // pred_check
        %p321 = pneg %p201
      $region14: #{up_decoder_block_2d.5} parent=11 // pred_check_branch
        %323 = sbr.rel (%p321) target = $region16
      $region15: #{up_decoder_block_2d.5} parent=11 // pred_region
        _
      $region16: #{up_decoder_block_2d.5} parent=11 // pred_fallthru
        _
      // Predicated region
      $region17: #{up_decoder_block_2d.5} parent=11 // pred_check
        %p324 = pneg %p222
      $region18: #{up_decoder_block_2d.5} parent=11 // pred_check_branch
        %326 = sbr.rel (%p324) target = $region20
      $region19: #{up_decoder_block_2d.5} parent=11 // pred_region
        _
      $region20: #{up_decoder_block_2d.5} parent=11 // pred_fallthru
        _
    $region12: #{up_decoder_block_2d.5} parent=5 // pred_fallthru
      _
    %p327 = scmp.lt.s32.totalorder %s16, 2
    // Predicated region
    $region21: #{up_decoder_block_2d.5} parent=5 // pred_check
      %p328 = pneg %p327
    $region22: #{up_decoder_block_2d.5} parent=5 // pred_check_branch
      %330 = sbr.rel (%p328) target = $region24
    $region23: #{up_decoder_block_2d.5} parent=5 // pred_region
      // Predicated region
      $region25: #{up_decoder_block_2d.5} parent=23 // pred_check
        %p331 = pneg %p50
      $region26: #{up_decoder_block_2d.5} parent=23 // pred_check_branch
        %333 = sbr.rel (%p331) target = $region28
      $region27: #{up_decoder_block_2d.5} parent=23 // pred_region
        %s334 = smul.u32 8, %s24
        %p335 = scmp.lt.s32.totalorder %s23, 1
        %s336 = scalar_select %p335, %s23, 1
        %p337 = scmp.lt.s32.totalorder %s334, 7
        %s338 = scalar_select %p337, %s334, 7
        %s339 = smul.addr %s336, 8
        %s340 = sadd.s32 %s338, %s339
        %s341 = smul.addr %s340, 8
        %s342 = scalar_lea.vmem %s0, %s341
        %s343 = smul.u32 8, %s24
      $region28: #{up_decoder_block_2d.5} parent=23 // pred_fallthru
        _
      // Predicated region
      $region29: #{up_decoder_block_2d.5} parent=23 // pred_check
        %p344 = pneg %p86
      $region30: #{up_decoder_block_2d.5} parent=23 // pred_check_branch
        %346 = sbr.rel (%p344) target = $region32
      $region31: #{up_decoder_block_2d.5} parent=23 // pred_region
        %s347 = smul.u32 %s24, 8
        %s348 = ssub.s32 %s347, 1
        %p349 = scmp.gt.s32.totalorder %s348, 0
        %s350 = scalar_select %p349, %s348, 0
        %p351 = scmp.lt.s32.totalorder %s23, 1
        %s352 = scalar_select %p351, %s23, 1
        %p353 = scmp.lt.s32.totalorder %s350, 7
        %s354 = scalar_select %p353, %s350, 7
        %s355 = smul.addr %s352, 8
        %s356 = sadd.s32 %s354, %s355
        %s357 = smul.addr %s356, 8
        %s358 = scalar_lea.vmem %s1, %s357
        %s359 = smul.u32 %s24, 8
        %s360 = ssub.s32 %s359, 1
        %p361 = scmp.gt.s32.totalorder %s360, 0
        %s362 = scalar_select %p361, %s360, 0
      $region32: #{up_decoder_block_2d.5} parent=23 // pred_fallthru
        _
      // Predicated region
      $region33: #{up_decoder_block_2d.5} parent=23 // pred_check
        %p363 = pneg %p122
      $region34: #{up_decoder_block_2d.5} parent=23 // pred_check_branch
        %365 = sbr.rel (%p363) target = $region36
      $region35: #{up_decoder_block_2d.5} parent=23 // pred_region
        %s366 = sadd.s32 %s24, 1
        %s367 = smul.u32 %s366, 8
        %p368 = scmp.lt.s32.totalorder %s367, 7
        %s369 = scalar_select %p368, %s367, 7
        %p370 = scmp.lt.s32.totalorder %s23, 1
        %s371 = scalar_select %p370, %s23, 1
        %p372 = scmp.lt.s32.totalorder %s369, 7
        %s373 = scalar_select %p372, %s369, 7
        %s374 = smul.addr %s371, 8
        %s375 = sadd.s32 %s373, %s374
        %s376 = smul.addr %s375, 8
        %s377 = scalar_lea.vmem %s2, %s376
        %s378 = sadd.s32 %s24, 1
        %s379 = smul.u32 %s378, 8
        %p380 = scmp.lt.s32.totalorder %s379, 7
        %s381 = scalar_select %p380, %s379, 7
      $region36: #{up_decoder_block_2d.5} parent=23 // pred_fallthru
        _
      // Predicated region
      $region37: #{up_decoder_block_2d.5} parent=23 // pred_check
        %p382 = pneg %p148
      $region38: #{up_decoder_block_2d.5} parent=23 // pred_check_branch
        %384 = sbr.rel (%p382) target = $region40
      $region39: #{up_decoder_block_2d.5} parent=23 // pred_region
        %p385 = scmp.lt.s32.totalorder %s23, 1
        %s386 = scalar_select %p385, %s23, 1
        %s387 = scalar_lea.vmem %s3, %s386
      $region40: #{up_decoder_block_2d.5} parent=23 // pred_fallthru
        _
      // Predicated region
      $region41: #{up_decoder_block_2d.5} parent=23 // pred_check
        %p388 = pneg %p174
      $region42: #{up_decoder_block_2d.5} parent=23 // pred_check_branch
        %390 = sbr.rel (%p388) target = $region44
      $region43: #{up_decoder_block_2d.5} parent=23 // pred_region
        %p391 = scmp.lt.s32.totalorder %s23, 1
        %s392 = scalar_select %p391, %s23, 1
        %s393 = scalar_lea.vmem %s4, %s392
      $region44: #{up_decoder_block_2d.5} parent=23 // pred_fallthru
        _
    $region24: #{up_decoder_block_2d.5} parent=5 // pred_fallthru
      _
    %p394 = scmp.le.s32.totalorder 1, %s16
    %p395 = scmp.lt.s32.totalorder %s16, 3
    %p396 = pnand %p394, %p395
    %p397 = pneg %p396
    // Predicated region
    $region45: #{up_decoder_block_2d.5} parent=5 // pred_check
      _
    $region46: #{up_decoder_block_2d.5} parent=5 // pred_check_branch
      %399 = sbr.rel (%p396) target = $region48
    $region47: #{up_decoder_block_2d.5} parent=5 // pred_region
      %s400 = ssub.s32 %s16, 1
      %s401 = smul.u32 8, %s26
      %p402 = scmp.lt.s32.totalorder %s25, 1
      %s403 = scalar_select %p402, %s25, 1
      %p404 = scmp.lt.s32.totalorder %s401, 7
      %s405 = scalar_select %p404, %s401, 7
      %s406 = smul.addr %s403, 8
      %s407 = sadd.s32 %s405, %s406
      %s408 = smul.addr %s407, 8
      %s409 = scalar_lea.vmem %s0, %s408
      %p410 = pneg %p56
      %p411 = pneg %p53
      %s412 = smul.u32 %s26, 8
      %s413 = ssub.s32 %s412, 1
      %p414 = scmp.gt.s32.totalorder %s413, 0
      %s415 = scalar_select %p414, %s413, 0
      %p416 = scmp.lt.s32.totalorder %s25, 1
      %s417 = scalar_select %p416, %s25, 1
      %p418 = scmp.lt.s32.totalorder %s415, 7
      %s419 = scalar_select %p418, %s415, 7
      %s420 = smul.addr %s417, 8
      %s421 = sadd.s32 %s419, %s420
      %s422 = smul.addr %s421, 8
      %s423 = scalar_lea.vmem %s1, %s422
      %p424 = pneg %p92
      %p425 = pneg %p89
      %s426 = sadd.s32 %s26, 1
      %s427 = smul.u32 %s426, 8
      %p428 = scmp.lt.s32.totalorder %s427, 7
      %s429 = scalar_select %p428, %s427, 7
      %p430 = scmp.lt.s32.totalorder %s25, 1
      %s431 = scalar_select %p430, %s25, 1
      %p432 = scmp.lt.s32.totalorder %s429, 7
      %s433 = scalar_select %p432, %s429, 7
      %s434 = smul.addr %s431, 8
      %s435 = sadd.s32 %s433, %s434
      %s436 = smul.addr %s435, 8
      %s437 = scalar_lea.vmem %s2, %s436
      %p438 = pneg %p128
      %p439 = pneg %p125
      %p440 = scmp.lt.s32.totalorder %s25, 1
      %s441 = scalar_select %p440, %s25, 1
      %s442 = scalar_lea.vmem %s3, %s441
      %p443 = pneg %p154
      %p444 = pneg %p151
      %p445 = scmp.lt.s32.totalorder %s25, 1
      %s446 = scalar_select %p445, %s25, 1
      %s447 = scalar_lea.vmem %s4, %s446
      %p448 = pneg %p180
      %p449 = pneg %p177
      %p450 = pneg %p201
      %p451 = pneg %p198
      %p452 = pneg %p222
      %p453 = pneg %p219
      %p454 = pneg %p250
      %p455 = pneg %p247
      %s456 = smul.u32 8, %s26
      %p457 = scmp.lt.s32.totalorder %s25, 1
      %s458 = scalar_select %p457, %s25, 1
      %p459 = scmp.lt.s32.totalorder %s456, 7
      %s460 = scalar_select %p459, %s456, 7
      %s461 = smul.addr %s458, 8
      %s462 = sadd.s32 %s460, %s461
      %s463 = smul.addr %s462, 8
      %s464 = scalar_lea.vmem %s7, %s463
      %p465 = pneg %p278
      %p466 = pneg %p275
      %p467 = scmp.lt.s32.totalorder %s25, 1
      %s468 = scalar_select %p467, %s25, 1
      %p469 = scmp.lt.s32.totalorder %s26, 0
      %s470 = scalar_select %p469, %s26, 0
      %s471 = sadd.s32 %s470, %s468
      %s472 = scalar_lea.vmem %s8, %s471
      %p473 = pneg %p306
      %p474 = pneg %p303
      %p475 = scmp.lt.s32.totalorder %s25, 1
      %s476 = scalar_select %p475, %s25, 1
      %p477 = scmp.lt.s32.totalorder %s26, 0
      %s478 = scalar_select %p477, %s26, 0
      %s479 = sadd.s32 %s478, %s476
      %s480 = scalar_lea.vmem %s9, %s479
      %s481 = smul.u32 8, %s26
      %p482 = scmp.lt.s32.totalorder %s25, 1
      %s483 = scalar_select %p482, %s25, 1
      %p484 = scmp.lt.s32.totalorder %s481, 7
      %s485 = scalar_select %p484, %s481, 7
      %s486 = smul.addr %s483, 8
      %s487 = sadd.s32 %s485, %s486
      %s488 = smul.addr %s487, 8
      %s489 = scalar_lea.vmem %s0, %s488
      %s490 = smul.u32 8, %s26
      %s491 = smul.u32 %s26, 8
      %s492 = ssub.s32 %s491, 1
      %p493 = scmp.gt.s32.totalorder %s492, 0
      %s494 = scalar_select %p493, %s492, 0
      %p495 = scmp.lt.s32.totalorder %s25, 1
      %s496 = scalar_select %p495, %s25, 1
      %p497 = scmp.lt.s32.totalorder %s494, 7
      %s498 = scalar_select %p497, %s494, 7
      %s499 = smul.addr %s496, 8
      %s500 = sadd.s32 %s498, %s499
      %s501 = smul.addr %s500, 8
      %s502 = scalar_lea.vmem %s1, %s501
      %s503 = smul.u32 %s26, 8
      %s504 = ssub.s32 %s503, 1
      %p505 = scmp.gt.s32.totalorder %s504, 0
      %s506 = scalar_select %p505, %s504, 0
      %s507 = sadd.s32 %s26, 1
      %s508 = smul.u32 %s507, 8
      %p509 = scmp.lt.s32.totalorder %s508, 7
      %s510 = scalar_select %p509, %s508, 7
      %p511 = scmp.lt.s32.totalorder %s25, 1
      %s512 = scalar_select %p511, %s25, 1
      %p513 = scmp.lt.s32.totalorder %s510, 7
      %s514 = scalar_select %p513, %s510, 7
      %s515 = smul.addr %s512, 8
      %s516 = sadd.s32 %s514, %s515
      %s517 = smul.addr %s516, 8
      %s518 = scalar_lea.vmem %s2, %s517
      %s519 = sadd.s32 %s26, 1
      %s520 = smul.u32 %s519, 8
      %p521 = scmp.lt.s32.totalorder %s520, 7
      %s522 = scalar_select %p521, %s520, 7
      %p523 = scmp.lt.s32.totalorder %s25, 1
      %s524 = scalar_select %p523, %s25, 1
      %s525 = scalar_lea.vmem %s3, %s524
      %p526 = scmp.lt.s32.totalorder %s25, 1
      %s527 = scalar_select %p526, %s25, 1
      %s528 = scalar_lea.vmem %s4, %s527
      %s529 = smul.u32 8, %s26
      %p530 = scmp.lt.s32.totalorder %s25, 1
      %s531 = scalar_select %p530, %s25, 1
      %p532 = scmp.lt.s32.totalorder %s529, 7
      %s533 = scalar_select %p532, %s529, 7
      %s534 = smul.addr %s531, 8
      %s535 = sadd.s32 %s533, %s534
      %s536 = smul.addr %s535, 8
      %s537 = scalar_lea.vmem %s7, %s536
      %s538 = smul.u32 8, %s26
      %p539 = scmp.lt.s32.totalorder %s25, 1
      %s540 = scalar_select %p539, %s25, 1
      %p541 = scmp.lt.s32.totalorder %s26, 0
      %s542 = scalar_select %p541, %s26, 0
      %s543 = sadd.s32 %s542, %s540
      %s544 = scalar_lea.vmem %s8, %s543
      %p545 = scmp.lt.s32.totalorder %s25, 1
      %s546 = scalar_select %p545, %s25, 1
      %p547 = scmp.lt.s32.totalorder %s26, 0
      %s548 = scalar_select %p547, %s26, 0
      %s549 = sadd.s32 %s548, %s546
      %s550 = scalar_lea.vmem %s9, %s549
      %v552 = vld [vmem:[%s525] sm:$0x1]
      %v553 = vld [vmem:[%s528] sm:$0x1]
      %v554 = vld [vmem:[%s489] sm:$0xff]
      %v555 = vld [vmem:[%s489 + $0x8] sm:$0xff]
      %v556 = vld [vmem:[%s489 + $0x10] sm:$0xff]
      %v557 = vld [vmem:[%s489 + $0x18] sm:$0xff]
      %v558 = vld [vmem:[%s489 + $0x20] sm:$0xff]
      %v559 = vld [vmem:[%s489 + $0x28] sm:$0xff]
      %v560 = vld [vmem:[%s489 + $0x30] sm:$0xff]
      %v561 = vld [vmem:[%s489 + $0x38] sm:$0xff]
      %v563 = vlaneseq
      %v564 = vshrl.u32 %v563, 7
      %v565 = vsub.s32 0, %v564
      %v566 = vrot.slane %v552, %v565
      %v568 = vmul.f32 %v554, %v566
      %v569 = vmul.f32 %v555, %v566
      %v570 = vmul.f32 %v556, %v566
      %v571 = vmul.f32 %v557, %v566
      %v572 = vmul.f32 %v558, %v566
      %v573 = vmul.f32 %v559, %v566
      %v574 = vmul.f32 %v560, %v566
      %v575 = vmul.f32 %v561, %v566
      %v577 = vlaneseq
      %v578 = vshrl.u32 %v577, 7
      %v579 = vsub.s32 0, %v578
      %v580 = vrot.slane %v553, %v579
      %v582 = vadd.f32 %v568, %v580
      %v583 = vadd.f32 %v569, %v580
      %v584 = vadd.f32 %v570, %v580
      %v585 = vadd.f32 %v571, %v580
      %v586 = vadd.f32 %v572, %v580
      %v587 = vadd.f32 %v573, %v580
      %v588 = vadd.f32 %v574, %v580
      %v589 = vadd.f32 %v575, %v580
      %v590 = vxor.u32 %v582, 2147483648
      %v591 = vxor.u32 %v583, 2147483648
      %v592 = vxor.u32 %v584, 2147483648
      %v593 = vxor.u32 %v585, 2147483648
      %v594 = vxor.u32 %v586, 2147483648
      %v595 = vxor.u32 %v587, 2147483648
      %v596 = vxor.u32 %v588, 2147483648
      %v597 = vxor.u32 %v589, 2147483648
      %v598 = vmul.f32 %v590, 1.442695
      %v599 = vpow.pop %v598
      %v600 = vmul.f32 %v591, 1.442695
      %v601 = vpow.pop %v600
      %v602 = vmul.f32 %v592, 1.442695
      %v603 = vpow.pop %v602
      %v604 = vmul.f32 %v593, 1.442695
      %v605 = vpow.pop %v604
      %v606 = vmul.f32 %v594, 1.442695
      %v607 = vpow.pop %v606
      %v608 = vmul.f32 %v595, 1.442695
      %v609 = vpow.pop %v608
      %v610 = vmul.f32 %v596, 1.442695
      %v611 = vpow.pop %v610
      %v612 = vmul.f32 %v597, 1.442695
      %v613 = vpow.pop %v612
      %v614 = vadd.f32 %v599, 1.0
      %v615 = vadd.f32 %v601, 1.0
      %v616 = vadd.f32 %v603, 1.0
      %v617 = vadd.f32 %v605, 1.0
      %v618 = vadd.f32 %v607, 1.0
      %v619 = vadd.f32 %v609, 1.0
      %v620 = vadd.f32 %v611, 1.0
      %v621 = vadd.f32 %v613, 1.0
      %v622 = vrcp.pop %v614
      %v623 = vmul.f32 1.0, %v622
      %v624 = vrcp.pop %v615
      %v625 = vmul.f32 1.0, %v624
      %v626 = vrcp.pop %v616
      %v627 = vmul.f32 1.0, %v626
      %v628 = vrcp.pop %v617
      %v629 = vmul.f32 1.0, %v628
      %v630 = vrcp.pop %v618
      %v631 = vmul.f32 1.0, %v630
      %v632 = vrcp.pop %v619
      %v633 = vmul.f32 1.0, %v632
      %v634 = vrcp.pop %v620
      %v635 = vmul.f32 1.0, %v634
      %v636 = vrcp.pop %v621
      %v637 = vmul.f32 1.0, %v636
      %v638 = vmul.f32 %v582, %v623
      %v639 = vmul.f32 %v583, %v625
      %v640 = vmul.f32 %v584, %v627
      %v641 = vmul.f32 %v585, %v629
      %v642 = vmul.f32 %v586, %v631
      %v643 = vmul.f32 %v587, %v633
      %v644 = vmul.f32 %v588, %v635
      %v645 = vmul.f32 %v589, %v637
      %v646 = vpack.c.bf16 %v638, %v638
      %v647 = vpack.c.bf16 %v639, %v639
      %v648 = vpack.c.bf16 %v640, %v640
      %v649 = vpack.c.bf16 %v641, %v641
      %v650 = vpack.c.bf16 %v642, %v642
      %v651 = vpack.c.bf16 %v643, %v643
      %v652 = vpack.c.bf16 %v644, %v644
      %v653 = vpack.c.bf16 %v645, %v645
      %v654 = vld [vmem:[%s502] sm:$0xff]
      %v655 = vmul.f32 %v654, %v566
      %v656 = vadd.f32 %v655, %v580
      %v657 = vxor.u32 %v656, 2147483648
      %v658 = vmul.f32 %v657, 1.442695
      %v659 = vpow.pop %v658
      %v660 = vadd.f32 %v659, 1.0
      %v661 = vrcp.pop %v660
      %v662 = vmul.f32 1.0, %v661
      %v663 = vmul.f32 %v656, %v662
      %v664 = vpack.c.bf16 %v663, %v663
      %v665 = vld [vmem:[%s518] sm:$0xff]
      %v666 = vmul.f32 %v665, %v566
      %v667 = vadd.f32 %v666, %v580
      %v668 = vxor.u32 %v667, 2147483648
      %v669 = vmul.f32 %v668, 1.442695
      %v670 = vpow.pop %v669
      %v671 = vadd.f32 %v670, 1.0
      %v672 = vrcp.pop %v671
      %v673 = vmul.f32 1.0, %v672
      %v674 = vmul.f32 %v667, %v673
      %v675 = vpack.c.bf16 %v674, %v674
      %p676 = scmp.gt.s32.totalorder %s26, 0
      %s677 = scalar_select %p676, 1, 0
      %v678 = vstv %s677
      %vm679 = vcmp.eq.s32.totalorder %v678, 1
      %v680 = vsel %vm679, %v664, 0
      %p681 = scmp.lt.s32.totalorder %s26, 0
      %s682 = scalar_select %p681, 1, 0
      %v683 = vstv %s682
      %vm684 = vcmp.eq.s32.totalorder %v683, 1
      %v685 = vsel %vm684, %v675, 0
      %v687 = vshrl.u32 %v680, 16
      %v689 = vrot.slane %v687, 7
      %v690 = vshll.u32 %v680, 16
      %v692 = vor.u32 %v689, %v690
      %v694 = vshrl.u32 %v646, 16
      %v696 = vrot.slane %v694, 7
      %v697 = vshll.u32 %v646, 16
      %v699 = vor.u32 %v696, %v697
      %v701 = vshrl.u32 %v647, 16
      %v703 = vrot.slane %v701, 7
      %v704 = vshll.u32 %v647, 16
      %v706 = vor.u32 %v703, %v704
      %v708 = vshrl.u32 %v648, 16
      %v710 = vrot.slane %v708, 7
      %v711 = vshll.u32 %v648, 16
      %v713 = vor.u32 %v710, %v711
      %v715 = vshrl.u32 %v649, 16
      %v717 = vrot.slane %v715, 7
      %v718 = vshll.u32 %v649, 16
      %v720 = vor.u32 %v717, %v718
      %v722 = vshrl.u32 %v650, 16
      %v724 = vrot.slane %v722, 7
      %v725 = vshll.u32 %v650, 16
      %v727 = vor.u32 %v724, %v725
      %v729 = vshrl.u32 %v651, 16
      %v731 = vrot.slane %v729, 7
      %v732 = vshll.u32 %v651, 16
      %v734 = vor.u32 %v731, %v732
      %v736 = vshrl.u32 %v652, 16
      %v738 = vrot.slane %v736, 7
      %v739 = vshll.u32 %v652, 16
      %v741 = vor.u32 %v738, %v739
      %v743 = vshrl.u32 %v653, 16
      %v745 = vrot.slane %v743, 7
      %v746 = vshll.u32 %v653, 16
      %v748 = vor.u32 %v745, %v746
      %v750 = vshrl.u32 %v685, 16
      %v752 = vrot.slane %v750, 7
      %v753 = vshll.u32 %v685, 16
      %v755 = vor.u32 %v752, %v753
      %vm766 = vcmask 1040384
      %vm767 = vsmask.f32 256
      %vm768 = vmand %vm766, %vm767
      %v769 = vsel %vm768, 0, %v692
      %v770 = vsel %vm768, 0, %v699
      %v771 = vsel %vm768, 0, %v706
      %v772 = vsel %vm768, 0, %v713
      %v773 = vsel %vm768, 0, %v720
      %v774 = vsel %vm768, 0, %v727
      %v775 = vsel %vm768, 0, %v734
      %v776 = vsel %vm768, 0, %v741
      %v777 = vsel %vm768, 0, %v748
      %v778 = vsel %vm768, 0, %v755
      %vm779 = vcmask 1044480
      %vm780 = vsmask.f32 4352
      %vm781 = vmand %vm779, %vm780
      %v782 = vsel %vm781, %v769, 0
      %v783 = vsel %vm781, %v770, 0
      %v784 = vsel %vm781, %v771, 0
      %v785 = vsel %vm781, %v772, 0
      %v786 = vsel %vm781, %v773, 0
      %v787 = vsel %vm781, %v774, 0
      %v788 = vsel %vm781, %v775, 0
      %v789 = vsel %vm781, %v776, 0
      %v790 = vsel %vm781, %v777, 0
      %v791 = vsel %vm781, %v778, 0
      %v793 = vshrl.u32 %v782, 16
      %v795 = vshll.u32 %v782, 16
      %v797 = vrot.slane %v795, 1
      %v798 = vor.u32 %v793, %v797
      %v800 = vshrl.u32 %v783, 16
      %v802 = vshll.u32 %v783, 16
      %v804 = vrot.slane %v802, 1
      %v805 = vor.u32 %v800, %v804
      %v807 = vshrl.u32 %v784, 16
      %v809 = vshll.u32 %v784, 16
      %v811 = vrot.slane %v809, 1
      %v812 = vor.u32 %v807, %v811
      %v814 = vshrl.u32 %v785, 16
      %v816 = vshll.u32 %v785, 16
      %v818 = vrot.slane %v816, 1
      %v819 = vor.u32 %v814, %v818
      %v821 = vshrl.u32 %v786, 16
      %v823 = vshll.u32 %v786, 16
      %v825 = vrot.slane %v823, 1
      %v826 = vor.u32 %v821, %v825
      %v828 = vshrl.u32 %v787, 16
      %v830 = vshll.u32 %v787, 16
      %v832 = vrot.slane %v830, 1
      %v833 = vor.u32 %v828, %v832
      %v835 = vshrl.u32 %v788, 16
      %v837 = vshll.u32 %v788, 16
      %v839 = vrot.slane %v837, 1
      %v840 = vor.u32 %v835, %v839
      %v842 = vshrl.u32 %v789, 16
      %v844 = vshll.u32 %v789, 16
      %v846 = vrot.slane %v844, 1
      %v847 = vor.u32 %v842, %v846
      %848 = vrot.lane.b32.xlu0 %v798, 64
      %v849 = vpop.permute.xlu0 %848
      %850 = vrot.lane.b32.xlu0 %v805, 64
      %v851 = vpop.permute.xlu0 %850
      %852 = vrot.lane.b32.xlu0 %v812, 64
      %v853 = vpop.permute.xlu0 %852
      %854 = vrot.lane.b32.xlu0 %v819, 64
      %v855 = vpop.permute.xlu0 %854
      %856 = vrot.lane.b32.xlu0 %v826, 64
      %v857 = vpop.permute.xlu0 %856
      %858 = vrot.lane.b32.xlu0 %v833, 64
      %v859 = vpop.permute.xlu0 %858
      %860 = vrot.lane.b32.xlu0 %v840, 64
      %v861 = vpop.permute.xlu0 %860
      %862 = vrot.lane.b32.xlu0 %v847, 64
      %v863 = vpop.permute.xlu0 %862
      %v872 = vrot.slane %v782, 1
      %v873 = vrot.slane %v783, 1
      %v874 = vrot.slane %v784, 1
      %v875 = vrot.slane %v785, 1
      %v876 = vrot.slane %v786, 1
      %v877 = vrot.slane %v787, 1
      %v878 = vrot.slane %v788, 1
      %v879 = vrot.slane %v789, 1
      %vm880 = vcmask 523264
      %v882 = vsel %vm880, %v782, %v849
      %v884 = vsel %vm880, %v783, %v851
      %v886 = vsel %vm880, %v784, %v853
      %v888 = vsel %vm880, %v785, %v855
      %v890 = vsel %vm880, %v786, %v857
      %v892 = vsel %vm880, %v787, %v859
      %v894 = vsel %vm880, %v788, %v861
      %v896 = vsel %vm880, %v789, %v863
      %v905 = vunpack.c.l.b16 %v882
      %v906 = vunpack.c.l.b16 %v872
      %v907 = vunpack.c.l.b16 %v884
      %v908 = vunpack.c.l.b16 %v873
      %v909 = vunpack.c.l.b16 %v886
      %v910 = vunpack.c.l.b16 %v874
      %v911 = vunpack.c.l.b16 %v888
      %v912 = vunpack.c.l.b16 %v875
      %v913 = vunpack.c.l.b16 %v890
      %v914 = vunpack.c.l.b16 %v876
      %v915 = vunpack.c.l.b16 %v892
      %v916 = vunpack.c.l.b16 %v877
      %v917 = vunpack.c.l.b16 %v894
      %v918 = vunpack.c.l.b16 %v878
      %v919 = vunpack.c.l.b16 %v896
      %v920 = vunpack.c.l.b16 %v879
      %v921 = vld [vmem:[%s5] sm:$0xf]
      %v922 = vld [vmem:[%s5 + $0x4] sm:$0xf]
      %v923 = vld [vmem:[%s5 + $0x8] sm:$0xf]
      %v924 = vld [vmem:[%s5 + $0xc] sm:$0xf]
      %v925 = vld [vmem:[%s5 + $0x10] sm:$0xf]
      %v926 = vld [vmem:[%s5 + $0x14] sm:$0xf]
      %v927 = vld [vmem:[%s5 + $0x18] sm:$0xf]
      %v928 = vld [vmem:[%s5 + $0x1c] sm:$0xf]
      %v929 = vld [vmem:[%s5 + $0x20] sm:$0xf]
      %v930 = vld [vmem:[%s5 + $0x24] sm:$0xf]
      %v931 = vld [vmem:[%s5 + $0x28] sm:$0xf]
      %v932 = vld [vmem:[%s5 + $0x2c] sm:$0xf]
      %v933 = vld [vmem:[%s5 + $0x30] sm:$0xf]
      %v934 = vld [vmem:[%s5 + $0x34] sm:$0xf]
      %v935 = vld [vmem:[%s5 + $0x38] sm:$0xf]
      %v936 = vld [vmem:[%s5 + $0x3c] sm:$0xf]
      %v937 = vld [vmem:[%s5 + $0x40] sm:$0xf]
      %v938 = vld [vmem:[%s5 + $0x44] sm:$0xf]
      %v939 = vld [vmem:[%s5 + $0x48] sm:$0xf]
      %v940 = vld [vmem:[%s5 + $0x4c] sm:$0xf]
      %v941 = vld [vmem:[%s5 + $0x50] sm:$0xf]
      %v942 = vld [vmem:[%s5 + $0x54] sm:$0xf]
      %v943 = vld [vmem:[%s5 + $0x58] sm:$0xf]
      %v944 = vld [vmem:[%s5 + $0x5c] sm:$0xf]
      %v946 = vshrl.u32 %v790, 16
      %v948 = vshll.u32 %v790, 16
      %v950 = vrot.slane %v948, 1
      %v951 = vor.u32 %v946, %v950
      %952 = vrot.lane.b32.xlu0 %v951, 64
      %v953 = vpop.permute.xlu0 %952
      %v955 = vrot.slane %v790, 1
      %v957 = vsel %vm880, %v790, %v953
      %v959 = vunpack.c.l.b16 %v957
      %v960 = vunpack.c.l.b16 %v955
      %s961 = scalar_lea.vmem %s5, 96
      %v962 = vld [vmem:[%s961] sm:$0xf]
      %v963 = vld [vmem:[%s961 + $0x4] sm:$0xf]
      %v964 = vld [vmem:[%s961 + $0x8] sm:$0xf]
      %v965 = vld [vmem:[%s961 + $0xc] sm:$0xf]
      %v966 = vld [vmem:[%s961 + $0x10] sm:$0xf]
      %v967 = vld [vmem:[%s961 + $0x14] sm:$0xf]
      %v968 = vld [vmem:[%s961 + $0x18] sm:$0xf]
      %v969 = vld [vmem:[%s961 + $0x1c] sm:$0xf]
      %v970 = vld [vmem:[%s961 + $0x20] sm:$0xf]
      %v971 = vld [vmem:[%s961 + $0x24] sm:$0xf]
      %v972 = vld [vmem:[%s961 + $0x28] sm:$0xf]
      %v973 = vld [vmem:[%s961 + $0x2c] sm:$0xf]
      %v974 = vld [vmem:[%s961 + $0x30] sm:$0xf]
      %v975 = vld [vmem:[%s961 + $0x34] sm:$0xf]
      %v976 = vld [vmem:[%s961 + $0x38] sm:$0xf]
      %v977 = vld [vmem:[%s961 + $0x3c] sm:$0xf]
      %v978 = vld [vmem:[%s961 + $0x40] sm:$0xf]
      %v979 = vld [vmem:[%s961 + $0x44] sm:$0xf]
      %v980 = vld [vmem:[%s961 + $0x48] sm:$0xf]
      %v981 = vld [vmem:[%s961 + $0x4c] sm:$0xf]
      %v982 = vld [vmem:[%s961 + $0x50] sm:$0xf]
      %v983 = vld [vmem:[%s961 + $0x54] sm:$0xf]
      %v984 = vld [vmem:[%s961 + $0x58] sm:$0xf]
      %v985 = vld [vmem:[%s961 + $0x5c] sm:$0xf]
      %v986 = vpack.c.b16 %v909, %v907
      %v987 = vpack.c.b16 %v910, %v908
      %v988 = vpack.c.b16 %v913, %v911
      %v989 = vpack.c.b16 %v914, %v912
      %v990 = vpack.c.b16 %v917, %v915
      %v991 = vpack.c.b16 %v918, %v916
      %v992 = vpack.c.b16 %v959, %v919
      %v993 = vpack.c.b16 %v960, %v920
      %v1022 = vunpack.c.l.b16 %v962
      %v1023 = vunpack.c.l.b16 %v963
      %v1024 = vunpack.c.l.b16 %v964
      %v1025 = vunpack.c.l.b16 %v965
      %v1026 = vunpack.c.l.b16 %v966
      %v1027 = vunpack.c.l.b16 %v967
      %v1028 = vunpack.c.l.b16 %v968
      %v1029 = vunpack.c.l.b16 %v969
      %v1030 = vunpack.c.l.b16 %v970
      %v1031 = vunpack.c.l.b16 %v971
      %v1032 = vunpack.c.l.b16 %v972
      %v1033 = vunpack.c.l.b16 %v973
      %v1034 = vunpack.c.l.b16 %v974
      %v1035 = vunpack.c.l.b16 %v975
      %v1036 = vunpack.c.l.b16 %v976
      %v1037 = vunpack.c.l.b16 %v977
      %v1038 = vunpack.c.l.b16 %v978
      %v1039 = vunpack.c.l.b16 %v979
      %v1040 = vunpack.c.l.b16 %v980
      %v1041 = vunpack.c.l.b16 %v981
      %v1042 = vunpack.c.l.b16 %v982
      %v1043 = vunpack.c.l.b16 %v983
      %v1044 = vunpack.c.l.b16 %v984
      %v1045 = vunpack.c.l.b16 %v985
      %v1046 = vpack.c.b16 %v1023, %v1022
      %v1047 = vpack.c.b16 %v1025, %v1024
      %v1048 = vpack.c.b16 %v1027, %v1026
      %v1049 = vpack.c.b16 %v1029, %v1028
      %v1050 = vpack.c.b16 %v1031, %v1030
      %v1051 = vpack.c.b16 %v1033, %v1032
      %v1052 = vpack.c.b16 %v1035, %v1034
      %v1053 = vpack.c.b16 %v1037, %v1036
      %v1054 = vpack.c.b16 %v1039, %v1038
      %v1055 = vpack.c.b16 %v1041, %v1040
      %v1056 = vpack.c.b16 %v1043, %v1042
      %v1057 = vpack.c.b16 %v1045, %v1044
      %v1071 = vsel %vm880, %v987, 0
      %v1074 = vsel %vm880, %v989, 0
      %v1077 = vsel %vm880, %v991, 0
      %v1080 = vsel %vm880, %v993, 0
      %1082 = vmatprep.subr.bf16.mxu0 0
      %1083 = vmatpush1.bf16.msra.mxu0 %v1053
      %1084 = vmatprep.subr.bf16.mxu0 0
      %1085 = vmatpush1.bf16.msra.mxu0 %v1052
      %1086 = vmatprep.subr.bf16.mxu0 0
      %1087 = vmatpush1.bf16.msra.mxu0 %v1051
      %1088 = vmatprep.subr.bf16.mxu0 0
      %1089 = vmatpush1.bf16.msra.mxu0 %v1050
      %1090 = vmatprep.subr.bf16.mxu0 0
      %1091 = vmatpush1.bf16.msra.mxu0 %v1049
      %1092 = vmatprep.subr.bf16.mxu0 0
      %1093 = vmatpush1.bf16.msra.mxu0 %v1048
      %1094 = vmatprep.subr.bf16.mxu0 0
      %1095 = vmatpush1.bf16.msra.mxu0 %v1047
      %1096 = vmatprep.subr.bf16.mxu0 0
      %1097 = vmatpush1.bf16.msra.mxu0 %v1046
      %1098 = vmatprep.subr.bf16.mxu0 0
      %1099 = vmatpush2.bf16.msra.mxu0 0
      %1100 = vmatprep.subr.bf16.mxu0 0
      %1101 = vmatpush2.bf16.msra.mxu0 0
      %1102 = vmatprep.subr.bf16.mxu0 0
      %1103 = vmatpush2.bf16.msra.mxu0 0
      %1104 = vmatprep.subr.bf16.mxu0 0
      %1105 = vmatpush2.bf16.msra.mxu0 0
      %1106 = vmatprep.subr.bf16.mxu0 0
      %1107 = vmatpush2.bf16.msra.mxu0 %v1057
      %1108 = vmatprep.subr.bf16.mxu0 0
      %1109 = vmatpush2.bf16.msra.mxu0 %v1056
      %1110 = vmatprep.subr.bf16.mxu0 0
      %1111 = vmatpush2.bf16.msra.mxu0 %v1055
      %1112 = vmatprep.subr.bf16.mxu0 0
      %1113 = vmatpush2.bf16.msra.mxu0 %v1054
      %1114 = vmatprep.mubr.bf16.mxu0 %v1071
      %1115 = vmatmul.mubr.bf16.gmra.mxu0 %v986
      %v1116 = vpop.f32.mrf.mxu0
      %v1117 = vadd.f32 0.0, %v1116
      %v1118 = vpop.f32.mrf.mxu0
      %v1119 = vpop.f32.mrf.mxu0
      %v1120 = vadd.f32 0.0, %v1119
      %v1121 = vpop.f32.mrf.mxu0
      %1122 = vmatprep.mubr.bf16.mxu0 %v1074
      %1123 = vmatmul.mubr.bf16.gmra.mxu0 %v988
      %v1124 = vpop.f32.mrf.mxu0
      %v1125 = vadd.f32 0.0, %v1124
      %v1126 = vpop.f32.mrf.mxu0
      %v1127 = vpop.f32.mrf.mxu0
      %v1128 = vadd.f32 0.0, %v1127
      %v1129 = vpop.f32.mrf.mxu0
      %1130 = vmatprep.mubr.bf16.mxu0 %v1077
      %1131 = vmatmul.mubr.bf16.gmra.mxu0 %v990
      %v1132 = vpop.f32.mrf.mxu0
      %v1133 = vadd.f32 0.0, %v1132
      %v1134 = vpop.f32.mrf.mxu0
      %v1135 = vpop.f32.mrf.mxu0
      %v1136 = vadd.f32 0.0, %v1135
      %v1137 = vpop.f32.mrf.mxu0
      %1138 = vmatprep.mubr.bf16.mxu0 %v1080
      %1139 = vmatmul.mubr.bf16.gmra.mxu0 %v992
      %v1140 = vpop.f32.mrf.mxu0
      %v1141 = vadd.f32 0.0, %v1140
      %v1142 = vpop.f32.mrf.mxu0
      %v1143 = vpop.f32.mrf.mxu0
      %v1144 = vadd.f32 0.0, %v1143
      %v1145 = vpop.f32.mrf.mxu0
      %1146 = vdwg.mxu0
      %v1147 = vpack.c.b16 %v907, %v905
      %v1148 = vpack.c.b16 %v908, %v906
      %v1149 = vpack.c.b16 %v911, %v909
      %v1150 = vpack.c.b16 %v912, %v910
      %v1151 = vpack.c.b16 %v915, %v913
      %v1152 = vpack.c.b16 %v916, %v914
      %v1153 = vpack.c.b16 %v919, %v917
      %v1154 = vpack.c.b16 %v920, %v918
      %v1183 = vunpack.c.l.b16 %v921
      %v1184 = vunpack.c.l.b16 %v922
      %v1185 = vunpack.c.l.b16 %v923
      %v1186 = vunpack.c.l.b16 %v924
      %v1187 = vunpack.c.l.b16 %v925
      %v1188 = vunpack.c.l.b16 %v926
      %v1189 = vunpack.c.l.b16 %v927
      %v1190 = vunpack.c.l.b16 %v928
      %v1191 = vunpack.c.l.b16 %v929
      %v1192 = vunpack.c.l.b16 %v930
      %v1193 = vunpack.c.l.b16 %v931
      %v1194 = vunpack.c.l.b16 %v932
      %v1195 = vunpack.c.l.b16 %v933
      %v1196 = vunpack.c.l.b16 %v934
      %v1197 = vunpack.c.l.b16 %v935
      %v1198 = vunpack.c.l.b16 %v936
      %v1199 = vunpack.c.l.b16 %v937
      %v1200 = vunpack.c.l.b16 %v938
      %v1201 = vunpack.c.l.b16 %v939
      %v1202 = vunpack.c.l.b16 %v940
      %v1203 = vunpack.c.l.b16 %v941
      %v1204 = vunpack.c.l.b16 %v942
      %v1205 = vunpack.c.l.b16 %v943
      %v1206 = vunpack.c.l.b16 %v944
      %v1207 = vpack.c.b16 %v1184, %v1183
      %v1208 = vpack.c.b16 %v1186, %v1185
      %v1209 = vpack.c.b16 %v1188, %v1187
      %v1210 = vpack.c.b16 %v1190, %v1189
      %v1211 = vpack.c.b16 %v1192, %v1191
      %v1212 = vpack.c.b16 %v1194, %v1193
      %v1213 = vpack.c.b16 %v1196, %v1195
      %v1214 = vpack.c.b16 %v1198, %v1197
      %v1215 = vpack.c.b16 %v1200, %v1199
      %v1216 = vpack.c.b16 %v1202, %v1201
      %v1217 = vpack.c.b16 %v1204, %v1203
      %v1218 = vpack.c.b16 %v1206, %v1205
      %v1232 = vsel %vm880, %v1148, 0
      %v1235 = vsel %vm880, %v1150, 0
      %v1238 = vsel %vm880, %v1152, 0
      %v1241 = vsel %vm880, %v1154, 0
      %1243 = vmatprep.subr.bf16.mxu0 0
      %1244 = vmatpush1.bf16.msra.mxu0 %v1214
      %1245 = vmatprep.subr.bf16.mxu0 0
      %1246 = vmatpush1.bf16.msra.mxu0 %v1213
      %1247 = vmatprep.subr.bf16.mxu0 0
      %1248 = vmatpush1.bf16.msra.mxu0 %v1212
      %1249 = vmatprep.subr.bf16.mxu0 0
      %1250 = vmatpush1.bf16.msra.mxu0 %v1211
      %1251 = vmatprep.subr.bf16.mxu0 0
      %1252 = vmatpush1.bf16.msra.mxu0 %v1210
      %1253 = vmatprep.subr.bf16.mxu0 0
      %1254 = vmatpush1.bf16.msra.mxu0 %v1209
      %1255 = vmatprep.subr.bf16.mxu0 0
      %1256 = vmatpush1.bf16.msra.mxu0 %v1208
      %1257 = vmatprep.subr.bf16.mxu0 0
      %1258 = vmatpush1.bf16.msra.mxu0 %v1207
      %1259 = vmatprep.subr.bf16.mxu0 0
      %1260 = vmatpush2.bf16.msra.mxu0 0
      %1261 = vmatprep.subr.bf16.mxu0 0
      %1262 = vmatpush2.bf16.msra.mxu0 0
      %1263 = vmatprep.subr.bf16.mxu0 0
      %1264 = vmatpush2.bf16.msra.mxu0 0
      %1265 = vmatprep.subr.bf16.mxu0 0
      %1266 = vmatpush2.bf16.msra.mxu0 0
      %1267 = vmatprep.subr.bf16.mxu0 0
      %1268 = vmatpush2.bf16.msra.mxu0 %v1218
      %1269 = vmatprep.subr.bf16.mxu0 0
      %1270 = vmatpush2.bf16.msra.mxu0 %v1217
      %1271 = vmatprep.subr.bf16.mxu0 0
      %1272 = vmatpush2.bf16.msra.mxu0 %v1216
      %1273 = vmatprep.subr.bf16.mxu0 0
      %1274 = vmatpush2.bf16.msra.mxu0 %v1215
      %1275 = vmatprep.mubr.bf16.mxu0 %v1232
      %1276 = vmatmul.mubr.bf16.gmra.mxu0 %v1147
      %v1277 = vpop.f32.mrf.mxu0
      %v1278 = vadd.f32 %v1117, %v1277
      %v1279 = vpop.f32.mrf.mxu0
      %v1280 = vpop.f32.mrf.mxu0
      %v1281 = vadd.f32 %v1120, %v1280
      %v1282 = vpop.f32.mrf.mxu0
      %1283 = vmatprep.mubr.bf16.mxu0 %v1235
      %1284 = vmatmul.mubr.bf16.gmra.mxu0 %v1149
      %v1285 = vpop.f32.mrf.mxu0
      %v1286 = vadd.f32 %v1125, %v1285
      %v1287 = vpop.f32.mrf.mxu0
      %v1288 = vpop.f32.mrf.mxu0
      %v1289 = vadd.f32 %v1128, %v1288
      %v1290 = vpop.f32.mrf.mxu0
      %1291 = vmatprep.mubr.bf16.mxu0 %v1238
      %1292 = vmatmul.mubr.bf16.gmra.mxu0 %v1151
      %v1293 = vpop.f32.mrf.mxu0
      %v1294 = vadd.f32 %v1133, %v1293
      %v1295 = vpop.f32.mrf.mxu0
      %v1296 = vpop.f32.mrf.mxu0
      %v1297 = vadd.f32 %v1136, %v1296
      %v1298 = vpop.f32.mrf.mxu0
      %1299 = vmatprep.mubr.bf16.mxu0 %v1241
      %1300 = vmatmul.mubr.bf16.gmra.mxu0 %v1153
      %v1301 = vpop.f32.mrf.mxu0
      %v1302 = vadd.f32 %v1141, %v1301
      %v1303 = vpop.f32.mrf.mxu0
      %v1304 = vpop.f32.mrf.mxu0
      %v1305 = vadd.f32 %v1144, %v1304
      %v1306 = vpop.f32.mrf.mxu0
      %1307 = vdwg.mxu0
      %v1309 = vshrl.u32 %v791, 16
      %v1311 = vshll.u32 %v791, 16
      %v1313 = vrot.slane %v1311, 1
      %v1314 = vor.u32 %v1309, %v1313
      %1315 = vrot.lane.b32.xlu0 %v1314, 64
      %v1316 = vpop.permute.xlu0 %1315
      %v1318 = vrot.slane %v791, 1
      %v1320 = vsel %vm880, %v791, %v1316
      %v1322 = vunpack.c.l.b16 %v1320
      %v1323 = vunpack.c.l.b16 %v1318
      %s1324 = scalar_lea.vmem %s5, 192
      %v1325 = vld [vmem:[%s1324] sm:$0xf]
      %v1326 = vld [vmem:[%s1324 + $0x4] sm:$0xf]
      %v1327 = vld [vmem:[%s1324 + $0x8] sm:$0xf]
      %v1328 = vld [vmem:[%s1324 + $0xc] sm:$0xf]
      %v1329 = vld [vmem:[%s1324 + $0x10] sm:$0xf]
      %v1330 = vld [vmem:[%s1324 + $0x14] sm:$0xf]
      %v1331 = vld [vmem:[%s1324 + $0x18] sm:$0xf]
      %v1332 = vld [vmem:[%s1324 + $0x1c] sm:$0xf]
      %v1333 = vld [vmem:[%s1324 + $0x20] sm:$0xf]
      %v1334 = vld [vmem:[%s1324 + $0x24] sm:$0xf]
      %v1335 = vld [vmem:[%s1324 + $0x28] sm:$0xf]
      %v1336 = vld [vmem:[%s1324 + $0x2c] sm:$0xf]
      %v1337 = vld [vmem:[%s1324 + $0x30] sm:$0xf]
      %v1338 = vld [vmem:[%s1324 + $0x34] sm:$0xf]
      %v1339 = vld [vmem:[%s1324 + $0x38] sm:$0xf]
      %v1340 = vld [vmem:[%s1324 + $0x3c] sm:$0xf]
      %v1341 = vld [vmem:[%s1324 + $0x40] sm:$0xf]
      %v1342 = vld [vmem:[%s1324 + $0x44] sm:$0xf]
      %v1343 = vld [vmem:[%s1324 + $0x48] sm:$0xf]
      %v1344 = vld [vmem:[%s1324 + $0x4c] sm:$0xf]
      %v1345 = vld [vmem:[%s1324 + $0x50] sm:$0xf]
      %v1346 = vld [vmem:[%s1324 + $0x54] sm:$0xf]
      %v1347 = vld [vmem:[%s1324 + $0x58] sm:$0xf]
      %v1348 = vld [vmem:[%s1324 + $0x5c] sm:$0xf]
      %v1349 = vpack.c.b16 %v1322, %v959
      %v1350 = vpack.c.b16 %v1323, %v960
      %v1376 = vunpack.c.l.b16 %v1325
      %v1377 = vunpack.c.l.b16 %v1326
      %v1378 = vunpack.c.l.b16 %v1327
      %v1379 = vunpack.c.l.b16 %v1328
      %v1380 = vunpack.c.l.b16 %v1329
      %v1381 = vunpack.c.l.b16 %v1330
      %v1382 = vunpack.c.l.b16 %v1331
      %v1383 = vunpack.c.l.b16 %v1332
      %v1384 = vunpack.c.l.b16 %v1333
      %v1385 = vunpack.c.l.b16 %v1334
      %v1386 = vunpack.c.l.b16 %v1335
      %v1387 = vunpack.c.l.b16 %v1336
      %v1388 = vunpack.c.l.b16 %v1337
      %v1389 = vunpack.c.l.b16 %v1338
      %v1390 = vunpack.c.l.b16 %v1339
      %v1391 = vunpack.c.l.b16 %v1340
      %v1392 = vunpack.c.l.b16 %v1341
      %v1393 = vunpack.c.l.b16 %v1342
      %v1394 = vunpack.c.l.b16 %v1343
      %v1395 = vunpack.c.l.b16 %v1344
      %v1396 = vunpack.c.l.b16 %v1345
      %v1397 = vunpack.c.l.b16 %v1346
      %v1398 = vunpack.c.l.b16 %v1347
      %v1399 = vunpack.c.l.b16 %v1348
      %v1400 = vpack.c.b16 %v1377, %v1376
      %v1401 = vpack.c.b16 %v1379, %v1378
      %v1402 = vpack.c.b16 %v1381, %v1380
      %v1403 = vpack.c.b16 %v1383, %v1382
      %v1404 = vpack.c.b16 %v1385, %v1384
      %v1405 = vpack.c.b16 %v1387, %v1386
      %v1406 = vpack.c.b16 %v1389, %v1388
      %v1407 = vpack.c.b16 %v1391, %v1390
      %v1408 = vpack.c.b16 %v1393, %v1392
      %v1409 = vpack.c.b16 %v1395, %v1394
      %v1410 = vpack.c.b16 %v1397, %v1396
      %v1411 = vpack.c.b16 %v1399, %v1398
      %v1425 = vsel %vm880, %v1350, 0
      %1427 = vmatprep.subr.bf16.mxu0 0
      %1428 = vmatpush1.bf16.msra.mxu0 %v1407
      %1429 = vmatprep.subr.bf16.mxu0 0
      %1430 = vmatpush1.bf16.msra.mxu0 %v1406
      %1431 = vmatprep.subr.bf16.mxu0 0
      %1432 = vmatpush1.bf16.msra.mxu0 %v1405
      %1433 = vmatprep.subr.bf16.mxu0 0
      %1434 = vmatpush1.bf16.msra.mxu0 %v1404
      %1435 = vmatprep.subr.bf16.mxu0 0
      %1436 = vmatpush1.bf16.msra.mxu0 %v1403
      %1437 = vmatprep.subr.bf16.mxu0 0
      %1438 = vmatpush1.bf16.msra.mxu0 %v1402
      %1439 = vmatprep.subr.bf16.mxu0 0
      %1440 = vmatpush1.bf16.msra.mxu0 %v1401
      %1441 = vmatprep.subr.bf16.mxu0 0
      %1442 = vmatpush1.bf16.msra.mxu0 %v1400
      %1443 = vmatprep.subr.bf16.mxu0 0
      %1444 = vmatpush2.bf16.msra.mxu0 0
      %1445 = vmatprep.subr.bf16.mxu0 0
      %1446 = vmatpush2.bf16.msra.mxu0 0
      %1447 = vmatprep.subr.bf16.mxu0 0
      %1448 = vmatpush2.bf16.msra.mxu0 0
      %1449 = vmatprep.subr.bf16.mxu0 0
      %1450 = vmatpush2.bf16.msra.mxu0 0
      %1451 = vmatprep.subr.bf16.mxu0 0
      %1452 = vmatpush2.bf16.msra.mxu0 %v1411
      %1453 = vmatprep.subr.bf16.mxu0 0
      %1454 = vmatpush2.bf16.msra.mxu0 %v1410
      %1455 = vmatprep.subr.bf16.mxu0 0
      %1456 = vmatpush2.bf16.msra.mxu0 %v1409
      %1457 = vmatprep.subr.bf16.mxu0 0
      %1458 = vmatpush2.bf16.msra.mxu0 %v1408
      %1459 = vmatprep.mubr.bf16.mxu0 %v1235
      %1460 = vmatmul.mubr.bf16.gmra.mxu0 %v1149
      %v1461 = vpop.f32.mrf.mxu0
      %v1462 = vadd.f32 0.0, %v1461
      %v1463 = vpop.f32.mrf.mxu0
      %v1464 = vpop.f32.mrf.mxu0
      %v1465 = vadd.f32 0.0, %v1464
      %v1466 = vpop.f32.mrf.mxu0
      %1467 = vmatprep.mubr.bf16.mxu0 %v1238
      %1468 = vmatmul.mubr.bf16.gmra.mxu0 %v1151
      %v1469 = vpop.f32.mrf.mxu0
      %v1470 = vadd.f32 0.0, %v1469
      %v1471 = vpop.f32.mrf.mxu0
      %v1472 = vpop.f32.mrf.mxu0
      %v1473 = vadd.f32 0.0, %v1472
      %v1474 = vpop.f32.mrf.mxu0
      %1475 = vmatprep.mubr.bf16.mxu0 %v1241
      %1476 = vmatmul.mubr.bf16.gmra.mxu0 %v1153
      %v1477 = vpop.f32.mrf.mxu0
      %v1478 = vadd.f32 0.0, %v1477
      %v1479 = vpop.f32.mrf.mxu0
      %v1480 = vpop.f32.mrf.mxu0
      %v1481 = vadd.f32 0.0, %v1480
      %v1482 = vpop.f32.mrf.mxu0
      %1483 = vmatprep.mubr.bf16.mxu0 %v1425
      %1484 = vmatmul.mubr.bf16.gmra.mxu0 %v1349
      %v1485 = vpop.f32.mrf.mxu0
      %v1486 = vadd.f32 0.0, %v1485
      %v1487 = vpop.f32.mrf.mxu0
      %v1488 = vpop.f32.mrf.mxu0
      %v1489 = vadd.f32 0.0, %v1488
      %v1490 = vpop.f32.mrf.mxu0
      %1491 = vdwg.mxu0
      %v1492 = vadd.f32 %v1278, %v1462
      %v1493 = vadd.f32 %v1281, %v1465
      %v1494 = vadd.f32 %v1286, %v1470
      %v1495 = vadd.f32 %v1289, %v1473
      %v1496 = vadd.f32 %v1294, %v1478
      %v1497 = vadd.f32 %v1297, %v1481
      %v1498 = vadd.f32 %v1302, %v1486
      %v1499 = vadd.f32 %v1305, %v1489
      %v1500 = vld [vmem:[%s6] sm:$0x1]
      %v1502 = vlaneseq
      %v1503 = vshrl.u32 %v1502, 7
      %v1504 = vsub.s32 0, %v1503
      %v1505 = vrot.slane %v1500, %v1504
      %v1507 = vadd.f32 %v1492, %v1505
      %v1508 = vadd.f32 %v1493, %v1505
      %v1509 = vadd.f32 %v1494, %v1505
      %v1510 = vadd.f32 %v1495, %v1505
      %v1511 = vadd.f32 %v1496, %v1505
      %v1512 = vadd.f32 %v1497, %v1505
      %v1513 = vadd.f32 %v1498, %v1505
      %v1514 = vadd.f32 %v1499, %v1505
      %vm1515 = vcmask 261120
      %1516 = vst.msk [vmem:[%s537] sm:$0xff] %vm1515, %v1507
      %1517 = vst.msk [vmem:[%s537 + $0x8] sm:$0xff] %vm1515, %v1508
      %1518 = vst.msk [vmem:[%s537 + $0x10] sm:$0xff] %vm1515, %v1509
      %1519 = vst.msk [vmem:[%s537 + $0x18] sm:$0xff] %vm1515, %v1510
      %1520 = vst.msk [vmem:[%s537 + $0x20] sm:$0xff] %vm1515, %v1511
      %1521 = vst.msk [vmem:[%s537 + $0x28] sm:$0xff] %vm1515, %v1512
      %1522 = vst.msk [vmem:[%s537 + $0x30] sm:$0xff] %vm1515, %v1513
      %1523 = vst.msk [vmem:[%s537 + $0x38] sm:$0xff] %vm1515, %v1514
      %v1524 = vsel %vm1515, %v1507, 0.0
      %v1525 = vsel %vm1515, %v1508, 0.0
      %v1526 = vadd.f32 %v1524, %v1525
      %v1527 = vsel %vm1515, %v1509, 0.0
      %v1528 = vadd.f32 %v1526, %v1527
      %v1529 = vsel %vm1515, %v1510, 0.0
      %v1530 = vadd.f32 %v1528, %v1529
      %v1531 = vsel %vm1515, %v1511, 0.0
      %v1532 = vadd.f32 %v1530, %v1531
      %v1533 = vsel %vm1515, %v1512, 0.0
      %v1534 = vadd.f32 %v1532, %v1533
      %v1535 = vsel %vm1515, %v1513, 0.0
      %v1536 = vadd.f32 %v1534, %v1535
      %v1537 = vsel %vm1515, %v1514, 0.0
      %v1538 = vadd.f32 %v1536, %v1537
      %v1539 = vrot.slane %v1538, 4
      %v1540 = vadd.f32 %v1538, %v1539
      %v1541 = vrot.slane %v1540, 2
      %v1542 = vadd.f32 %v1540, %v1541
      %v1543 = vrot.slane %v1542, 1
      %v1544 = vadd.f32 %v1542, %v1543
      %vm1545 = vcmask 253952
      %1546 = vst.msk [vmem:[%s544] sm:$0x1] %vm1545, %v1544
      %v1547 = vmul.f32 %v1507, %v1507
      %v1548 = vmul.f32 %v1508, %v1508
      %v1549 = vmul.f32 %v1509, %v1509
      %v1550 = vmul.f32 %v1510, %v1510
      %v1551 = vmul.f32 %v1511, %v1511
      %v1552 = vmul.f32 %v1512, %v1512
      %v1553 = vmul.f32 %v1513, %v1513
      %v1554 = vmul.f32 %v1514, %v1514
      %v1555 = vsel %vm1515, %v1547, 0.0
      %v1556 = vsel %vm1515, %v1548, 0.0
      %v1557 = vadd.f32 %v1555, %v1556
      %v1558 = vsel %vm1515, %v1549, 0.0
      %v1559 = vadd.f32 %v1557, %v1558
      %v1560 = vsel %vm1515, %v1550, 0.0
      %v1561 = vadd.f32 %v1559, %v1560
      %v1562 = vsel %vm1515, %v1551, 0.0
      %v1563 = vadd.f32 %v1561, %v1562
      %v1564 = vsel %vm1515, %v1552, 0.0
      %v1565 = vadd.f32 %v1563, %v1564
      %v1566 = vsel %vm1515, %v1553, 0.0
      %v1567 = vadd.f32 %v1565, %v1566
      %v1568 = vsel %vm1515, %v1554, 0.0
      %v1569 = vadd.f32 %v1567, %v1568
      %v1570 = vrot.slane %v1569, 4
      %v1571 = vadd.f32 %v1569, %v1570
      %v1572 = vrot.slane %v1571, 2
      %v1573 = vadd.f32 %v1571, %v1572
      %v1574 = vrot.slane %v1573, 1
      %v1575 = vadd.f32 %v1573, %v1574
      %1576 = vst.msk [vmem:[%s550] sm:$0x1] %vm1545, %v1575
      %s1577 = smul.u32 8, %s26
      %p1578 = scmp.lt.s32.totalorder %s25, 1
      %s1579 = scalar_select %p1578, %s25, 1
      %p1580 = scmp.lt.s32.totalorder %s1577, 7
      %s1581 = scalar_select %p1580, %s1577, 7
      %s1582 = smul.addr %s1579, 8
      %s1583 = sadd.s32 %s1581, %s1582
      %s1584 = smul.addr %s1583, 8
      %s1585 = scalar_lea.vmem %s7, %s1584
      %p1586 = scmp.lt.s32.totalorder %s25, 1
      %s1587 = scalar_select %p1586, %s25, 1
      %p1588 = scmp.lt.s32.totalorder %s26, 0
      %s1589 = scalar_select %p1588, %s26, 0
      %s1590 = sadd.s32 %s1589, %s1587
      %s1591 = scalar_lea.vmem %s8, %s1590
      %p1592 = scmp.lt.s32.totalorder %s25, 1
      %s1593 = scalar_select %p1592, %s25, 1
      %p1594 = scmp.lt.s32.totalorder %s26, 0
      %s1595 = scalar_select %p1594, %s26, 0
      %s1596 = sadd.s32 %s1595, %s1593
      %s1597 = scalar_lea.vmem %s9, %s1596
      // Predicated region
      $region49: #{up_decoder_block_2d.5} parent=47 // pred_check
        %p1598 = pneg %p247
      $region50: #{up_decoder_block_2d.5} parent=47 // pred_check_branch
        %1600 = sbr.rel (%p1598) target = $region52
      $region51: #{up_decoder_block_2d.5} parent=47 // pred_region
        %s1601 = smul.u32 8, %s26
      $region52: #{up_decoder_block_2d.5} parent=47 // pred_fallthru
        _
      // Predicated region
      $region53: #{up_decoder_block_2d.5} parent=47 // pred_check
        %p1602 = pneg %p275
      $region54: #{up_decoder_block_2d.5} parent=47 // pred_check_branch
        %1604 = sbr.rel (%p1602) target = $region56
      $region55: #{up_decoder_block_2d.5} parent=47 // pred_region
        _
      $region56: #{up_decoder_block_2d.5} parent=47 // pred_fallthru
        _
      // Predicated region
      $region57: #{up_decoder_block_2d.5} parent=47 // pred_check
        %p1605 = pneg %p303
      $region58: #{up_decoder_block_2d.5} parent=47 // pred_check_branch
        %1607 = sbr.rel (%p1605) target = $region60
      $region59: #{up_decoder_block_2d.5} parent=47 // pred_region
        _
      $region60: #{up_decoder_block_2d.5} parent=47 // pred_fallthru
        _
    $region48: #{up_decoder_block_2d.5} parent=5 // pred_fallthru
      _
    %p1608 = scmp.le.s32.totalorder 2, %s16
    // Predicated region
    $region61: #{up_decoder_block_2d.5} parent=5 // pred_check
      %p1609 = pneg %p1608
    $region62: #{up_decoder_block_2d.5} parent=5 // pred_check_branch
      %1611 = sbr.rel (%p1609) target = $region64
    $region63: #{up_decoder_block_2d.5} parent=5 // pred_region
      %s1612 = ssub.s32 %s16, 2
      // Predicated region
      $region65: #{up_decoder_block_2d.5} parent=63 // pred_check
        %p1613 = pneg %p253
      $region66: #{up_decoder_block_2d.5} parent=63 // pred_check_branch
        %1615 = sbr.rel (%p1613) target = $region68
      $region67: #{up_decoder_block_2d.5} parent=63 // pred_region
        %s1616 = smul.u32 8, %s28
        %p1617 = scmp.lt.s32.totalorder %s27, 1
        %s1618 = scalar_select %p1617, %s27, 1
        %p1619 = scmp.lt.s32.totalorder %s1616, 7
        %s1620 = scalar_select %p1619, %s1616, 7
        %s1621 = smul.addr %s1618, 8
        %s1622 = sadd.s32 %s1620, %s1621
        %s1623 = smul.addr %s1622, 8
        %s1624 = scalar_lea.vmem %s7, %s1623
      $region68: #{up_decoder_block_2d.5} parent=63 // pred_fallthru
        _
      // Predicated region
      $region69: #{up_decoder_block_2d.5} parent=63 // pred_check
        %p1625 = pneg %p281
      $region70: #{up_decoder_block_2d.5} parent=63 // pred_check_branch
        %1627 = sbr.rel (%p1625) target = $region72
      $region71: #{up_decoder_block_2d.5} parent=63 // pred_region
        %p1628 = scmp.lt.s32.totalorder %s27, 1
        %s1629 = scalar_select %p1628, %s27, 1
        %p1630 = scmp.lt.s32.totalorder %s28, 0
        %s1631 = scalar_select %p1630, %s28, 0
        %s1632 = sadd.s32 %s1631, %s1629
        %s1633 = scalar_lea.vmem %s8, %s1632
      $region72: #{up_decoder_block_2d.5} parent=63 // pred_fallthru
        _
      // Predicated region
      $region73: #{up_decoder_block_2d.5} parent=63 // pred_check
        %p1634 = pneg %p309
      $region74: #{up_decoder_block_2d.5} parent=63 // pred_check_branch
        %1636 = sbr.rel (%p1634) target = $region76
      $region75: #{up_decoder_block_2d.5} parent=63 // pred_region
        %p1637 = scmp.lt.s32.totalorder %s27, 1
        %s1638 = scalar_select %p1637, %s27, 1
        %p1639 = scmp.lt.s32.totalorder %s28, 0
        %s1640 = scalar_select %p1639, %s28, 0
        %s1641 = sadd.s32 %s1640, %s1638
        %s1642 = scalar_lea.vmem %s9, %s1641
      $region76: #{up_decoder_block_2d.5} parent=63 // pred_fallthru
        _
    $region64: #{up_decoder_block_2d.5} parent=5 // pred_fallthru
      _
  $region6: #{up_decoder_block_2d.5} parent=0 // loop_footer
    %s20 = sadd.s32 1, %s16
  $region7: #{up_decoder_block_2d.5} parent=0 // loop_footer_branch
    %15 = sbr.rel target = $region3
  $region8: #{up_decoder_block_2d.5} parent=0 // loop_exit
    _

// kernel: up_decoder_block_2d.6
$region0: #{up_decoder_block_2d.6}
  #allocation0 [shape = 'u32[]', space=smem, size = 0x4, offset = 0x4, fixed_abs, tag = 'smem constant byte address 0x4 - core index']
  #allocation1 [shape = 'u32[144,128]{1,0:T(1,128)}', space=vmem, size = 0x12000, scoped, tag = 'internal scratch']
  %s0 = inlined_call_operand.vmem [shape: f32[2,8,8,32], index: 0, kind: input, shape index: {}, may-alias: {0,1,2}]
  %s1 = inlined_call_operand.vmem [shape: f32[2,8,8,32], index: 1, kind: input, shape index: {}, may-alias: {0,1,2}]
  %s2 = inlined_call_operand.vmem [shape: f32[2,8,8,32], index: 2, kind: input, shape index: {}, may-alias: {0,1,2}]
  %s3 = inlined_call_operand.vmem [shape: f32[2,1,32], index: 3, kind: input, shape index: {}]
  %s4 = inlined_call_operand.vmem [shape: f32[2,1,32], index: 4, kind: input, shape index: {}]
  %s5 = inlined_call_operand.vmem [shape: bf16[3,96,32], index: 5, kind: input, shape index: {}]
  %s6 = inlined_call_operand.vmem [shape: f32[1,32], index: 6, kind: input, shape index: {}]
  %s7 = inlined_call_operand.vmem [shape: f32[2,8,8,64], index: 7, kind: input, shape index: {}]
  %s8 = inlined_call_operand.vmem [shape: bf16[64,32], index: 8, kind: input, shape index: {}]
  %s9 = inlined_call_operand.vmem [shape: f32[1,32], index: 9, kind: input, shape index: {}]
  %s10 = inlined_call_operand.vmem [shape: f32[2,8,8,32], index: 10, kind: output, shape index: {}]
  %s11 = sld [smem:[#allocation0]]
  $region73: #{up_decoder_block_2d.6} parent=0
    _
  %s13 = ssub.s32 1, %s11
  %s14 = scalar_select 0, %s13, %s11
  loop: start=0, step=1, limit=4
  $region2: #{up_decoder_block_2d.6} parent=0 // loop_pre_header
    _
  $region3: #{up_decoder_block_2d.6} parent=0 // loop_header
    %s16 = sphi 0, %s20
    %p17 = scmp.ge.s32.totalorder %s16, 4
    %s23 = sphi 0, %s35
    %s24 = sphi 0, %s31
    %s25 = sphi 0, %s23
    %s26 = sphi 0, %s24
    %s27 = sphi 0, %s25
    %s28 = sphi 0, %s26
    %s40 = sphi 0, %s42
    %s43 = sphi 0, %s40
    %s44 = sphi 0, %s43
    %s60 = sphi 0, %s44
    %s76 = sphi 0, %s78
    %s79 = sphi 0, %s76
    %s80 = sphi 0, %s79
    %s96 = sphi 0, %s80
    %s112 = sphi 0, %s114
    %s115 = sphi 0, %s112
    %s116 = sphi 0, %s115
    %s132 = sphi 0, %s116
    %s138 = sphi 0, %s140
    %s141 = sphi 0, %s138
    %s142 = sphi 0, %s141
    %s158 = sphi 0, %s142
    %s164 = sphi 0, %s166
    %s167 = sphi 0, %s164
    %s168 = sphi 0, %s167
    %s184 = sphi 0, %s168
    %s188 = sphi 0, %s188
    %s190 = sphi 0, %s188
    %s191 = sphi 0, %s190
    %s205 = sphi 0, %s191
    %s209 = sphi 0, %s209
    %s211 = sphi 0, %s209
    %s212 = sphi 0, %s211
    %s226 = sphi 0, %s212
    %s234 = sphi 0, %s236
    %s237 = sphi 0, %s234
    %s238 = sphi 0, %s237
    %s254 = sphi 0, %s238
    %s258 = sphi 0, %s258
    %s260 = sphi 0, %s258
    %s261 = sphi 0, %s260
    %s275 = sphi 0, %s261
    %s279 = sphi 0, %s279
    %s281 = sphi 0, %s279
    %s282 = sphi 0, %s281
    %s296 = sphi 0, %s282
    %s304 = sphi 0, %s306
    %s307 = sphi 0, %s304
    %s308 = sphi 0, %s307
    %s324 = sphi 0, %s308
  $region4: #{up_decoder_block_2d.6} parent=0 // loop_header_branch
    %19 = sbr.rel (%p17) target = $region8
  $region5: #{up_decoder_block_2d.6} parent=0 // loop_body
    %s21 = ssub.s32 %s16, 1
    %s22 = ssub.s32 %s16, 2
    %s29 = sadd.s32 1, %s24
    %p30 = scmp.ge.s32.totalorder %s29, 1
    %s31 = scalar_select %p30, 0, %s29
    %s32 = sadd.s32 1, %s23
    %s33 = scalar_select %p30, %s32, %s23
    %p34 = scmp.ge.s32.totalorder %s33, 2
    %s35 = scalar_select %p34, 0, %s33
    %s36 = ssub.s32 %s23, %s35
    %s37 = ssub.s32 %s24, %s31
    %s38 = sor.u32 %s36, %s37
    %p39 = scmp.eq.s32.totalorder %s38, 0
    %s41 = sadd.s32 %s40, 1
    %s42 = scalar_select %p39, %s40, %s41
    %p45 = pneg %p39
    %p46 = scmp.eq.s32.totalorder %s16, 1
    %p47 = por %p45, %p46
    %p48 = scmp.ne.s32.totalorder %s40, %s43
    %p49 = scmp.eq.s32.totalorder %s16, 0
    %p50 = por %p48, %p49
    %p51 = scmp.ne.s32.totalorder %s40, %s43
    %p52 = scmp.eq.s32.totalorder %s21, 1
    %p53 = por %p51, %p52
    %p54 = scmp.ne.s32.totalorder %s43, %s44
    %p55 = scmp.eq.s32.totalorder %s21, 0
    %p56 = por %p54, %p55
    %p57 = scmp.ne.s32.totalorder %s43, %s44
    %p58 = scmp.eq.s32.totalorder %s22, 1
    %p59 = por %p57, %p58
    %p61 = scmp.ne.s32.totalorder %s44, %s60
    %p62 = scmp.eq.s32.totalorder %s22, 0
    %p63 = por %p61, %p62
    %s64 = smul.u32 %s24, 8
    %s65 = ssub.s32 %s64, 1
    %p66 = scmp.gt.s32.totalorder %s65, 0
    %s67 = scalar_select %p66, %s65, 0
    %s68 = smul.u32 %s31, 8
    %s69 = ssub.s32 %s68, 1
    %p70 = scmp.gt.s32.totalorder %s69, 0
    %s71 = scalar_select %p70, %s69, 0
    %s72 = ssub.s32 %s23, %s35
    %s73 = ssub.s32 %s67, %s71
    %s74 = sor.u32 %s72, %s73
    %p75 = scmp.eq.s32.totalorder %s74, 0
    %s77 = sadd.s32 %s76, 1
    %s78 = scalar_select %p75, %s76, %s77
    %p81 = pneg %p75
    %p82 = scmp.eq.s32.totalorder %s16, 1
    %p83 = por %p81, %p82
    %p84 = scmp.ne.s32.totalorder %s76, %s79
    %p85 = scmp.eq.s32.totalorder %s16, 0
    %p86 = por %p84, %p85
    %p87 = scmp.ne.s32.totalorder %s76, %s79
    %p88 = scmp.eq.s32.totalorder %s21, 1
    %p89 = por %p87, %p88
    %p90 = scmp.ne.s32.totalorder %s79, %s80
    %p91 = scmp.eq.s32.totalorder %s21, 0
    %p92 = por %p90, %p91
    %p93 = scmp.ne.s32.totalorder %s79, %s80
    %p94 = scmp.eq.s32.totalorder %s22, 1
    %p95 = por %p93, %p94
    %p97 = scmp.ne.s32.totalorder %s80, %s96
    %p98 = scmp.eq.s32.totalorder %s22, 0
    %p99 = por %p97, %p98
    %s100 = sadd.s32 %s24, 1
    %s101 = smul.u32 %s100, 8
    %p102 = scmp.lt.s32.totalorder %s101, 7
    %s103 = scalar_select %p102, %s101, 7
    %s104 = sadd.s32 %s31, 1
    %s105 = smul.u32 %s104, 8
    %p106 = scmp.lt.s32.totalorder %s105, 7
    %s107 = scalar_select %p106, %s105, 7
    %s108 = ssub.s32 %s23, %s35
    %s109 = ssub.s32 %s103, %s107
    %s110 = sor.u32 %s108, %s109
    %p111 = scmp.eq.s32.totalorder %s110, 0
    %s113 = sadd.s32 %s112, 1
    %s114 = scalar_select %p111, %s112, %s113
    %p117 = pneg %p111
    %p118 = scmp.eq.s32.totalorder %s16, 1
    %p119 = por %p117, %p118
    %p120 = scmp.ne.s32.totalorder %s112, %s115
    %p121 = scmp.eq.s32.totalorder %s16, 0
    %p122 = por %p120, %p121
    %p123 = scmp.ne.s32.totalorder %s112, %s115
    %p124 = scmp.eq.s32.totalorder %s21, 1
    %p125 = por %p123, %p124
    %p126 = scmp.ne.s32.totalorder %s115, %s116
    %p127 = scmp.eq.s32.totalorder %s21, 0
    %p128 = por %p126, %p127
    %p129 = scmp.ne.s32.totalorder %s115, %s116
    %p130 = scmp.eq.s32.totalorder %s22, 1
    %p131 = por %p129, %p130
    %p133 = scmp.ne.s32.totalorder %s116, %s132
    %p134 = scmp.eq.s32.totalorder %s22, 0
    %p135 = por %p133, %p134
    %s136 = ssub.s32 %s23, %s35
    %p137 = scmp.eq.s32.totalorder %s136, 0
    %s139 = sadd.s32 %s138, 1
    %s140 = scalar_select %p137, %s138, %s139
    %p143 = pneg %p137
    %p144 = scmp.eq.s32.totalorder %s16, 1
    %p145 = por %p143, %p144
    %p146 = scmp.ne.s32.totalorder %s138, %s141
    %p147 = scmp.eq.s32.totalorder %s16, 0
    %p148 = por %p146, %p147
    %p149 = scmp.ne.s32.totalorder %s138, %s141
    %p150 = scmp.eq.s32.totalorder %s21, 1
    %p151 = por %p149, %p150
    %p152 = scmp.ne.s32.totalorder %s141, %s142
    %p153 = scmp.eq.s32.totalorder %s21, 0
    %p154 = por %p152, %p153
    %p155 = scmp.ne.s32.totalorder %s141, %s142
    %p156 = scmp.eq.s32.totalorder %s22, 1
    %p157 = por %p155, %p156
    %p159 = scmp.ne.s32.totalorder %s142, %s158
    %p160 = scmp.eq.s32.totalorder %s22, 0
    %p161 = por %p159, %p160
    %s162 = ssub.s32 %s23, %s35
    %p163 = scmp.eq.s32.totalorder %s162, 0
    %s165 = sadd.s32 %s164, 1
    %s166 = scalar_select %p163, %s164, %s165
    %p169 = pneg %p163
    %p170 = scmp.eq.s32.totalorder %s16, 1
    %p171 = por %p169, %p170
    %p172 = scmp.ne.s32.totalorder %s164, %s167
    %p173 = scmp.eq.s32.totalorder %s16, 0
    %p174 = por %p172, %p173
    %p175 = scmp.ne.s32.totalorder %s164, %s167
    %p176 = scmp.eq.s32.totalorder %s21, 1
    %p177 = por %p175, %p176
    %p178 = scmp.ne.s32.totalorder %s167, %s168
    %p179 = scmp.eq.s32.totalorder %s21, 0
    %p180 = por %p178, %p179
    %p181 = scmp.ne.s32.totalorder %s167, %s168
    %p182 = scmp.eq.s32.totalorder %s22, 1
    %p183 = por %p181, %p182
    %p185 = scmp.ne.s32.totalorder %s168, %s184
    %p186 = scmp.eq.s32.totalorder %s22, 0
    %p187 = por %p185, %p186
    %s189 = sadd.s32 %s188, 1
    %p192 = scmp.eq.s32.totalorder %s16, 1
    %p193 = scmp.ne.s32.totalorder %s188, %s190
    %p194 = scmp.eq.s32.totalorder %s16, 0
    %p195 = por %p193, %p194
    %p196 = scmp.ne.s32.totalorder %s188, %s190
    %p197 = scmp.eq.s32.totalorder %s21, 1
    %p198 = por %p196, %p197
    %p199 = scmp.ne.s32.totalorder %s190, %s191
    %p200 = scmp.eq.s32.totalorder %s21, 0
    %p201 = por %p199, %p200
    %p202 = scmp.ne.s32.totalorder %s190, %s191
    %p203 = scmp.eq.s32.totalorder %s22, 1
    %p204 = por %p202, %p203
    %p206 = scmp.ne.s32.totalorder %s191, %s205
    %p207 = scmp.eq.s32.totalorder %s22, 0
    %p208 = por %p206, %p207
    %s210 = sadd.s32 %s209, 1
    %p213 = scmp.eq.s32.totalorder %s16, 1
    %p214 = scmp.ne.s32.totalorder %s209, %s211
    %p215 = scmp.eq.s32.totalorder %s16, 0
    %p216 = por %p214, %p215
    %p217 = scmp.ne.s32.totalorder %s209, %s211
    %p218 = scmp.eq.s32.totalorder %s21, 1
    %p219 = por %p217, %p218
    %p220 = scmp.ne.s32.totalorder %s211, %s212
    %p221 = scmp.eq.s32.totalorder %s21, 0
    %p222 = por %p220, %p221
    %p223 = scmp.ne.s32.totalorder %s211, %s212
    %p224 = scmp.eq.s32.totalorder %s22, 1
    %p225 = por %p223, %p224
    %p227 = scmp.ne.s32.totalorder %s212, %s226
    %p228 = scmp.eq.s32.totalorder %s22, 0
    %p229 = por %p227, %p228
    %s230 = ssub.s32 %s23, %s35
    %s231 = ssub.s32 %s24, %s31
    %s232 = sor.u32 %s230, %s231
    %p233 = scmp.eq.s32.totalorder %s232, 0
    %s235 = sadd.s32 %s234, 1
    %s236 = scalar_select %p233, %s234, %s235
    %p239 = pneg %p233
    %p240 = scmp.eq.s32.totalorder %s16, 1
    %p241 = por %p239, %p240
    %p242 = scmp.ne.s32.totalorder %s234, %s237
    %p243 = scmp.eq.s32.totalorder %s16, 0
    %p244 = por %p242, %p243
    %p245 = scmp.ne.s32.totalorder %s234, %s237
    %p246 = scmp.eq.s32.totalorder %s21, 1
    %p247 = por %p245, %p246
    %p248 = scmp.ne.s32.totalorder %s237, %s238
    %p249 = scmp.eq.s32.totalorder %s21, 0
    %p250 = por %p248, %p249
    %p251 = scmp.ne.s32.totalorder %s237, %s238
    %p252 = scmp.eq.s32.totalorder %s22, 1
    %p253 = por %p251, %p252
    %p255 = scmp.ne.s32.totalorder %s238, %s254
    %p256 = scmp.eq.s32.totalorder %s22, 0
    %p257 = por %p255, %p256
    %s259 = sadd.s32 %s258, 1
    %p262 = scmp.eq.s32.totalorder %s16, 1
    %p263 = scmp.ne.s32.totalorder %s258, %s260
    %p264 = scmp.eq.s32.totalorder %s16, 0
    %p265 = por %p263, %p264
    %p266 = scmp.ne.s32.totalorder %s258, %s260
    %p267 = scmp.eq.s32.totalorder %s21, 1
    %p268 = por %p266, %p267
    %p269 = scmp.ne.s32.totalorder %s260, %s261
    %p270 = scmp.eq.s32.totalorder %s21, 0
    %p271 = por %p269, %p270
    %p272 = scmp.ne.s32.totalorder %s260, %s261
    %p273 = scmp.eq.s32.totalorder %s22, 1
    %p274 = por %p272, %p273
    %p276 = scmp.ne.s32.totalorder %s261, %s275
    %p277 = scmp.eq.s32.totalorder %s22, 0
    %p278 = por %p276, %p277
    %s280 = sadd.s32 %s279, 1
    %p283 = scmp.eq.s32.totalorder %s16, 1
    %p284 = scmp.ne.s32.totalorder %s279, %s281
    %p285 = scmp.eq.s32.totalorder %s16, 0
    %p286 = por %p284, %p285
    %p287 = scmp.ne.s32.totalorder %s279, %s281
    %p288 = scmp.eq.s32.totalorder %s21, 1
    %p289 = por %p287, %p288
    %p290 = scmp.ne.s32.totalorder %s281, %s282
    %p291 = scmp.eq.s32.totalorder %s21, 0
    %p292 = por %p290, %p291
    %p293 = scmp.ne.s32.totalorder %s281, %s282
    %p294 = scmp.eq.s32.totalorder %s22, 1
    %p295 = por %p293, %p294
    %p297 = scmp.ne.s32.totalorder %s282, %s296
    %p298 = scmp.eq.s32.totalorder %s22, 0
    %p299 = por %p297, %p298
    %s300 = ssub.s32 %s23, %s35
    %s301 = ssub.s32 %s24, %s31
    %s302 = sor.u32 %s300, %s301
    %p303 = scmp.eq.s32.totalorder %s302, 0
    %s305 = sadd.s32 %s304, 1
    %s306 = scalar_select %p303, %s304, %s305
    %p309 = pneg %p303
    %p310 = scmp.eq.s32.totalorder %s16, 1
    %p311 = por %p309, %p310
    %p312 = scmp.ne.s32.totalorder %s304, %s307
    %p313 = scmp.eq.s32.totalorder %s16, 0
    %p314 = por %p312, %p313
    %p315 = scmp.ne.s32.totalorder %s304, %s307
    %p316 = scmp.eq.s32.totalorder %s21, 1
    %p317 = por %p315, %p316
    %p318 = scmp.ne.s32.totalorder %s307, %s308
    %p319 = scmp.eq.s32.totalorder %s21, 0
    %p320 = por %p318, %p319
    %p321 = scmp.ne.s32.totalorder %s307, %s308
    %p322 = scmp.eq.s32.totalorder %s22, 1
    %p323 = por %p321, %p322
    %p325 = scmp.ne.s32.totalorder %s308, %s324
    %p326 = scmp.eq.s32.totalorder %s22, 0
    %p327 = por %p325, %p326
    %p328 = scmp.le.s32.totalorder 1, %s16
    %p329 = scmp.lt.s32.totalorder %s16, 3
    %p330 = pnand %p328, %p329
    %p331 = pneg %p330
    // Predicated region
    $region9: #{up_decoder_block_2d.6} parent=5 // pred_check
      _
    $region10: #{up_decoder_block_2d.6} parent=5 // pred_check_branch
      %333 = sbr.rel (%p330) target = $region12
    $region11: #{up_decoder_block_2d.6} parent=5 // pred_region
      %s334 = ssub.s32 %s16, 1
      // Predicated region
      $region13: #{up_decoder_block_2d.6} parent=11 // pred_check
        %p335 = pneg %p201
      $region14: #{up_decoder_block_2d.6} parent=11 // pred_check_branch
        %337 = sbr.rel (%p335) target = $region16
      $region15: #{up_decoder_block_2d.6} parent=11 // pred_region
        _
      $region16: #{up_decoder_block_2d.6} parent=11 // pred_fallthru
        _
      // Predicated region
      $region17: #{up_decoder_block_2d.6} parent=11 // pred_check
        %p338 = pneg %p222
      $region18: #{up_decoder_block_2d.6} parent=11 // pred_check_branch
        %340 = sbr.rel (%p338) target = $region20
      $region19: #{up_decoder_block_2d.6} parent=11 // pred_region
        _
      $region20: #{up_decoder_block_2d.6} parent=11 // pred_fallthru
        _
      // Predicated region
      $region21: #{up_decoder_block_2d.6} parent=11 // pred_check
        %p341 = pneg %p271
      $region22: #{up_decoder_block_2d.6} parent=11 // pred_check_branch
        %343 = sbr.rel (%p341) target = $region24
      $region23: #{up_decoder_block_2d.6} parent=11 // pred_region
        _
      $region24: #{up_decoder_block_2d.6} parent=11 // pred_fallthru
        _
      // Predicated region
      $region25: #{up_decoder_block_2d.6} parent=11 // pred_check
        %p344 = pneg %p292
      $region26: #{up_decoder_block_2d.6} parent=11 // pred_check_branch
        %346 = sbr.rel (%p344) target = $region28
      $region27: #{up_decoder_block_2d.6} parent=11 // pred_region
        _
      $region28: #{up_decoder_block_2d.6} parent=11 // pred_fallthru
        _
    $region12: #{up_decoder_block_2d.6} parent=5 // pred_fallthru
      _
    %p347 = scmp.lt.s32.totalorder %s16, 2
    // Predicated region
    $region29: #{up_decoder_block_2d.6} parent=5 // pred_check
      %p348 = pneg %p347
    $region30: #{up_decoder_block_2d.6} parent=5 // pred_check_branch
      %350 = sbr.rel (%p348) target = $region32
    $region31: #{up_decoder_block_2d.6} parent=5 // pred_region
      // Predicated region
      $region33: #{up_decoder_block_2d.6} parent=31 // pred_check
        %p351 = pneg %p50
      $region34: #{up_decoder_block_2d.6} parent=31 // pred_check_branch
        %353 = sbr.rel (%p351) target = $region36
      $region35: #{up_decoder_block_2d.6} parent=31 // pred_region
        %s354 = smul.u32 8, %s24
        %p355 = scmp.lt.s32.totalorder %s23, 1
        %s356 = scalar_select %p355, %s23, 1
        %p357 = scmp.lt.s32.totalorder %s354, 7
        %s358 = scalar_select %p357, %s354, 7
        %s359 = smul.addr %s356, 8
        %s360 = sadd.s32 %s358, %s359
        %s361 = smul.addr %s360, 8
        %s362 = scalar_lea.vmem %s0, %s361
        %s363 = smul.u32 8, %s24
      $region36: #{up_decoder_block_2d.6} parent=31 // pred_fallthru
        _
      // Predicated region
      $region37: #{up_decoder_block_2d.6} parent=31 // pred_check
        %p364 = pneg %p86
      $region38: #{up_decoder_block_2d.6} parent=31 // pred_check_branch
        %366 = sbr.rel (%p364) target = $region40
      $region39: #{up_decoder_block_2d.6} parent=31 // pred_region
        %s367 = smul.u32 %s24, 8
        %s368 = ssub.s32 %s367, 1
        %p369 = scmp.gt.s32.totalorder %s368, 0
        %s370 = scalar_select %p369, %s368, 0
        %p371 = scmp.lt.s32.totalorder %s23, 1
        %s372 = scalar_select %p371, %s23, 1
        %p373 = scmp.lt.s32.totalorder %s370, 7
        %s374 = scalar_select %p373, %s370, 7
        %s375 = smul.addr %s372, 8
        %s376 = sadd.s32 %s374, %s375
        %s377 = smul.addr %s376, 8
        %s378 = scalar_lea.vmem %s1, %s377
        %s379 = smul.u32 %s24, 8
        %s380 = ssub.s32 %s379, 1
        %p381 = scmp.gt.s32.totalorder %s380, 0
        %s382 = scalar_select %p381, %s380, 0
      $region40: #{up_decoder_block_2d.6} parent=31 // pred_fallthru
        _
      // Predicated region
      $region41: #{up_decoder_block_2d.6} parent=31 // pred_check
        %p383 = pneg %p122
      $region42: #{up_decoder_block_2d.6} parent=31 // pred_check_branch
        %385 = sbr.rel (%p383) target = $region44
      $region43: #{up_decoder_block_2d.6} parent=31 // pred_region
        %s386 = sadd.s32 %s24, 1
        %s387 = smul.u32 %s386, 8
        %p388 = scmp.lt.s32.totalorder %s387, 7
        %s389 = scalar_select %p388, %s387, 7
        %p390 = scmp.lt.s32.totalorder %s23, 1
        %s391 = scalar_select %p390, %s23, 1
        %p392 = scmp.lt.s32.totalorder %s389, 7
        %s393 = scalar_select %p392, %s389, 7
        %s394 = smul.addr %s391, 8
        %s395 = sadd.s32 %s393, %s394
        %s396 = smul.addr %s395, 8
        %s397 = scalar_lea.vmem %s2, %s396
        %s398 = sadd.s32 %s24, 1
        %s399 = smul.u32 %s398, 8
        %p400 = scmp.lt.s32.totalorder %s399, 7
        %s401 = scalar_select %p400, %s399, 7
      $region44: #{up_decoder_block_2d.6} parent=31 // pred_fallthru
        _
      // Predicated region
      $region45: #{up_decoder_block_2d.6} parent=31 // pred_check
        %p402 = pneg %p148
      $region46: #{up_decoder_block_2d.6} parent=31 // pred_check_branch
        %404 = sbr.rel (%p402) target = $region48
      $region47: #{up_decoder_block_2d.6} parent=31 // pred_region
        %p405 = scmp.lt.s32.totalorder %s23, 1
        %s406 = scalar_select %p405, %s23, 1
        %s407 = scalar_lea.vmem %s3, %s406
      $region48: #{up_decoder_block_2d.6} parent=31 // pred_fallthru
        _
      // Predicated region
      $region49: #{up_decoder_block_2d.6} parent=31 // pred_check
        %p408 = pneg %p174
      $region50: #{up_decoder_block_2d.6} parent=31 // pred_check_branch
        %410 = sbr.rel (%p408) target = $region52
      $region51: #{up_decoder_block_2d.6} parent=31 // pred_region
        %p411 = scmp.lt.s32.totalorder %s23, 1
        %s412 = scalar_select %p411, %s23, 1
        %s413 = scalar_lea.vmem %s4, %s412
      $region52: #{up_decoder_block_2d.6} parent=31 // pred_fallthru
        _
      // Predicated region
      $region53: #{up_decoder_block_2d.6} parent=31 // pred_check
        %p414 = pneg %p244
      $region54: #{up_decoder_block_2d.6} parent=31 // pred_check_branch
        %416 = sbr.rel (%p414) target = $region56
      $region55: #{up_decoder_block_2d.6} parent=31 // pred_region
        %s417 = smul.u32 8, %s24
        %p418 = scmp.lt.s32.totalorder %s23, 1
        %s419 = scalar_select %p418, %s23, 1
        %p420 = scmp.lt.s32.totalorder %s417, 7
        %s421 = scalar_select %p420, %s417, 7
        %s422 = smul.addr %s419, 8
        %s423 = sadd.s32 %s421, %s422
        %s424 = smul.addr %s423, 8
        %s425 = scalar_lea.vmem %s7, %s424
        %s426 = smul.u32 8, %s24
      $region56: #{up_decoder_block_2d.6} parent=31 // pred_fallthru
        _
    $region32: #{up_decoder_block_2d.6} parent=5 // pred_fallthru
      _
    %p427 = scmp.le.s32.totalorder 1, %s16
    %p428 = scmp.lt.s32.totalorder %s16, 3
    %p429 = pnand %p427, %p428
    %p430 = pneg %p429
    // Predicated region
    $region57: #{up_decoder_block_2d.6} parent=5 // pred_check
      _
    $region58: #{up_decoder_block_2d.6} parent=5 // pred_check_branch
      %432 = sbr.rel (%p429) target = $region60
    $region59: #{up_decoder_block_2d.6} parent=5 // pred_region
      %s433 = ssub.s32 %s16, 1
      %s434 = smul.u32 8, %s26
      %p435 = scmp.lt.s32.totalorder %s25, 1
      %s436 = scalar_select %p435, %s25, 1
      %p437 = scmp.lt.s32.totalorder %s434, 7
      %s438 = scalar_select %p437, %s434, 7
      %s439 = smul.addr %s436, 8
      %s440 = sadd.s32 %s438, %s439
      %s441 = smul.addr %s440, 8
      %s442 = scalar_lea.vmem %s0, %s441
      %p443 = pneg %p56
      %p444 = pneg %p53
      %s445 = smul.u32 %s26, 8
      %s446 = ssub.s32 %s445, 1
      %p447 = scmp.gt.s32.totalorder %s446, 0
      %s448 = scalar_select %p447, %s446, 0
      %p449 = scmp.lt.s32.totalorder %s25, 1
      %s450 = scalar_select %p449, %s25, 1
      %p451 = scmp.lt.s32.totalorder %s448, 7
      %s452 = scalar_select %p451, %s448, 7
      %s453 = smul.addr %s450, 8
      %s454 = sadd.s32 %s452, %s453
      %s455 = smul.addr %s454, 8
      %s456 = scalar_lea.vmem %s1, %s455
      %p457 = pneg %p92
      %p458 = pneg %p89
      %s459 = sadd.s32 %s26, 1
      %s460 = smul.u32 %s459, 8
      %p461 = scmp.lt.s32.totalorder %s460, 7
      %s462 = scalar_select %p461, %s460, 7
      %p463 = scmp.lt.s32.totalorder %s25, 1
      %s464 = scalar_select %p463, %s25, 1
      %p465 = scmp.lt.s32.totalorder %s462, 7
      %s466 = scalar_select %p465, %s462, 7
      %s467 = smul.addr %s464, 8
      %s468 = sadd.s32 %s466, %s467
      %s469 = smul.addr %s468, 8
      %s470 = scalar_lea.vmem %s2, %s469
      %p471 = pneg %p128
      %p472 = pneg %p125
      %p473 = scmp.lt.s32.totalorder %s25, 1
      %s474 = scalar_select %p473, %s25, 1
      %s475 = scalar_lea.vmem %s3, %s474
      %p476 = pneg %p154
      %p477 = pneg %p151
      %p478 = scmp.lt.s32.totalorder %s25, 1
      %s479 = scalar_select %p478, %s25, 1
      %s480 = scalar_lea.vmem %s4, %s479
      %p481 = pneg %p180
      %p482 = pneg %p177
      %p483 = pneg %p201
      %p484 = pneg %p198
      %p485 = pneg %p222
      %p486 = pneg %p219
      %s487 = smul.u32 8, %s26
      %p488 = scmp.lt.s32.totalorder %s25, 1
      %s489 = scalar_select %p488, %s25, 1
      %p490 = scmp.lt.s32.totalorder %s487, 7
      %s491 = scalar_select %p490, %s487, 7
      %s492 = smul.addr %s489, 8
      %s493 = sadd.s32 %s491, %s492
      %s494 = smul.addr %s493, 8
      %s495 = scalar_lea.vmem %s7, %s494
      %p496 = pneg %p250
      %p497 = pneg %p247
      %p498 = pneg %p271
      %p499 = pneg %p268
      %p500 = pneg %p292
      %p501 = pneg %p289
      %p502 = pneg %p320
      %p503 = pneg %p317
      %s504 = smul.u32 8, %s26
      %p505 = scmp.lt.s32.totalorder %s25, 1
      %s506 = scalar_select %p505, %s25, 1
      %p507 = scmp.lt.s32.totalorder %s504, 7
      %s508 = scalar_select %p507, %s504, 7
      %s509 = smul.addr %s506, 8
      %s510 = sadd.s32 %s508, %s509
      %s511 = smul.addr %s510, 8
      %s512 = scalar_lea.vmem %s10, %s511
      %s513 = smul.u32 8, %s26
      %p514 = scmp.lt.s32.totalorder %s25, 1
      %s515 = scalar_select %p514, %s25, 1
      %p516 = scmp.lt.s32.totalorder %s513, 7
      %s517 = scalar_select %p516, %s513, 7
      %s518 = smul.addr %s515, 8
      %s519 = sadd.s32 %s517, %s518
      %s520 = smul.addr %s519, 8
      %s521 = scalar_lea.vmem %s0, %s520
      %s522 = smul.u32 8, %s26
      %s523 = smul.u32 %s26, 8
      %s524 = ssub.s32 %s523, 1
      %p525 = scmp.gt.s32.totalorder %s524, 0
      %s526 = scalar_select %p525, %s524, 0
      %p527 = scmp.lt.s32.totalorder %s25, 1
      %s528 = scalar_select %p527, %s25, 1
      %p529 = scmp.lt.s32.totalorder %s526, 7
      %s530 = scalar_select %p529, %s526, 7
      %s531 = smul.addr %s528, 8
      %s532 = sadd.s32 %s530, %s531
      %s533 = smul.addr %s532, 8
      %s534 = scalar_lea.vmem %s1, %s533
      %s535 = smul.u32 %s26, 8
      %s536 = ssub.s32 %s535, 1
      %p537 = scmp.gt.s32.totalorder %s536, 0
      %s538 = scalar_select %p537, %s536, 0
      %s539 = sadd.s32 %s26, 1
      %s540 = smul.u32 %s539, 8
      %p541 = scmp.lt.s32.totalorder %s540, 7
      %s542 = scalar_select %p541, %s540, 7
      %p543 = scmp.lt.s32.totalorder %s25, 1
      %s544 = scalar_select %p543, %s25, 1
      %p545 = scmp.lt.s32.totalorder %s542, 7
      %s546 = scalar_select %p545, %s542, 7
      %s547 = smul.addr %s544, 8
      %s548 = sadd.s32 %s546, %s547
      %s549 = smul.addr %s548, 8
      %s550 = scalar_lea.vmem %s2, %s549
      %s551 = sadd.s32 %s26, 1
      %s552 = smul.u32 %s551, 8
      %p553 = scmp.lt.s32.totalorder %s552, 7
      %s554 = scalar_select %p553, %s552, 7
      %p555 = scmp.lt.s32.totalorder %s25, 1
      %s556 = scalar_select %p555, %s25, 1
      %s557 = scalar_lea.vmem %s3, %s556
      %p558 = scmp.lt.s32.totalorder %s25, 1
      %s559 = scalar_select %p558, %s25, 1
      %s560 = scalar_lea.vmem %s4, %s559
      %s561 = smul.u32 8, %s26
      %p562 = scmp.lt.s32.totalorder %s25, 1
      %s563 = scalar_select %p562, %s25, 1
      %p564 = scmp.lt.s32.totalorder %s561, 7
      %s565 = scalar_select %p564, %s561, 7
      %s566 = smul.addr %s563, 8
      %s567 = sadd.s32 %s565, %s566
      %s568 = smul.addr %s567, 8
      %s569 = scalar_lea.vmem %s7, %s568
      %s570 = smul.u32 8, %s26
      %s571 = smul.u32 8, %s26
      %p572 = scmp.lt.s32.totalorder %s25, 1
      %s573 = scalar_select %p572, %s25, 1
      %p574 = scmp.lt.s32.totalorder %s571, 7
      %s575 = scalar_select %p574, %s571, 7
      %s576 = smul.addr %s573, 8
      %s577 = sadd.s32 %s575, %s576
      %s578 = smul.addr %s577, 8
      %s579 = scalar_lea.vmem %s10, %s578
      %s580 = smul.u32 8, %s26
      %v582 = vld [vmem:[%s557] sm:$0x1]
      %v583 = vld [vmem:[%s560] sm:$0x1]
      %v584 = vld [vmem:[%s521] sm:$0xff]
      %v585 = vld [vmem:[%s521 + $0x8] sm:$0xff]
      %v586 = vld [vmem:[%s521 + $0x10] sm:$0xff]
      %v587 = vld [vmem:[%s521 + $0x18] sm:$0xff]
      %v588 = vld [vmem:[%s521 + $0x20] sm:$0xff]
      %v589 = vld [vmem:[%s521 + $0x28] sm:$0xff]
      %v590 = vld [vmem:[%s521 + $0x30] sm:$0xff]
      %v591 = vld [vmem:[%s521 + $0x38] sm:$0xff]
      %v593 = vlaneseq
      %v594 = vshrl.u32 %v593, 7
      %v595 = vsub.s32 0, %v594
      %v596 = vrot.slane %v582, %v595
      %v598 = vmul.f32 %v584, %v596
      %v599 = vmul.f32 %v585, %v596
      %v600 = vmul.f32 %v586, %v596
      %v601 = vmul.f32 %v587, %v596
      %v602 = vmul.f32 %v588, %v596
      %v603 = vmul.f32 %v589, %v596
      %v604 = vmul.f32 %v590, %v596
      %v605 = vmul.f32 %v591, %v596
      %v607 = vlaneseq
      %v608 = vshrl.u32 %v607, 7
      %v609 = vsub.s32 0, %v608
      %v610 = vrot.slane %v583, %v609
      %v612 = vadd.f32 %v598, %v610
      %v613 = vadd.f32 %v599, %v610
      %v614 = vadd.f32 %v600, %v610
      %v615 = vadd.f32 %v601, %v610
      %v616 = vadd.f32 %v602, %v610
      %v617 = vadd.f32 %v603, %v610
      %v618 = vadd.f32 %v604, %v610
      %v619 = vadd.f32 %v605, %v610
      %v620 = vxor.u32 %v612, 2147483648
      %v621 = vxor.u32 %v613, 2147483648
      %v622 = vxor.u32 %v614, 2147483648
      %v623 = vxor.u32 %v615, 2147483648
      %v624 = vxor.u32 %v616, 2147483648
      %v625 = vxor.u32 %v617, 2147483648
      %v626 = vxor.u32 %v618, 2147483648
      %v627 = vxor.u32 %v619, 2147483648
      %v628 = vmul.f32 %v620, 1.442695
      %v629 = vpow.pop %v628
      %v630 = vmul.f32 %v621, 1.442695
      %v631 = vpow.pop %v630
      %v632 = vmul.f32 %v622, 1.442695
      %v633 = vpow.pop %v632
      %v634 = vmul.f32 %v623, 1.442695
      %v635 = vpow.pop %v634
      %v636 = vmul.f32 %v624, 1.442695
      %v637 = vpow.pop %v636
      %v638 = vmul.f32 %v625, 1.442695
      %v639 = vpow.pop %v638
      %v640 = vmul.f32 %v626, 1.442695
      %v641 = vpow.pop %v640
      %v642 = vmul.f32 %v627, 1.442695
      %v643 = vpow.pop %v642
      %v644 = vadd.f32 %v629, 1.0
      %v645 = vadd.f32 %v631, 1.0
      %v646 = vadd.f32 %v633, 1.0
      %v647 = vadd.f32 %v635, 1.0
      %v648 = vadd.f32 %v637, 1.0
      %v649 = vadd.f32 %v639, 1.0
      %v650 = vadd.f32 %v641, 1.0
      %v651 = vadd.f32 %v643, 1.0
      %v652 = vrcp.pop %v644
      %v653 = vmul.f32 1.0, %v652
      %v654 = vrcp.pop %v645
      %v655 = vmul.f32 1.0, %v654
      %v656 = vrcp.pop %v646
      %v657 = vmul.f32 1.0, %v656
      %v658 = vrcp.pop %v647
      %v659 = vmul.f32 1.0, %v658
      %v660 = vrcp.pop %v648
      %v661 = vmul.f32 1.0, %v660
      %v662 = vrcp.pop %v649
      %v663 = vmul.f32 1.0, %v662
      %v664 = vrcp.pop %v650
      %v665 = vmul.f32 1.0, %v664
      %v666 = vrcp.pop %v651
      %v667 = vmul.f32 1.0, %v666
      %v668 = vmul.f32 %v612, %v653
      %v669 = vmul.f32 %v613, %v655
      %v670 = vmul.f32 %v614, %v657
      %v671 = vmul.f32 %v615, %v659
      %v672 = vmul.f32 %v616, %v661
      %v673 = vmul.f32 %v617, %v663
      %v674 = vmul.f32 %v618, %v665
      %v675 = vmul.f32 %v619, %v667
      %v676 = vpack.c.bf16 %v668, %v668
      %v677 = vpack.c.bf16 %v669, %v669
      %v678 = vpack.c.bf16 %v670, %v670
      %v679 = vpack.c.bf16 %v671, %v671
      %v680 = vpack.c.bf16 %v672, %v672
      %v681 = vpack.c.bf16 %v673, %v673
      %v682 = vpack.c.bf16 %v674, %v674
      %v683 = vpack.c.bf16 %v675, %v675
      %v684 = vld [vmem:[%s534] sm:$0xff]
      %v685 = vmul.f32 %v684, %v596
      %v686 = vadd.f32 %v685, %v610
      %v687 = vxor.u32 %v686, 2147483648
      %v688 = vmul.f32 %v687, 1.442695
      %v689 = vpow.pop %v688
      %v690 = vadd.f32 %v689, 1.0
      %v691 = vrcp.pop %v690
      %v692 = vmul.f32 1.0, %v691
      %v693 = vmul.f32 %v686, %v692
      %v694 = vpack.c.bf16 %v693, %v693
      %v695 = vld [vmem:[%s550] sm:$0xff]
      %v696 = vmul.f32 %v695, %v596
      %v697 = vadd.f32 %v696, %v610
      %v698 = vxor.u32 %v697, 2147483648
      %v699 = vmul.f32 %v698, 1.442695
      %v700 = vpow.pop %v699
      %v701 = vadd.f32 %v700, 1.0
      %v702 = vrcp.pop %v701
      %v703 = vmul.f32 1.0, %v702
      %v704 = vmul.f32 %v697, %v703
      %v705 = vpack.c.bf16 %v704, %v704
      %p706 = scmp.gt.s32.totalorder %s26, 0
      %s707 = scalar_select %p706, 1, 0
      %v708 = vstv %s707
      %vm709 = vcmp.eq.s32.totalorder %v708, 1
      %v710 = vsel %vm709, %v694, 0
      %p711 = scmp.lt.s32.totalorder %s26, 0
      %s712 = scalar_select %p711, 1, 0
      %v713 = vstv %s712
      %vm714 = vcmp.eq.s32.totalorder %v713, 1
      %v715 = vsel %vm714, %v705, 0
      %v717 = vshrl.u32 %v710, 16
      %v719 = vrot.slane %v717, 7
      %v720 = vshll.u32 %v710, 16
      %v722 = vor.u32 %v719, %v720
      %v724 = vshrl.u32 %v676, 16
      %v726 = vrot.slane %v724, 7
      %v727 = vshll.u32 %v676, 16
      %v729 = vor.u32 %v726, %v727
      %v731 = vshrl.u32 %v677, 16
      %v733 = vrot.slane %v731, 7
      %v734 = vshll.u32 %v677, 16
      %v736 = vor.u32 %v733, %v734
      %v738 = vshrl.u32 %v678, 16
      %v740 = vrot.slane %v738, 7
      %v741 = vshll.u32 %v678, 16
      %v743 = vor.u32 %v740, %v741
      %v745 = vshrl.u32 %v679, 16
      %v747 = vrot.slane %v745, 7
      %v748 = vshll.u32 %v679, 16
      %v750 = vor.u32 %v747, %v748
      %v752 = vshrl.u32 %v680, 16
      %v754 = vrot.slane %v752, 7
      %v755 = vshll.u32 %v680, 16
      %v757 = vor.u32 %v754, %v755
      %v759 = vshrl.u32 %v681, 16
      %v761 = vrot.slane %v759, 7
      %v762 = vshll.u32 %v681, 16
      %v764 = vor.u32 %v761, %v762
      %v766 = vshrl.u32 %v682, 16
      %v768 = vrot.slane %v766, 7
      %v769 = vshll.u32 %v682, 16
      %v771 = vor.u32 %v768, %v769
      %v773 = vshrl.u32 %v683, 16
      %v775 = vrot.slane %v773, 7
      %v776 = vshll.u32 %v683, 16
      %v778 = vor.u32 %v775, %v776
      %v780 = vshrl.u32 %v715, 16
      %v782 = vrot.slane %v780, 7
      %v783 = vshll.u32 %v715, 16
      %v785 = vor.u32 %v782, %v783
      %vm796 = vcmask 1040384
      %vm797 = vsmask.f32 256
      %vm798 = vmand %vm796, %vm797
      %v799 = vsel %vm798, 0, %v722
      %v800 = vsel %vm798, 0, %v729
      %v801 = vsel %vm798, 0, %v736
      %v802 = vsel %vm798, 0, %v743
      %v803 = vsel %vm798, 0, %v750
      %v804 = vsel %vm798, 0, %v757
      %v805 = vsel %vm798, 0, %v764
      %v806 = vsel %vm798, 0, %v771
      %v807 = vsel %vm798, 0, %v778
      %v808 = vsel %vm798, 0, %v785
      %vm809 = vcmask 1044480
      %vm810 = vsmask.f32 4352
      %vm811 = vmand %vm809, %vm810
      %v812 = vsel %vm811, %v799, 0
      %v813 = vsel %vm811, %v800, 0
      %v814 = vsel %vm811, %v801, 0
      %v815 = vsel %vm811, %v802, 0
      %v816 = vsel %vm811, %v803, 0
      %v817 = vsel %vm811, %v804, 0
      %v818 = vsel %vm811, %v805, 0
      %v819 = vsel %vm811, %v806, 0
      %v820 = vsel %vm811, %v807, 0
      %v821 = vsel %vm811, %v808, 0
      %v823 = vshrl.u32 %v812, 16
      %v825 = vshll.u32 %v812, 16
      %v827 = vrot.slane %v825, 1
      %v828 = vor.u32 %v823, %v827
      %v830 = vshrl.u32 %v813, 16
      %v832 = vshll.u32 %v813, 16
      %v834 = vrot.slane %v832, 1
      %v835 = vor.u32 %v830, %v834
      %v837 = vshrl.u32 %v814, 16
      %v839 = vshll.u32 %v814, 16
      %v841 = vrot.slane %v839, 1
      %v842 = vor.u32 %v837, %v841
      %v844 = vshrl.u32 %v815, 16
      %v846 = vshll.u32 %v815, 16
      %v848 = vrot.slane %v846, 1
      %v849 = vor.u32 %v844, %v848
      %v851 = vshrl.u32 %v816, 16
      %v853 = vshll.u32 %v816, 16
      %v855 = vrot.slane %v853, 1
      %v856 = vor.u32 %v851, %v855
      %v858 = vshrl.u32 %v817, 16
      %v860 = vshll.u32 %v817, 16
      %v862 = vrot.slane %v860, 1
      %v863 = vor.u32 %v858, %v862
      %v865 = vshrl.u32 %v818, 16
      %v867 = vshll.u32 %v818, 16
      %v869 = vrot.slane %v867, 1
      %v870 = vor.u32 %v865, %v869
      %v872 = vshrl.u32 %v819, 16
      %v874 = vshll.u32 %v819, 16
      %v876 = vrot.slane %v874, 1
      %v877 = vor.u32 %v872, %v876
      %878 = vrot.lane.b32.xlu0 %v828, 32
      %v879 = vpop.permute.xlu0 %878
      %880 = vrot.lane.b32.xlu0 %v835, 32
      %v881 = vpop.permute.xlu0 %880
      %882 = vrot.lane.b32.xlu0 %v842, 32
      %v883 = vpop.permute.xlu0 %882
      %884 = vrot.lane.b32.xlu0 %v849, 32
      %v885 = vpop.permute.xlu0 %884
      %886 = vrot.lane.b32.xlu0 %v856, 32
      %v887 = vpop.permute.xlu0 %886
      %888 = vrot.lane.b32.xlu0 %v863, 32
      %v889 = vpop.permute.xlu0 %888
      %890 = vrot.lane.b32.xlu0 %v870, 32
      %v891 = vpop.permute.xlu0 %890
      %892 = vrot.lane.b32.xlu0 %v877, 32
      %v893 = vpop.permute.xlu0 %892
      %v902 = vrot.slane %v812, 1
      %v903 = vrot.slane %v813, 1
      %v904 = vrot.slane %v814, 1
      %v905 = vrot.slane %v815, 1
      %v906 = vrot.slane %v816, 1
      %v907 = vrot.slane %v817, 1
      %v908 = vrot.slane %v818, 1
      %v909 = vrot.slane %v819, 1
      %910 = vrot.lane.b32.xlu0 %v902, 64
      %v911 = vpop.permute.xlu0 %910
      %912 = vrot.lane.b32.xlu0 %v903, 64
      %v913 = vpop.permute.xlu0 %912
      %914 = vrot.lane.b32.xlu0 %v904, 64
      %v915 = vpop.permute.xlu0 %914
      %916 = vrot.lane.b32.xlu0 %v905, 64
      %v917 = vpop.permute.xlu0 %916
      %918 = vrot.lane.b32.xlu0 %v906, 64
      %v919 = vpop.permute.xlu0 %918
      %920 = vrot.lane.b32.xlu0 %v907, 64
      %v921 = vpop.permute.xlu0 %920
      %922 = vrot.lane.b32.xlu0 %v908, 64
      %v923 = vpop.permute.xlu0 %922
      %924 = vrot.lane.b32.xlu0 %v909, 64
      %v925 = vpop.permute.xlu0 %924
      %vm926 = vcmask 261120
      %v928 = vsel %vm926, %v812, %v879
      %v930 = vsel %vm926, %v813, %v881
      %v932 = vsel %vm926, %v814, %v883
      %v934 = vsel %vm926, %v815, %v885
      %v936 = vsel %vm926, %v816, %v887
      %v938 = vsel %vm926, %v817, %v889
      %v940 = vsel %vm926, %v818, %v891
      %v942 = vsel %vm926, %v819, %v893
      %vm943 = vcmask 523264
      %v945 = vsel %vm943, %v928, %v911
      %v947 = vsel %vm943, %v930, %v913
      %v949 = vsel %vm943, %v932, %v915
      %v951 = vsel %vm943, %v934, %v917
      %v953 = vsel %vm943, %v936, %v919
      %v955 = vsel %vm943, %v938, %v921
      %v957 = vsel %vm943, %v940, %v923
      %v959 = vsel %vm943, %v942, %v925
      %v960 = vld [vmem:[%s5] sm:$0xf]
      %v961 = vld [vmem:[%s5 + $0x4] sm:$0xf]
      %v962 = vld [vmem:[%s5 + $0x8] sm:$0xf]
      %v963 = vld [vmem:[%s5 + $0xc] sm:$0xf]
      %v964 = vld [vmem:[%s5 + $0x10] sm:$0xf]
      %v965 = vld [vmem:[%s5 + $0x14] sm:$0xf]
      %v966 = vld [vmem:[%s5 + $0x18] sm:$0xf]
      %v967 = vld [vmem:[%s5 + $0x1c] sm:$0xf]
      %v968 = vld [vmem:[%s5 + $0x20] sm:$0xf]
      %v969 = vld [vmem:[%s5 + $0x24] sm:$0xf]
      %v970 = vld [vmem:[%s5 + $0x28] sm:$0xf]
      %v971 = vld [vmem:[%s5 + $0x2c] sm:$0xf]
      %v973 = vshrl.u32 %v820, 16
      %v975 = vshll.u32 %v820, 16
      %v977 = vrot.slane %v975, 1
      %v978 = vor.u32 %v973, %v977
      %979 = vrot.lane.b32.xlu0 %v978, 32
      %v980 = vpop.permute.xlu0 %979
      %v982 = vrot.slane %v820, 1
      %983 = vrot.lane.b32.xlu0 %v982, 64
      %v984 = vpop.permute.xlu0 %983
      %v986 = vsel %vm926, %v820, %v980
      %v988 = vsel %vm943, %v986, %v984
      %s989 = scalar_lea.vmem %s5, 48
      %v990 = vld [vmem:[%s989] sm:$0xf]
      %v991 = vld [vmem:[%s989 + $0x4] sm:$0xf]
      %v992 = vld [vmem:[%s989 + $0x8] sm:$0xf]
      %v993 = vld [vmem:[%s989 + $0xc] sm:$0xf]
      %v994 = vld [vmem:[%s989 + $0x10] sm:$0xf]
      %v995 = vld [vmem:[%s989 + $0x14] sm:$0xf]
      %v996 = vld [vmem:[%s989 + $0x18] sm:$0xf]
      %v997 = vld [vmem:[%s989 + $0x1c] sm:$0xf]
      %v998 = vld [vmem:[%s989 + $0x20] sm:$0xf]
      %v999 = vld [vmem:[%s989 + $0x24] sm:$0xf]
      %v1000 = vld [vmem:[%s989 + $0x28] sm:$0xf]
      %v1001 = vld [vmem:[%s989 + $0x2c] sm:$0xf]
      %v1010 = vunpack.c.l.b16 %v947
      %v1011 = vunpack.c.l.b16 %v949
      %v1012 = vunpack.c.l.b16 %v951
      %v1013 = vunpack.c.l.b16 %v953
      %v1014 = vunpack.c.l.b16 %v955
      %v1015 = vunpack.c.l.b16 %v957
      %v1016 = vunpack.c.l.b16 %v959
      %v1017 = vunpack.c.l.b16 %v988
      %v1018 = vpack.c.b16 %v1011, %v1010
      %v1019 = vpack.c.b16 %v1013, %v1012
      %v1020 = vpack.c.b16 %v1015, %v1014
      %v1021 = vpack.c.b16 %v1017, %v1016
      %v1034 = vunpack.c.l.b16 %v990
      %v1035 = vunpack.c.l.b16 %v991
      %v1036 = vunpack.c.l.b16 %v992
      %v1037 = vunpack.c.l.b16 %v993
      %v1038 = vunpack.c.l.b16 %v994
      %v1039 = vunpack.c.l.b16 %v995
      %v1040 = vunpack.c.l.b16 %v996
      %v1041 = vunpack.c.l.b16 %v997
      %v1042 = vunpack.c.l.b16 %v998
      %v1043 = vunpack.c.l.b16 %v999
      %v1044 = vunpack.c.l.b16 %v1000
      %v1045 = vunpack.c.l.b16 %v1001
      %v1046 = vpack.c.b16 %v1035, %v1034
      %v1047 = vpack.c.b16 %v1037, %v1036
      %v1048 = vpack.c.b16 %v1039, %v1038
      %v1049 = vpack.c.b16 %v1041, %v1040
      %v1050 = vpack.c.b16 %v1043, %v1042
      %v1051 = vpack.c.b16 %v1045, %v1044
      %vm1058 = vcmask 785408
      %v1060 = vsel %vm1058, %v1018, 0
      %v1063 = vsel %vm1058, %v1019, 0
      %v1066 = vsel %vm1058, %v1020, 0
      %v1069 = vsel %vm1058, %v1021, 0
      %1071 = vmatprep.subr.bf16.mxu0 0
      %1072 = vmatpush1.bf16.msra.mxu0 0
      %1073 = vmatprep.subr.bf16.mxu0 0
      %1074 = vmatpush1.bf16.msra.mxu0 0
      %1075 = vmatprep.subr.bf16.mxu0 0
      %1076 = vmatpush1.bf16.msra.mxu0 %v1051
      %1077 = vmatprep.subr.bf16.mxu0 0
      %1078 = vmatpush1.bf16.msra.mxu0 %v1050
      %1079 = vmatprep.subr.bf16.mxu0 0
      %1080 = vmatpush1.bf16.msra.mxu0 %v1049
      %1081 = vmatprep.subr.bf16.mxu0 0
      %1082 = vmatpush1.bf16.msra.mxu0 %v1048
      %1083 = vmatprep.subr.bf16.mxu0 0
      %1084 = vmatpush1.bf16.msra.mxu0 %v1047
      %1085 = vmatprep.subr.bf16.mxu0 0
      %1086 = vmatpush1.bf16.msra.mxu0 %v1046
      %1087 = vmatprep.subr.bf16.mxu0 0
      %1088 = vmatpush2.bf16.msra.mxu0 0
      %1089 = vmatprep.subr.bf16.mxu0 0
      %1090 = vmatpush2.bf16.msra.mxu0 0
      %1091 = vmatprep.subr.bf16.mxu0 0
      %1092 = vmatpush2.bf16.msra.mxu0 0
      %1093 = vmatprep.subr.bf16.mxu0 0
      %1094 = vmatpush2.bf16.msra.mxu0 0
      %1095 = vmatprep.subr.bf16.mxu0 0
      %1096 = vmatpush2.bf16.msra.mxu0 0
      %1097 = vmatprep.subr.bf16.mxu0 0
      %1098 = vmatpush2.bf16.msra.mxu0 0
      %1099 = vmatprep.subr.bf16.mxu0 0
      %1100 = vmatpush2.bf16.msra.mxu0 0
      %1101 = vmatprep.subr.bf16.mxu0 0
      %1102 = vmatpush2.bf16.msra.mxu0 0
      %1103 = vmatprep.mubr.bf16.mxu0 0
      %1104 = vmatmul.mubr.bf16.gmra.mxu0 %v1060
      %v1105 = vpop.f32.mrf.mxu0
      %v1106 = vadd.f32 0.0, %v1105
      %v1107 = vpop.f32.mrf.mxu0
      %v1108 = vpop.f32.mrf.mxu0
      %v1109 = vadd.f32 0.0, %v1108
      %v1110 = vpop.f32.mrf.mxu0
      %1111 = vmatprep.mubr.bf16.mxu0 0
      %1112 = vmatmul.mubr.bf16.gmra.mxu0 %v1063
      %v1113 = vpop.f32.mrf.mxu0
      %v1114 = vadd.f32 0.0, %v1113
      %v1115 = vpop.f32.mrf.mxu0
      %v1116 = vpop.f32.mrf.mxu0
      %v1117 = vadd.f32 0.0, %v1116
      %v1118 = vpop.f32.mrf.mxu0
      %1119 = vmatprep.mubr.bf16.mxu0 0
      %1120 = vmatmul.mubr.bf16.gmra.mxu0 %v1066
      %v1121 = vpop.f32.mrf.mxu0
      %v1122 = vadd.f32 0.0, %v1121
      %v1123 = vpop.f32.mrf.mxu0
      %v1124 = vpop.f32.mrf.mxu0
      %v1125 = vadd.f32 0.0, %v1124
      %v1126 = vpop.f32.mrf.mxu0
      %1127 = vmatprep.mubr.bf16.mxu0 0
      %1128 = vmatmul.mubr.bf16.gmra.mxu0 %v1069
      %v1129 = vpop.f32.mrf.mxu0
      %v1130 = vadd.f32 0.0, %v1129
      %v1131 = vpop.f32.mrf.mxu0
      %v1132 = vpop.f32.mrf.mxu0
      %v1133 = vadd.f32 0.0, %v1132
      %v1134 = vpop.f32.mrf.mxu0
      %1135 = vdwg.mxu0
      %v1137 = vunpack.c.l.b16 %v945
      %v1138 = vpack.c.b16 %v1010, %v1137
      %v1139 = vpack.c.b16 %v1012, %v1011
      %v1140 = vpack.c.b16 %v1014, %v1013
      %v1141 = vpack.c.b16 %v1016, %v1015
      %v1154 = vunpack.c.l.b16 %v960
      %v1155 = vunpack.c.l.b16 %v961
      %v1156 = vunpack.c.l.b16 %v962
      %v1157 = vunpack.c.l.b16 %v963
      %v1158 = vunpack.c.l.b16 %v964
      %v1159 = vunpack.c.l.b16 %v965
      %v1160 = vunpack.c.l.b16 %v966
      %v1161 = vunpack.c.l.b16 %v967
      %v1162 = vunpack.c.l.b16 %v968
      %v1163 = vunpack.c.l.b16 %v969
      %v1164 = vunpack.c.l.b16 %v970
      %v1165 = vunpack.c.l.b16 %v971
      %v1166 = vpack.c.b16 %v1155, %v1154
      %v1167 = vpack.c.b16 %v1157, %v1156
      %v1168 = vpack.c.b16 %v1159, %v1158
      %v1169 = vpack.c.b16 %v1161, %v1160
      %v1170 = vpack.c.b16 %v1163, %v1162
      %v1171 = vpack.c.b16 %v1165, %v1164
      %v1179 = vsel %vm1058, %v1138, 0
      %v1182 = vsel %vm1058, %v1139, 0
      %v1185 = vsel %vm1058, %v1140, 0
      %v1188 = vsel %vm1058, %v1141, 0
      %1190 = vmatprep.subr.bf16.mxu0 0
      %1191 = vmatpush1.bf16.msra.mxu0 0
      %1192 = vmatprep.subr.bf16.mxu0 0
      %1193 = vmatpush1.bf16.msra.mxu0 0
      %1194 = vmatprep.subr.bf16.mxu0 0
      %1195 = vmatpush1.bf16.msra.mxu0 %v1171
      %1196 = vmatprep.subr.bf16.mxu0 0
      %1197 = vmatpush1.bf16.msra.mxu0 %v1170
      %1198 = vmatprep.subr.bf16.mxu0 0
      %1199 = vmatpush1.bf16.msra.mxu0 %v1169
      %1200 = vmatprep.subr.bf16.mxu0 0
      %1201 = vmatpush1.bf16.msra.mxu0 %v1168
      %1202 = vmatprep.subr.bf16.mxu0 0
      %1203 = vmatpush1.bf16.msra.mxu0 %v1167
      %1204 = vmatprep.subr.bf16.mxu0 0
      %1205 = vmatpush1.bf16.msra.mxu0 %v1166
      %1206 = vmatprep.subr.bf16.mxu0 0
      %1207 = vmatpush2.bf16.msra.mxu0 0
      %1208 = vmatprep.subr.bf16.mxu0 0
      %1209 = vmatpush2.bf16.msra.mxu0 0
      %1210 = vmatprep.subr.bf16.mxu0 0
      %1211 = vmatpush2.bf16.msra.mxu0 0
      %1212 = vmatprep.subr.bf16.mxu0 0
      %1213 = vmatpush2.bf16.msra.mxu0 0
      %1214 = vmatprep.subr.bf16.mxu0 0
      %1215 = vmatpush2.bf16.msra.mxu0 0
      %1216 = vmatprep.subr.bf16.mxu0 0
      %1217 = vmatpush2.bf16.msra.mxu0 0
      %1218 = vmatprep.subr.bf16.mxu0 0
      %1219 = vmatpush2.bf16.msra.mxu0 0
      %1220 = vmatprep.subr.bf16.mxu0 0
      %1221 = vmatpush2.bf16.msra.mxu0 0
      %1222 = vmatprep.mubr.bf16.mxu0 0
      %1223 = vmatmul.mubr.bf16.gmra.mxu0 %v1179
      %v1224 = vpop.f32.mrf.mxu0
      %v1225 = vadd.f32 %v1106, %v1224
      %v1226 = vpop.f32.mrf.mxu0
      %v1227 = vpop.f32.mrf.mxu0
      %v1228 = vadd.f32 %v1109, %v1227
      %v1229 = vpop.f32.mrf.mxu0
      %1230 = vmatprep.mubr.bf16.mxu0 0
      %1231 = vmatmul.mubr.bf16.gmra.mxu0 %v1182
      %v1232 = vpop.f32.mrf.mxu0
      %v1233 = vadd.f32 %v1114, %v1232
      %v1234 = vpop.f32.mrf.mxu0
      %v1235 = vpop.f32.mrf.mxu0
      %v1236 = vadd.f32 %v1117, %v1235
      %v1237 = vpop.f32.mrf.mxu0
      %1238 = vmatprep.mubr.bf16.mxu0 0
      %1239 = vmatmul.mubr.bf16.gmra.mxu0 %v1185
      %v1240 = vpop.f32.mrf.mxu0
      %v1241 = vadd.f32 %v1122, %v1240
      %v1242 = vpop.f32.mrf.mxu0
      %v1243 = vpop.f32.mrf.mxu0
      %v1244 = vadd.f32 %v1125, %v1243
      %v1245 = vpop.f32.mrf.mxu0
      %1246 = vmatprep.mubr.bf16.mxu0 0
      %1247 = vmatmul.mubr.bf16.gmra.mxu0 %v1188
      %v1248 = vpop.f32.mrf.mxu0
      %v1249 = vadd.f32 %v1130, %v1248
      %v1250 = vpop.f32.mrf.mxu0
      %v1251 = vpop.f32.mrf.mxu0
      %v1252 = vadd.f32 %v1133, %v1251
      %v1253 = vpop.f32.mrf.mxu0
      %1254 = vdwg.mxu0
      %v1256 = vshrl.u32 %v821, 16
      %v1258 = vshll.u32 %v821, 16
      %v1260 = vrot.slane %v1258, 1
      %v1261 = vor.u32 %v1256, %v1260
      %1262 = vrot.lane.b32.xlu0 %v1261, 32
      %v1263 = vpop.permute.xlu0 %1262
      %v1265 = vrot.slane %v821, 1
      %1266 = vrot.lane.b32.xlu0 %v1265, 64
      %v1267 = vpop.permute.xlu0 %1266
      %v1269 = vsel %vm926, %v821, %v1263
      %v1271 = vsel %vm943, %v1269, %v1267
      %s1272 = scalar_lea.vmem %s5, 96
      %v1273 = vld [vmem:[%s1272] sm:$0xf]
      %v1274 = vld [vmem:[%s1272 + $0x4] sm:$0xf]
      %v1275 = vld [vmem:[%s1272 + $0x8] sm:$0xf]
      %v1276 = vld [vmem:[%s1272 + $0xc] sm:$0xf]
      %v1277 = vld [vmem:[%s1272 + $0x10] sm:$0xf]
      %v1278 = vld [vmem:[%s1272 + $0x14] sm:$0xf]
      %v1279 = vld [vmem:[%s1272 + $0x18] sm:$0xf]
      %v1280 = vld [vmem:[%s1272 + $0x1c] sm:$0xf]
      %v1281 = vld [vmem:[%s1272 + $0x20] sm:$0xf]
      %v1282 = vld [vmem:[%s1272 + $0x24] sm:$0xf]
      %v1283 = vld [vmem:[%s1272 + $0x28] sm:$0xf]
      %v1284 = vld [vmem:[%s1272 + $0x2c] sm:$0xf]
      %v1286 = vunpack.c.l.b16 %v1271
      %v1287 = vpack.c.b16 %v1286, %v1017
      %v1300 = vunpack.c.l.b16 %v1273
      %v1301 = vunpack.c.l.b16 %v1274
      %v1302 = vunpack.c.l.b16 %v1275
      %v1303 = vunpack.c.l.b16 %v1276
      %v1304 = vunpack.c.l.b16 %v1277
      %v1305 = vunpack.c.l.b16 %v1278
      %v1306 = vunpack.c.l.b16 %v1279
      %v1307 = vunpack.c.l.b16 %v1280
      %v1308 = vunpack.c.l.b16 %v1281
      %v1309 = vunpack.c.l.b16 %v1282
      %v1310 = vunpack.c.l.b16 %v1283
      %v1311 = vunpack.c.l.b16 %v1284
      %v1312 = vpack.c.b16 %v1301, %v1300
      %v1313 = vpack.c.b16 %v1303, %v1302
      %v1314 = vpack.c.b16 %v1305, %v1304
      %v1315 = vpack.c.b16 %v1307, %v1306
      %v1316 = vpack.c.b16 %v1309, %v1308
      %v1317 = vpack.c.b16 %v1311, %v1310
      %v1325 = vsel %vm1058, %v1287, 0
      %1327 = vmatprep.subr.bf16.mxu0 0
      %1328 = vmatpush1.bf16.msra.mxu0 0
      %1329 = vmatprep.subr.bf16.mxu0 0
      %1330 = vmatpush1.bf16.msra.mxu0 0
      %1331 = vmatprep.subr.bf16.mxu0 0
      %1332 = vmatpush1.bf16.msra.mxu0 %v1317
      %1333 = vmatprep.subr.bf16.mxu0 0
      %1334 = vmatpush1.bf16.msra.mxu0 %v1316
      %1335 = vmatprep.subr.bf16.mxu0 0
      %1336 = vmatpush1.bf16.msra.mxu0 %v1315
      %1337 = vmatprep.subr.bf16.mxu0 0
      %1338 = vmatpush1.bf16.msra.mxu0 %v1314
      %1339 = vmatprep.subr.bf16.mxu0 0
      %1340 = vmatpush1.bf16.msra.mxu0 %v1313
      %1341 = vmatprep.subr.bf16.mxu0 0
      %1342 = vmatpush1.bf16.msra.mxu0 %v1312
      %1343 = vmatprep.subr.bf16.mxu0 0
      %1344 = vmatpush2.bf16.msra.mxu0 0
      %1345 = vmatprep.subr.bf16.mxu0 0
      %1346 = vmatpush2.bf16.msra.mxu0 0
      %1347 = vmatprep.subr.bf16.mxu0 0
      %1348 = vmatpush2.bf16.msra.mxu0 0
      %1349 = vmatprep.subr.bf16.mxu0 0
      %1350 = vmatpush2.bf16.msra.mxu0 0
      %1351 = vmatprep.subr.bf16.mxu0 0
      %1352 = vmatpush2.bf16.msra.mxu0 0
      %1353 = vmatprep.subr.bf16.mxu0 0
      %1354 = vmatpush2.bf16.msra.mxu0 0
      %1355 = vmatprep.subr.bf16.mxu0 0
      %1356 = vmatpush2.bf16.msra.mxu0 0
      %1357 = vmatprep.subr.bf16.mxu0 0
      %1358 = vmatpush2.bf16.msra.mxu0 0
      %1359 = vmatprep.mubr.bf16.mxu0 0
      %1360 = vmatmul.mubr.bf16.gmra.mxu0 %v1182
      %v1361 = vpop.f32.mrf.mxu0
      %v1362 = vadd.f32 0.0, %v1361
      %v1363 = vpop.f32.mrf.mxu0
      %v1364 = vpop.f32.mrf.mxu0
      %v1365 = vadd.f32 0.0, %v1364
      %v1366 = vpop.f32.mrf.mxu0
      %1367 = vmatprep.mubr.bf16.mxu0 0
      %1368 = vmatmul.mubr.bf16.gmra.mxu0 %v1185
      %v1369 = vpop.f32.mrf.mxu0
      %v1370 = vadd.f32 0.0, %v1369
      %v1371 = vpop.f32.mrf.mxu0
      %v1372 = vpop.f32.mrf.mxu0
      %v1373 = vadd.f32 0.0, %v1372
      %v1374 = vpop.f32.mrf.mxu0
      %1375 = vmatprep.mubr.bf16.mxu0 0
      %1376 = vmatmul.mubr.bf16.gmra.mxu0 %v1188
      %v1377 = vpop.f32.mrf.mxu0
      %v1378 = vadd.f32 0.0, %v1377
      %v1379 = vpop.f32.mrf.mxu0
      %v1380 = vpop.f32.mrf.mxu0
      %v1381 = vadd.f32 0.0, %v1380
      %v1382 = vpop.f32.mrf.mxu0
      %1383 = vmatprep.mubr.bf16.mxu0 0
      %1384 = vmatmul.mubr.bf16.gmra.mxu0 %v1325
      %v1385 = vpop.f32.mrf.mxu0
      %v1386 = vadd.f32 0.0, %v1385
      %v1387 = vpop.f32.mrf.mxu0
      %v1388 = vpop.f32.mrf.mxu0
      %v1389 = vadd.f32 0.0, %v1388
      %v1390 = vpop.f32.mrf.mxu0
      %1391 = vdwg.mxu0
      %v1392 = vadd.f32 %v1225, %v1362
      %v1393 = vadd.f32 %v1228, %v1365
      %v1394 = vadd.f32 %v1233, %v1370
      %v1395 = vadd.f32 %v1236, %v1373
      %v1396 = vadd.f32 %v1241, %v1378
      %v1397 = vadd.f32 %v1244, %v1381
      %v1398 = vadd.f32 %v1249, %v1386
      %v1399 = vadd.f32 %v1252, %v1389
      %v1400 = vld [vmem:[%s569] sm:$0xff]
      %v1401 = vld [vmem:[%s569 + $0x8] sm:$0xff]
      %v1402 = vld [vmem:[%s569 + $0x10] sm:$0xff]
      %v1403 = vld [vmem:[%s569 + $0x18] sm:$0xff]
      %v1404 = vld [vmem:[%s569 + $0x20] sm:$0xff]
      %v1405 = vld [vmem:[%s569 + $0x28] sm:$0xff]
      %v1406 = vld [vmem:[%s569 + $0x30] sm:$0xff]
      %v1407 = vld [vmem:[%s569 + $0x38] sm:$0xff]
      %v1408 = vpack.c.bf16 %v1400, %v1400
      %v1409 = vpack.c.bf16 %v1401, %v1401
      %v1410 = vpack.c.bf16 %v1402, %v1402
      %v1411 = vpack.c.bf16 %v1403, %v1403
      %v1412 = vpack.c.bf16 %v1404, %v1404
      %v1413 = vpack.c.bf16 %v1405, %v1405
      %v1414 = vpack.c.bf16 %v1406, %v1406
      %v1415 = vpack.c.bf16 %v1407, %v1407
      %v1416 = vld [vmem:[%s8] sm:$0xf]
      %v1417 = vld [vmem:[%s8 + $0x4] sm:$0xf]
      %v1418 = vld [vmem:[%s8 + $0x8] sm:$0xf]
      %v1419 = vld [vmem:[%s8 + $0xc] sm:$0xf]
      %v1420 = vld [vmem:[%s8 + $0x10] sm:$0xf]
      %v1421 = vld [vmem:[%s8 + $0x14] sm:$0xf]
      %v1422 = vld [vmem:[%s8 + $0x18] sm:$0xf]
      %v1423 = vld [vmem:[%s8 + $0x1c] sm:$0xf]
      %v1432 = vunpack.c.l.b16 %v1408
      %v1433 = vunpack.c.l.b16 %v1409
      %v1434 = vunpack.c.l.b16 %v1410
      %v1435 = vunpack.c.l.b16 %v1411
      %v1436 = vunpack.c.l.b16 %v1412
      %v1437 = vunpack.c.l.b16 %v1413
      %v1438 = vunpack.c.l.b16 %v1414
      %v1439 = vunpack.c.l.b16 %v1415
      %v1440 = vpack.c.b16 %v1433, %v1432
      %v1441 = vpack.c.b16 %v1435, %v1434
      %v1442 = vpack.c.b16 %v1437, %v1436
      %v1443 = vpack.c.b16 %v1439, %v1438
      %v1452 = vunpack.c.l.b16 %v1416
      %v1453 = vunpack.c.l.b16 %v1417
      %v1454 = vunpack.c.l.b16 %v1418
      %v1455 = vunpack.c.l.b16 %v1419
      %v1456 = vunpack.c.l.b16 %v1420
      %v1457 = vunpack.c.l.b16 %v1421
      %v1458 = vunpack.c.l.b16 %v1422
      %v1459 = vunpack.c.l.b16 %v1423
      %v1460 = vpack.c.b16 %v1453, %v1452
      %v1461 = vpack.c.b16 %v1455, %v1454
      %v1462 = vpack.c.b16 %v1457, %v1456
      %v1463 = vpack.c.b16 %v1459, %v1458
      %v1469 = vsel %vm943, %v1440, 0
      %v1472 = vsel %vm943, %v1441, 0
      %v1475 = vsel %vm943, %v1442, 0
      %v1478 = vsel %vm943, %v1443, 0
      %1480 = vmatprep.subr.bf16.mxu0 0
      %1481 = vmatpush1.bf16.msra.mxu0 0
      %1482 = vmatprep.subr.bf16.mxu0 0
      %1483 = vmatpush1.bf16.msra.mxu0 0
      %1484 = vmatprep.subr.bf16.mxu0 0
      %1485 = vmatpush1.bf16.msra.mxu0 0
      %1486 = vmatprep.subr.bf16.mxu0 0
      %1487 = vmatpush1.bf16.msra.mxu0 0
      %1488 = vmatprep.subr.bf16.mxu0 0
      %1489 = vmatpush1.bf16.msra.mxu0 %v1463
      %1490 = vmatprep.subr.bf16.mxu0 0
      %1491 = vmatpush1.bf16.msra.mxu0 %v1462
      %1492 = vmatprep.subr.bf16.mxu0 0
      %1493 = vmatpush1.bf16.msra.mxu0 %v1461
      %1494 = vmatprep.subr.bf16.mxu0 0
      %1495 = vmatpush1.bf16.msra.mxu0 %v1460
      %1496 = vmatprep.subr.bf16.mxu0 0
      %1497 = vmatpush2.bf16.msra.mxu0 0
      %1498 = vmatprep.subr.bf16.mxu0 0
      %1499 = vmatpush2.bf16.msra.mxu0 0
      %1500 = vmatprep.subr.bf16.mxu0 0
      %1501 = vmatpush2.bf16.msra.mxu0 0
      %1502 = vmatprep.subr.bf16.mxu0 0
      %1503 = vmatpush2.bf16.msra.mxu0 0
      %1504 = vmatprep.subr.bf16.mxu0 0
      %1505 = vmatpush2.bf16.msra.mxu0 0
      %1506 = vmatprep.subr.bf16.mxu0 0
      %1507 = vmatpush2.bf16.msra.mxu0 0
      %1508 = vmatprep.subr.bf16.mxu0 0
      %1509 = vmatpush2.bf16.msra.mxu0 0
      %1510 = vmatprep.subr.bf16.mxu0 0
      %1511 = vmatpush2.bf16.msra.mxu0 0
      %1512 = vmatprep.mubr.bf16.mxu0 0
      %1513 = vmatmul.mubr.bf16.gmra.mxu0 %v1469
      %v1514 = vpop.f32.mrf.mxu0
      %v1515 = vadd.f32 0.0, %v1514
      %v1516 = vpop.f32.mrf.mxu0
      %v1517 = vpop.f32.mrf.mxu0
      %v1518 = vadd.f32 0.0, %v1517
      %v1519 = vpop.f32.mrf.mxu0
      %1520 = vmatprep.mubr.bf16.mxu0 0
      %1521 = vmatmul.mubr.bf16.gmra.mxu0 %v1472
      %v1522 = vpop.f32.mrf.mxu0
      %v1523 = vadd.f32 0.0, %v1522
      %v1524 = vpop.f32.mrf.mxu0
      %v1525 = vpop.f32.mrf.mxu0
      %v1526 = vadd.f32 0.0, %v1525
      %v1527 = vpop.f32.mrf.mxu0
      %1528 = vmatprep.mubr.bf16.mxu0 0
      %1529 = vmatmul.mubr.bf16.gmra.mxu0 %v1475
      %v1530 = vpop.f32.mrf.mxu0
      %v1531 = vadd.f32 0.0, %v1530
      %v1532 = vpop.f32.mrf.mxu0
      %v1533 = vpop.f32.mrf.mxu0
      %v1534 = vadd.f32 0.0, %v1533
      %v1535 = vpop.f32.mrf.mxu0
      %1536 = vmatprep.mubr.bf16.mxu0 0
      %1537 = vmatmul.mubr.bf16.gmra.mxu0 %v1478
      %v1538 = vpop.f32.mrf.mxu0
      %v1539 = vadd.f32 0.0, %v1538
      %v1540 = vpop.f32.mrf.mxu0
      %v1541 = vpop.f32.mrf.mxu0
      %v1542 = vadd.f32 0.0, %v1541
      %v1543 = vpop.f32.mrf.mxu0
      %1544 = vdwg.mxu0
      %v1545 = vadd.f32 %v1392, %v1515
      %v1546 = vadd.f32 %v1393, %v1518
      %v1547 = vadd.f32 %v1394, %v1523
      %v1548 = vadd.f32 %v1395, %v1526
      %v1549 = vadd.f32 %v1396, %v1531
      %v1550 = vadd.f32 %v1397, %v1534
      %v1551 = vadd.f32 %v1398, %v1539
      %v1552 = vadd.f32 %v1399, %v1542
      %v1553 = vld [vmem:[%s6] sm:$0x1]
      %v1555 = vlaneseq
      %v1556 = vshrl.u32 %v1555, 7
      %v1557 = vsub.s32 0, %v1556
      %v1558 = vrot.slane %v1553, %v1557
      %v1560 = vadd.f32 %v1545, %v1558
      %v1561 = vadd.f32 %v1546, %v1558
      %v1562 = vadd.f32 %v1547, %v1558
      %v1563 = vadd.f32 %v1548, %v1558
      %v1564 = vadd.f32 %v1549, %v1558
      %v1565 = vadd.f32 %v1550, %v1558
      %v1566 = vadd.f32 %v1551, %v1558
      %v1567 = vadd.f32 %v1552, %v1558
      %v1568 = vld [vmem:[%s9] sm:$0x1]
      %v1570 = vlaneseq
      %v1571 = vshrl.u32 %v1570, 7
      %v1572 = vsub.s32 0, %v1571
      %v1573 = vrot.slane %v1568, %v1572
      %v1575 = vadd.f32 %v1560, %v1573
      %v1576 = vadd.f32 %v1561, %v1573
      %v1577 = vadd.f32 %v1562, %v1573
      %v1578 = vadd.f32 %v1563, %v1573
      %v1579 = vadd.f32 %v1564, %v1573
      %v1580 = vadd.f32 %v1565, %v1573
      %v1581 = vadd.f32 %v1566, %v1573
      %v1582 = vadd.f32 %v1567, %v1573
      %1583 = vst.msk [vmem:[%s579] sm:$0xff] %vm926, %v1575
      %1584 = vst.msk [vmem:[%s579 + $0x8] sm:$0xff] %vm926, %v1576
      %1585 = vst.msk [vmem:[%s579 + $0x10] sm:$0xff] %vm926, %v1577
      %1586 = vst.msk [vmem:[%s579 + $0x18] sm:$0xff] %vm926, %v1578
      %1587 = vst.msk [vmem:[%s579 + $0x20] sm:$0xff] %vm926, %v1579
      %1588 = vst.msk [vmem:[%s579 + $0x28] sm:$0xff] %vm926, %v1580
      %1589 = vst.msk [vmem:[%s579 + $0x30] sm:$0xff] %vm926, %v1581
      %1590 = vst.msk [vmem:[%s579 + $0x38] sm:$0xff] %vm926, %v1582
      %s1591 = smul.u32 8, %s26
      %p1592 = scmp.lt.s32.totalorder %s25, 1
      %s1593 = scalar_select %p1592, %s25, 1
      %p1594 = scmp.lt.s32.totalorder %s1591, 7
      %s1595 = scalar_select %p1594, %s1591, 7
      %s1596 = smul.addr %s1593, 8
      %s1597 = sadd.s32 %s1595, %s1596
      %s1598 = smul.addr %s1597, 8
      %s1599 = scalar_lea.vmem %s10, %s1598
      // Predicated region
      $region61: #{up_decoder_block_2d.6} parent=59 // pred_check
        %p1600 = pneg %p317
      $region62: #{up_decoder_block_2d.6} parent=59 // pred_check_branch
        %1602 = sbr.rel (%p1600) target = $region64
      $region63: #{up_decoder_block_2d.6} parent=59 // pred_region
        %s1603 = smul.u32 8, %s26
      $region64: #{up_decoder_block_2d.6} parent=59 // pred_fallthru
        _
    $region60: #{up_decoder_block_2d.6} parent=5 // pred_fallthru
      _
    %p1604 = scmp.le.s32.totalorder 2, %s16
    // Predicated region
    $region65: #{up_decoder_block_2d.6} parent=5 // pred_check
      %p1605 = pneg %p1604
    $region66: #{up_decoder_block_2d.6} parent=5 // pred_check_branch
      %1607 = sbr.rel (%p1605) target = $region68
    $region67: #{up_decoder_block_2d.6} parent=5 // pred_region
      %s1608 = ssub.s32 %s16, 2
      // Predicated region
      $region69: #{up_decoder_block_2d.6} parent=67 // pred_check
        %p1609 = pneg %p323
      $region70: #{up_decoder_block_2d.6} parent=67 // pred_check_branch
        %1611 = sbr.rel (%p1609) target = $region72
      $region71: #{up_decoder_block_2d.6} parent=67 // pred_region
        %s1612 = smul.u32 8, %s28
        %p1613 = scmp.lt.s32.totalorder %s27, 1
        %s1614 = scalar_select %p1613, %s27, 1
        %p1615 = scmp.lt.s32.totalorder %s1612, 7
        %s1616 = scalar_select %p1615, %s1612, 7
        %s1617 = smul.addr %s1614, 8
        %s1618 = sadd.s32 %s1616, %s1617
        %s1619 = smul.addr %s1618, 8
        %s1620 = scalar_lea.vmem %s10, %s1619
      $region72: #{up_decoder_block_2d.6} parent=67 // pred_fallthru
        _
    $region68: #{up_decoder_block_2d.6} parent=5 // pred_fallthru
      _
  $region6: #{up_decoder_block_2d.6} parent=0 // loop_footer
    %s20 = sadd.s32 1, %s16
  $region7: #{up_decoder_block_2d.6} parent=0 // loop_footer_branch
    %15 = sbr.rel target = $region3
  $region8: #{up_decoder_block_2d.6} parent=0 // loop_exit
    _

// kernel: up_decoder_block_2d.7
$region0: #{up_decoder_block_2d.7}
  #allocation0 [shape = 'u32[]', space=smem, size = 0x4, offset = 0x4, fixed_abs, tag = 'smem constant byte address 0x4 - core index']
  #allocation1 [shape = 'u32[144,128]{1,0:T(1,128)}', space=vmem, size = 0x12000, scoped, tag = 'internal scratch']
  %s0 = inlined_call_operand.vmem [shape: f32[2,8,8,32], index: 0, kind: input, shape index: {}, may-alias: {0,1,2}]
  %s1 = inlined_call_operand.vmem [shape: f32[2,8,8,32], index: 1, kind: input, shape index: {}, may-alias: {0,1,2}]
  %s2 = inlined_call_operand.vmem [shape: f32[2,8,8,32], index: 2, kind: input, shape index: {}, may-alias: {0,1,2}]
  %s3 = inlined_call_operand.vmem [shape: bf16[2,2,2,64,32], index: 3, kind: input, shape index: {}]
  %s4 = inlined_call_operand.vmem [shape: f32[1,32], index: 4, kind: input, shape index: {}]
  %s5 = inlined_call_operand.vmem [shape: f32[2,8,2,8,64], index: 5, kind: output, shape index: {}]
  %s6 = sld [smem:[#allocation0]]
  $region53: #{up_decoder_block_2d.7} parent=0
    _
  %s8 = ssub.s32 1, %s6
  %s9 = scalar_select 0, %s8, %s6
  loop: start=0, step=1, limit=4
  $region2: #{up_decoder_block_2d.7} parent=0 // loop_pre_header
    _
  $region3: #{up_decoder_block_2d.7} parent=0 // loop_header
    %s11 = sphi 0, %s15
    %p12 = scmp.ge.s32.totalorder %s11, 4
    %s18 = sphi 0, %s30
    %s19 = sphi 0, %s26
    %s20 = sphi 0, %s18
    %s21 = sphi 0, %s19
    %s22 = sphi 0, %s20
    %s23 = sphi 0, %s21
    %s35 = sphi 0, %s37
    %s38 = sphi 0, %s35
    %s39 = sphi 0, %s38
    %s55 = sphi 0, %s39
    %s71 = sphi 0, %s73
    %s74 = sphi 0, %s71
    %s75 = sphi 0, %s74
    %s91 = sphi 0, %s75
    %s107 = sphi 0, %s109
    %s110 = sphi 0, %s107
    %s111 = sphi 0, %s110
    %s127 = sphi 0, %s111
    %s131 = sphi 0, %s131
    %s133 = sphi 0, %s131
    %s134 = sphi 0, %s133
    %s148 = sphi 0, %s134
    %s152 = sphi 0, %s152
    %s154 = sphi 0, %s152
    %s155 = sphi 0, %s154
    %s169 = sphi 0, %s155
    %s177 = sphi 0, %s179
    %s180 = sphi 0, %s177
    %s181 = sphi 0, %s180
    %s197 = sphi 0, %s181
  $region4: #{up_decoder_block_2d.7} parent=0 // loop_header_branch
    %14 = sbr.rel (%p12) target = $region8
  $region5: #{up_decoder_block_2d.7} parent=0 // loop_body
    %s16 = ssub.s32 %s11, 1
    %s17 = ssub.s32 %s11, 2
    %s24 = sadd.s32 1, %s19
    %p25 = scmp.ge.s32.totalorder %s24, 1
    %s26 = scalar_select %p25, 0, %s24
    %s27 = sadd.s32 1, %s18
    %s28 = scalar_select %p25, %s27, %s18
    %p29 = scmp.ge.s32.totalorder %s28, 2
    %s30 = scalar_select %p29, 0, %s28
    %s31 = ssub.s32 %s18, %s30
    %s32 = ssub.s32 %s19, %s26
    %s33 = sor.u32 %s31, %s32
    %p34 = scmp.eq.s32.totalorder %s33, 0
    %s36 = sadd.s32 %s35, 1
    %s37 = scalar_select %p34, %s35, %s36
    %p40 = pneg %p34
    %p41 = scmp.eq.s32.totalorder %s11, 1
    %p42 = por %p40, %p41
    %p43 = scmp.ne.s32.totalorder %s35, %s38
    %p44 = scmp.eq.s32.totalorder %s11, 0
    %p45 = por %p43, %p44
    %p46 = scmp.ne.s32.totalorder %s35, %s38
    %p47 = scmp.eq.s32.totalorder %s16, 1
    %p48 = por %p46, %p47
    %p49 = scmp.ne.s32.totalorder %s38, %s39
    %p50 = scmp.eq.s32.totalorder %s16, 0
    %p51 = por %p49, %p50
    %p52 = scmp.ne.s32.totalorder %s38, %s39
    %p53 = scmp.eq.s32.totalorder %s17, 1
    %p54 = por %p52, %p53
    %p56 = scmp.ne.s32.totalorder %s39, %s55
    %p57 = scmp.eq.s32.totalorder %s17, 0
    %p58 = por %p56, %p57
    %s59 = smul.u32 %s19, 8
    %s60 = ssub.s32 %s59, 1
    %p61 = scmp.gt.s32.totalorder %s60, 0
    %s62 = scalar_select %p61, %s60, 0
    %s63 = smul.u32 %s26, 8
    %s64 = ssub.s32 %s63, 1
    %p65 = scmp.gt.s32.totalorder %s64, 0
    %s66 = scalar_select %p65, %s64, 0
    %s67 = ssub.s32 %s18, %s30
    %s68 = ssub.s32 %s62, %s66
    %s69 = sor.u32 %s67, %s68
    %p70 = scmp.eq.s32.totalorder %s69, 0
    %s72 = sadd.s32 %s71, 1
    %s73 = scalar_select %p70, %s71, %s72
    %p76 = pneg %p70
    %p77 = scmp.eq.s32.totalorder %s11, 1
    %p78 = por %p76, %p77
    %p79 = scmp.ne.s32.totalorder %s71, %s74
    %p80 = scmp.eq.s32.totalorder %s11, 0
    %p81 = por %p79, %p80
    %p82 = scmp.ne.s32.totalorder %s71, %s74
    %p83 = scmp.eq.s32.totalorder %s16, 1
    %p84 = por %p82, %p83
    %p85 = scmp.ne.s32.totalorder %s74, %s75
    %p86 = scmp.eq.s32.totalorder %s16, 0
    %p87 = por %p85, %p86
    %p88 = scmp.ne.s32.totalorder %s74, %s75
    %p89 = scmp.eq.s32.totalorder %s17, 1
    %p90 = por %p88, %p89
    %p92 = scmp.ne.s32.totalorder %s75, %s91
    %p93 = scmp.eq.s32.totalorder %s17, 0
    %p94 = por %p92, %p93
    %s95 = sadd.s32 %s19, 1
    %s96 = smul.u32 %s95, 8
    %p97 = scmp.lt.s32.totalorder %s96, 7
    %s98 = scalar_select %p97, %s96, 7
    %s99 = sadd.s32 %s26, 1
    %s100 = smul.u32 %s99, 8
    %p101 = scmp.lt.s32.totalorder %s100, 7
    %s102 = scalar_select %p101, %s100, 7
    %s103 = ssub.s32 %s18, %s30
    %s104 = ssub.s32 %s98, %s102
    %s105 = sor.u32 %s103, %s104
    %p106 = scmp.eq.s32.totalorder %s105, 0
    %s108 = sadd.s32 %s107, 1
    %s109 = scalar_select %p106, %s107, %s108
    %p112 = pneg %p106
    %p113 = scmp.eq.s32.totalorder %s11, 1
    %p114 = por %p112, %p113
    %p115 = scmp.ne.s32.totalorder %s107, %s110
    %p116 = scmp.eq.s32.totalorder %s11, 0
    %p117 = por %p115, %p116
    %p118 = scmp.ne.s32.totalorder %s107, %s110
    %p119 = scmp.eq.s32.totalorder %s16, 1
    %p120 = por %p118, %p119
    %p121 = scmp.ne.s32.totalorder %s110, %s111
    %p122 = scmp.eq.s32.totalorder %s16, 0
    %p123 = por %p121, %p122
    %p124 = scmp.ne.s32.totalorder %s110, %s111
    %p125 = scmp.eq.s32.totalorder %s17, 1
    %p126 = por %p124, %p125
    %p128 = scmp.ne.s32.totalorder %s111, %s127
    %p129 = scmp.eq.s32.totalorder %s17, 0
    %p130 = por %p128, %p129
    %s132 = sadd.s32 %s131, 1
    %p135 = scmp.eq.s32.totalorder %s11, 1
    %p136 = scmp.ne.s32.totalorder %s131, %s133
    %p137 = scmp.eq.s32.totalorder %s11, 0
    %p138 = por %p136, %p137
    %p139 = scmp.ne.s32.totalorder %s131, %s133
    %p140 = scmp.eq.s32.totalorder %s16, 1
    %p141 = por %p139, %p140
    %p142 = scmp.ne.s32.totalorder %s133, %s134
    %p143 = scmp.eq.s32.totalorder %s16, 0
    %p144 = por %p142, %p143
    %p145 = scmp.ne.s32.totalorder %s133, %s134
    %p146 = scmp.eq.s32.totalorder %s17, 1
    %p147 = por %p145, %p146
    %p149 = scmp.ne.s32.totalorder %s134, %s148
    %p150 = scmp.eq.s32.totalorder %s17, 0
    %p151 = por %p149, %p150
    %s153 = sadd.s32 %s152, 1
    %p156 = scmp.eq.s32.totalorder %s11, 1
    %p157 = scmp.ne.s32.totalorder %s152, %s154
    %p158 = scmp.eq.s32.totalorder %s11, 0
    %p159 = por %p157, %p158
    %p160 = scmp.ne.s32.totalorder %s152, %s154
    %p161 = scmp.eq.s32.totalorder %s16, 1
    %p162 = por %p160, %p161
    %p163 = scmp.ne.s32.totalorder %s154, %s155
    %p164 = scmp.eq.s32.totalorder %s16, 0
    %p165 = por %p163, %p164
    %p166 = scmp.ne.s32.totalorder %s154, %s155
    %p167 = scmp.eq.s32.totalorder %s17, 1
    %p168 = por %p166, %p167
    %p170 = scmp.ne.s32.totalorder %s155, %s169
    %p171 = scmp.eq.s32.totalorder %s17, 0
    %p172 = por %p170, %p171
    %s173 = ssub.s32 %s18, %s30
    %s174 = ssub.s32 %s19, %s26
    %s175 = sor.u32 %s173, %s174
    %p176 = scmp.eq.s32.totalorder %s175, 0
    %s178 = sadd.s32 %s177, 1
    %s179 = scalar_select %p176, %s177, %s178
    %p182 = pneg %p176
    %p183 = scmp.eq.s32.totalorder %s11, 1
    %p184 = por %p182, %p183
    %p185 = scmp.ne.s32.totalorder %s177, %s180
    %p186 = scmp.eq.s32.totalorder %s11, 0
    %p187 = por %p185, %p186
    %p188 = scmp.ne.s32.totalorder %s177, %s180
    %p189 = scmp.eq.s32.totalorder %s16, 1
    %p190 = por %p188, %p189
    %p191 = scmp.ne.s32.totalorder %s180, %s181
    %p192 = scmp.eq.s32.totalorder %s16, 0
    %p193 = por %p191, %p192
    %p194 = scmp.ne.s32.totalorder %s180, %s181
    %p195 = scmp.eq.s32.totalorder %s17, 1
    %p196 = por %p194, %p195
    %p198 = scmp.ne.s32.totalorder %s181, %s197
    %p199 = scmp.eq.s32.totalorder %s17, 0
    %p200 = por %p198, %p199
    %p201 = scmp.le.s32.totalorder 1, %s11
    %p202 = scmp.lt.s32.totalorder %s11, 3
    %p203 = pnand %p201, %p202
    %p204 = pneg %p203
    // Predicated region
    $region9: #{up_decoder_block_2d.7} parent=5 // pred_check
      _
    $region10: #{up_decoder_block_2d.7} parent=5 // pred_check_branch
      %206 = sbr.rel (%p203) target = $region12
    $region11: #{up_decoder_block_2d.7} parent=5 // pred_region
      %s207 = ssub.s32 %s11, 1
      // Predicated region
      $region13: #{up_decoder_block_2d.7} parent=11 // pred_check
        %p208 = pneg %p144
      $region14: #{up_decoder_block_2d.7} parent=11 // pred_check_branch
        %210 = sbr.rel (%p208) target = $region16
      $region15: #{up_decoder_block_2d.7} parent=11 // pred_region
        _
      $region16: #{up_decoder_block_2d.7} parent=11 // pred_fallthru
        _
      // Predicated region
      $region17: #{up_decoder_block_2d.7} parent=11 // pred_check
        %p211 = pneg %p165
      $region18: #{up_decoder_block_2d.7} parent=11 // pred_check_branch
        %213 = sbr.rel (%p211) target = $region20
      $region19: #{up_decoder_block_2d.7} parent=11 // pred_region
        _
      $region20: #{up_decoder_block_2d.7} parent=11 // pred_fallthru
        _
    $region12: #{up_decoder_block_2d.7} parent=5 // pred_fallthru
      _
    %p214 = scmp.lt.s32.totalorder %s11, 2
    // Predicated region
    $region21: #{up_decoder_block_2d.7} parent=5 // pred_check
      %p215 = pneg %p214
    $region22: #{up_decoder_block_2d.7} parent=5 // pred_check_branch
      %217 = sbr.rel (%p215) target = $region24
    $region23: #{up_decoder_block_2d.7} parent=5 // pred_region
      // Predicated region
      $region25: #{up_decoder_block_2d.7} parent=23 // pred_check
        %p218 = pneg %p45
      $region26: #{up_decoder_block_2d.7} parent=23 // pred_check_branch
        %220 = sbr.rel (%p218) target = $region28
      $region27: #{up_decoder_block_2d.7} parent=23 // pred_region
        %s221 = smul.u32 8, %s19
        %p222 = scmp.lt.s32.totalorder %s18, 1
        %s223 = scalar_select %p222, %s18, 1
        %p224 = scmp.lt.s32.totalorder %s221, 7
        %s225 = scalar_select %p224, %s221, 7
        %s226 = smul.addr %s223, 8
        %s227 = sadd.s32 %s225, %s226
        %s228 = smul.addr %s227, 8
        %s229 = scalar_lea.vmem %s0, %s228
        %s230 = smul.u32 8, %s19
      $region28: #{up_decoder_block_2d.7} parent=23 // pred_fallthru
        _
      // Predicated region
      $region29: #{up_decoder_block_2d.7} parent=23 // pred_check
        %p231 = pneg %p81
      $region30: #{up_decoder_block_2d.7} parent=23 // pred_check_branch
        %233 = sbr.rel (%p231) target = $region32
      $region31: #{up_decoder_block_2d.7} parent=23 // pred_region
        %s234 = smul.u32 %s19, 8
        %s235 = ssub.s32 %s234, 1
        %p236 = scmp.gt.s32.totalorder %s235, 0
        %s237 = scalar_select %p236, %s235, 0
        %p238 = scmp.lt.s32.totalorder %s18, 1
        %s239 = scalar_select %p238, %s18, 1
        %p240 = scmp.lt.s32.totalorder %s237, 7
        %s241 = scalar_select %p240, %s237, 7
        %s242 = smul.addr %s239, 8
        %s243 = sadd.s32 %s241, %s242
        %s244 = smul.addr %s243, 8
        %s245 = scalar_lea.vmem %s1, %s244
        %s246 = smul.u32 %s19, 8
        %s247 = ssub.s32 %s246, 1
        %p248 = scmp.gt.s32.totalorder %s247, 0
        %s249 = scalar_select %p248, %s247, 0
      $region32: #{up_decoder_block_2d.7} parent=23 // pred_fallthru
        _
      // Predicated region
      $region33: #{up_decoder_block_2d.7} parent=23 // pred_check
        %p250 = pneg %p117
      $region34: #{up_decoder_block_2d.7} parent=23 // pred_check_branch
        %252 = sbr.rel (%p250) target = $region36
      $region35: #{up_decoder_block_2d.7} parent=23 // pred_region
        %s253 = sadd.s32 %s19, 1
        %s254 = smul.u32 %s253, 8
        %p255 = scmp.lt.s32.totalorder %s254, 7
        %s256 = scalar_select %p255, %s254, 7
        %p257 = scmp.lt.s32.totalorder %s18, 1
        %s258 = scalar_select %p257, %s18, 1
        %p259 = scmp.lt.s32.totalorder %s256, 7
        %s260 = scalar_select %p259, %s256, 7
        %s261 = smul.addr %s258, 8
        %s262 = sadd.s32 %s260, %s261
        %s263 = smul.addr %s262, 8
        %s264 = scalar_lea.vmem %s2, %s263
        %s265 = sadd.s32 %s19, 1
        %s266 = smul.u32 %s265, 8
        %p267 = scmp.lt.s32.totalorder %s266, 7
        %s268 = scalar_select %p267, %s266, 7
      $region36: #{up_decoder_block_2d.7} parent=23 // pred_fallthru
        _
    $region24: #{up_decoder_block_2d.7} parent=5 // pred_fallthru
      _
    %p269 = scmp.le.s32.totalorder 1, %s11
    %p270 = scmp.lt.s32.totalorder %s11, 3
    %p271 = pnand %p269, %p270
    %p272 = pneg %p271
    // Predicated region
    $region37: #{up_decoder_block_2d.7} parent=5 // pred_check
      _
    $region38: #{up_decoder_block_2d.7} parent=5 // pred_check_branch
      %274 = sbr.rel (%p271) target = $region40
    $region39: #{up_decoder_block_2d.7} parent=5 // pred_region
      %s275 = ssub.s32 %s11, 1
      %s276 = smul.u32 8, %s21
      %p277 = scmp.lt.s32.totalorder %s20, 1
      %s278 = scalar_select %p277, %s20, 1
      %p279 = scmp.lt.s32.totalorder %s276, 7
      %s280 = scalar_select %p279, %s276, 7
      %s281 = smul.addr %s278, 8
      %s282 = sadd.s32 %s280, %s281
      %s283 = smul.addr %s282, 8
      %s284 = scalar_lea.vmem %s0, %s283
      %p285 = pneg %p51
      %p286 = pneg %p48
      %s287 = smul.u32 %s21, 8
      %s288 = ssub.s32 %s287, 1
      %p289 = scmp.gt.s32.totalorder %s288, 0
      %s290 = scalar_select %p289, %s288, 0
      %p291 = scmp.lt.s32.totalorder %s20, 1
      %s292 = scalar_select %p291, %s20, 1
      %p293 = scmp.lt.s32.totalorder %s290, 7
      %s294 = scalar_select %p293, %s290, 7
      %s295 = smul.addr %s292, 8
      %s296 = sadd.s32 %s294, %s295
      %s297 = smul.addr %s296, 8
      %s298 = scalar_lea.vmem %s1, %s297
      %p299 = pneg %p87
      %p300 = pneg %p84
      %s301 = sadd.s32 %s21, 1
      %s302 = smul.u32 %s301, 8
      %p303 = scmp.lt.s32.totalorder %s302, 7
      %s304 = scalar_select %p303, %s302, 7
      %p305 = scmp.lt.s32.totalorder %s20, 1
      %s306 = scalar_select %p305, %s20, 1
      %p307 = scmp.lt.s32.totalorder %s304, 7
      %s308 = scalar_select %p307, %s304, 7
      %s309 = smul.addr %s306, 8
      %s310 = sadd.s32 %s308, %s309
      %s311 = smul.addr %s310, 8
      %s312 = scalar_lea.vmem %s2, %s311
      %p313 = pneg %p123
      %p314 = pneg %p120
      %p315 = pneg %p144
      %p316 = pneg %p141
      %p317 = pneg %p165
      %p318 = pneg %p162
      %p319 = pneg %p193
      %p320 = pneg %p190
      %s321 = smul.u32 8, %s21
      %p322 = scmp.lt.s32.totalorder %s20, 1
      %s323 = scalar_select %p322, %s20, 1
      %p324 = scmp.lt.s32.totalorder %s321, 7
      %s325 = scalar_select %p324, %s321, 7
      %s326 = smul.addr %s325, 2
      %s327 = smul.addr %s323, 16
      %s328 = sadd.s32 %s326, %s327
      %s329 = smul.addr %s328, 8
      %s330 = scalar_lea.vmem %s5, %s329
      %s331 = smul.u32 8, %s21
      %p332 = scmp.lt.s32.totalorder %s20, 1
      %s333 = scalar_select %p332, %s20, 1
      %p334 = scmp.lt.s32.totalorder %s331, 7
      %s335 = scalar_select %p334, %s331, 7
      %s336 = smul.addr %s333, 8
      %s337 = sadd.s32 %s335, %s336
      %s338 = smul.addr %s337, 8
      %s339 = scalar_lea.vmem %s0, %s338
      %s340 = smul.u32 8, %s21
      %s341 = smul.u32 %s21, 8
      %s342 = ssub.s32 %s341, 1
      %p343 = scmp.gt.s32.totalorder %s342, 0
      %s344 = scalar_select %p343, %s342, 0
      %p345 = scmp.lt.s32.totalorder %s20, 1
      %s346 = scalar_select %p345, %s20, 1
      %p347 = scmp.lt.s32.totalorder %s344, 7
      %s348 = scalar_select %p347, %s344, 7
      %s349 = smul.addr %s346, 8
      %s350 = sadd.s32 %s348, %s349
      %s351 = smul.addr %s350, 8
      %s352 = scalar_lea.vmem %s1, %s351
      %s353 = smul.u32 %s21, 8
      %s354 = ssub.s32 %s353, 1
      %p355 = scmp.gt.s32.totalorder %s354, 0
      %s356 = scalar_select %p355, %s354, 0
      %s357 = sadd.s32 %s21, 1
      %s358 = smul.u32 %s357, 8
      %p359 = scmp.lt.s32.totalorder %s358, 7
      %s360 = scalar_select %p359, %s358, 7
      %p361 = scmp.lt.s32.totalorder %s20, 1
      %s362 = scalar_select %p361, %s20, 1
      %p363 = scmp.lt.s32.totalorder %s360, 7
      %s364 = scalar_select %p363, %s360, 7
      %s365 = smul.addr %s362, 8
      %s366 = sadd.s32 %s364, %s365
      %s367 = smul.addr %s366, 8
      %s368 = scalar_lea.vmem %s2, %s367
      %s369 = sadd.s32 %s21, 1
      %s370 = smul.u32 %s369, 8
      %p371 = scmp.lt.s32.totalorder %s370, 7
      %s372 = scalar_select %p371, %s370, 7
      %s373 = smul.u32 8, %s21
      %p374 = scmp.lt.s32.totalorder %s20, 1
      %s375 = scalar_select %p374, %s20, 1
      %p376 = scmp.lt.s32.totalorder %s373, 7
      %s377 = scalar_select %p376, %s373, 7
      %s378 = smul.addr %s377, 2
      %s379 = smul.addr %s375, 16
      %s380 = sadd.s32 %s378, %s379
      %s381 = smul.addr %s380, 8
      %s382 = scalar_lea.vmem %s5, %s381
      %s383 = smul.u32 8, %s21
      %v385 = vld [vmem:[%s339] sm:$0xff]
      %v386 = vld [vmem:[%s339 + $0x8] sm:$0xff]
      %v387 = vld [vmem:[%s339 + $0x10] sm:$0xff]
      %v388 = vld [vmem:[%s339 + $0x18] sm:$0xff]
      %v389 = vld [vmem:[%s339 + $0x20] sm:$0xff]
      %v390 = vld [vmem:[%s339 + $0x28] sm:$0xff]
      %v391 = vld [vmem:[%s339 + $0x30] sm:$0xff]
      %v392 = vld [vmem:[%s339 + $0x38] sm:$0xff]
      %v393 = vpack.c.bf16 %v385, %v385
      %v394 = vpack.c.bf16 %v386, %v386
      %v395 = vpack.c.bf16 %v387, %v387
      %v396 = vpack.c.bf16 %v388, %v388
      %v397 = vpack.c.bf16 %v389, %v389
      %v398 = vpack.c.bf16 %v390, %v390
      %v399 = vpack.c.bf16 %v391, %v391
      %v400 = vpack.c.bf16 %v392, %v392
      %v401 = vld [vmem:[%s352] sm:$0xff]
      %v402 = vpack.c.bf16 %v401, %v401
      %v403 = vld [vmem:[%s368] sm:$0xff]
      %v404 = vpack.c.bf16 %v403, %v403
      %p405 = scmp.gt.s32.totalorder %s21, 0
      %s406 = scalar_select %p405, 1, 0
      %v407 = vstv %s406
      %vm408 = vcmp.eq.s32.totalorder %v407, 1
      %v409 = vsel %vm408, %v402, 0
      %p410 = scmp.lt.s32.totalorder %s21, 0
      %s411 = scalar_select %p410, 1, 0
      %v412 = vstv %s411
      %vm413 = vcmp.eq.s32.totalorder %v412, 1
      %v414 = vsel %vm413, %v404, 0
      %v416 = vshrl.u32 %v409, 16
      %v418 = vrot.slane %v416, 7
      %v419 = vshll.u32 %v409, 16
      %v421 = vor.u32 %v418, %v419
      %v423 = vshrl.u32 %v393, 16
      %v425 = vrot.slane %v423, 7
      %v426 = vshll.u32 %v393, 16
      %v428 = vor.u32 %v425, %v426
      %v430 = vshrl.u32 %v394, 16
      %v432 = vrot.slane %v430, 7
      %v433 = vshll.u32 %v394, 16
      %v435 = vor.u32 %v432, %v433
      %v437 = vshrl.u32 %v395, 16
      %v439 = vrot.slane %v437, 7
      %v440 = vshll.u32 %v395, 16
      %v442 = vor.u32 %v439, %v440
      %v444 = vshrl.u32 %v396, 16
      %v446 = vrot.slane %v444, 7
      %v447 = vshll.u32 %v396, 16
      %v449 = vor.u32 %v446, %v447
      %v451 = vshrl.u32 %v397, 16
      %v453 = vrot.slane %v451, 7
      %v454 = vshll.u32 %v397, 16
      %v456 = vor.u32 %v453, %v454
      %v458 = vshrl.u32 %v398, 16
      %v460 = vrot.slane %v458, 7
      %v461 = vshll.u32 %v398, 16
      %v463 = vor.u32 %v460, %v461
      %v465 = vshrl.u32 %v399, 16
      %v467 = vrot.slane %v465, 7
      %v468 = vshll.u32 %v399, 16
      %v470 = vor.u32 %v467, %v468
      %v472 = vshrl.u32 %v400, 16
      %v474 = vrot.slane %v472, 7
      %v475 = vshll.u32 %v400, 16
      %v477 = vor.u32 %v474, %v475
      %v479 = vshrl.u32 %v414, 16
      %v481 = vrot.slane %v479, 7
      %v482 = vshll.u32 %v414, 16
      %v484 = vor.u32 %v481, %v482
      %vm495 = vcmask 1040384
      %vm496 = vsmask.f32 256
      %vm497 = vmand %vm495, %vm496
      %v498 = vsel %vm497, 0, %v421
      %v499 = vsel %vm497, 0, %v428
      %v500 = vsel %vm497, 0, %v435
      %v501 = vsel %vm497, 0, %v442
      %v502 = vsel %vm497, 0, %v449
      %v503 = vsel %vm497, 0, %v456
      %v504 = vsel %vm497, 0, %v463
      %v505 = vsel %vm497, 0, %v470
      %v506 = vsel %vm497, 0, %v477
      %v507 = vsel %vm497, 0, %v484
      %vm508 = vcmask 1044480
      %vm509 = vsmask.f32 4352
      %vm510 = vmand %vm508, %vm509
      %v511 = vsel %vm510, %v498, 0
      %v512 = vsel %vm510, %v499, 0
      %v513 = vsel %vm510, %v500, 0
      %v514 = vsel %vm510, %v501, 0
      %v515 = vsel %vm510, %v502, 0
      %v516 = vsel %vm510, %v503, 0
      %v517 = vsel %vm510, %v504, 0
      %v518 = vsel %vm510, %v505, 0
      %v519 = vsel %vm510, %v506, 0
      %v520 = vsel %vm510, %v507, 0
      %v521 = vld [vmem:[%s4] sm:$0x1]
      %v523 = vshrl.u32 %v511, 16
      %v525 = vshll.u32 %v511, 16
      %v527 = vrot.slane %v525, 1
      %v528 = vor.u32 %v523, %v527
      %v530 = vshrl.u32 %v512, 16
      %v532 = vshll.u32 %v512, 16
      %v534 = vrot.slane %v532, 1
      %v535 = vor.u32 %v530, %v534
      %v537 = vshrl.u32 %v513, 16
      %v539 = vshll.u32 %v513, 16
      %v541 = vrot.slane %v539, 1
      %v542 = vor.u32 %v537, %v541
      %v544 = vshrl.u32 %v514, 16
      %v546 = vshll.u32 %v514, 16
      %v548 = vrot.slane %v546, 1
      %v549 = vor.u32 %v544, %v548
      %v551 = vshrl.u32 %v515, 16
      %v553 = vshll.u32 %v515, 16
      %v555 = vrot.slane %v553, 1
      %v556 = vor.u32 %v551, %v555
      %v558 = vshrl.u32 %v516, 16
      %v560 = vshll.u32 %v516, 16
      %v562 = vrot.slane %v560, 1
      %v563 = vor.u32 %v558, %v562
      %v565 = vshrl.u32 %v517, 16
      %v567 = vshll.u32 %v517, 16
      %v569 = vrot.slane %v567, 1
      %v570 = vor.u32 %v565, %v569
      %v572 = vshrl.u32 %v518, 16
      %v574 = vshll.u32 %v518, 16
      %v576 = vrot.slane %v574, 1
      %v577 = vor.u32 %v572, %v576
      %578 = vrot.lane.b32.xlu0 %v528, 32
      %v579 = vpop.permute.xlu0 %578
      %580 = vrot.lane.b32.xlu0 %v535, 32
      %v581 = vpop.permute.xlu0 %580
      %582 = vrot.lane.b32.xlu0 %v542, 32
      %v583 = vpop.permute.xlu0 %582
      %584 = vrot.lane.b32.xlu0 %v549, 32
      %v585 = vpop.permute.xlu0 %584
      %586 = vrot.lane.b32.xlu0 %v556, 32
      %v587 = vpop.permute.xlu0 %586
      %588 = vrot.lane.b32.xlu0 %v563, 32
      %v589 = vpop.permute.xlu0 %588
      %590 = vrot.lane.b32.xlu0 %v570, 32
      %v591 = vpop.permute.xlu0 %590
      %592 = vrot.lane.b32.xlu0 %v577, 32
      %v593 = vpop.permute.xlu0 %592
      %vm594 = vcmask 261120
      %v596 = vsel %vm594, %v511, %v579
      %v598 = vsel %vm594, %v512, %v581
      %v600 = vsel %vm594, %v513, %v583
      %v602 = vsel %vm594, %v514, %v585
      %v604 = vsel %vm594, %v515, %v587
      %v606 = vsel %vm594, %v516, %v589
      %v608 = vsel %vm594, %v517, %v591
      %v610 = vsel %vm594, %v518, %v593
      %v611 = vld [vmem:[%s3] sm:$0xf]
      %v612 = vld [vmem:[%s3 + $0x4] sm:$0xf]
      %v613 = vld [vmem:[%s3 + $0x8] sm:$0xf]
      %v614 = vld [vmem:[%s3 + $0xc] sm:$0xf]
      %v615 = vld [vmem:[%s3 + $0x10] sm:$0xf]
      %v616 = vld [vmem:[%s3 + $0x14] sm:$0xf]
      %v617 = vld [vmem:[%s3 + $0x18] sm:$0xf]
      %v618 = vld [vmem:[%s3 + $0x1c] sm:$0xf]
      %v620 = vshrl.u32 %v519, 16
      %v622 = vshll.u32 %v519, 16
      %v624 = vrot.slane %v622, 1
      %v625 = vor.u32 %v620, %v624
      %626 = vrot.lane.b32.xlu0 %v625, 32
      %v627 = vpop.permute.xlu0 %626
      %v629 = vsel %vm594, %v519, %v627
      %s630 = scalar_lea.vmem %s3, 32
      %v631 = vld [vmem:[%s630] sm:$0xf]
      %v632 = vld [vmem:[%s630 + $0x4] sm:$0xf]
      %v633 = vld [vmem:[%s630 + $0x8] sm:$0xf]
      %v634 = vld [vmem:[%s630 + $0xc] sm:$0xf]
      %v635 = vld [vmem:[%s630 + $0x10] sm:$0xf]
      %v636 = vld [vmem:[%s630 + $0x14] sm:$0xf]
      %v637 = vld [vmem:[%s630 + $0x18] sm:$0xf]
      %v638 = vld [vmem:[%s630 + $0x1c] sm:$0xf]
      %v647 = vunpack.c.l.b16 %v598
      %v648 = vunpack.c.l.b16 %v600
      %v649 = vunpack.c.l.b16 %v602
      %v650 = vunpack.c.l.b16 %v604
      %v651 = vunpack.c.l.b16 %v606
      %v652 = vunpack.c.l.b16 %v608
      %v653 = vunpack.c.l.b16 %v610
      %v654 = vunpack.c.l.b16 %v629
      %v655 = vpack.c.b16 %v648, %v647
      %v656 = vpack.c.b16 %v650, %v649
      %v657 = vpack.c.b16 %v652, %v651
      %v658 = vpack.c.b16 %v654, %v653
      %v667 = vunpack.c.l.b16 %v631
      %v668 = vunpack.c.l.b16 %v632
      %v669 = vunpack.c.l.b16 %v633
      %v670 = vunpack.c.l.b16 %v634
      %v671 = vunpack.c.l.b16 %v635
      %v672 = vunpack.c.l.b16 %v636
      %v673 = vunpack.c.l.b16 %v637
      %v674 = vunpack.c.l.b16 %v638
      %v675 = vpack.c.b16 %v668, %v667
      %v676 = vpack.c.b16 %v670, %v669
      %v677 = vpack.c.b16 %v672, %v671
      %v678 = vpack.c.b16 %v674, %v673
      %vm683 = vcmask 523264
      %v685 = vsel %vm683, %v655, 0
      %v688 = vsel %vm683, %v656, 0
      %v691 = vsel %vm683, %v657, 0
      %v694 = vsel %vm683, %v658, 0
      %696 = vmatprep.subr.bf16.mxu0 0
      %697 = vmatpush1.bf16.msra.mxu0 0
      %698 = vmatprep.subr.bf16.mxu0 0
      %699 = vmatpush1.bf16.msra.mxu0 0
      %700 = vmatprep.subr.bf16.mxu0 0
      %701 = vmatpush1.bf16.msra.mxu0 0
      %702 = vmatprep.subr.bf16.mxu0 0
      %703 = vmatpush1.bf16.msra.mxu0 0
      %704 = vmatprep.subr.bf16.mxu0 0
      %705 = vmatpush1.bf16.msra.mxu0 %v678
      %706 = vmatprep.subr.bf16.mxu0 0
      %707 = vmatpush1.bf16.msra.mxu0 %v677
      %708 = vmatprep.subr.bf16.mxu0 0
      %709 = vmatpush1.bf16.msra.mxu0 %v676
      %710 = vmatprep.subr.bf16.mxu0 0
      %711 = vmatpush1.bf16.msra.mxu0 %v675
      %712 = vmatprep.subr.bf16.mxu0 0
      %713 = vmatpush2.bf16.msra.mxu0 0
      %714 = vmatprep.subr.bf16.mxu0 0
      %715 = vmatpush2.bf16.msra.mxu0 0
      %716 = vmatprep.subr.bf16.mxu0 0
      %717 = vmatpush2.bf16.msra.mxu0 0
      %718 = vmatprep.subr.bf16.mxu0 0
      %719 = vmatpush2.bf16.msra.mxu0 0
      %720 = vmatprep.subr.bf16.mxu0 0
      %721 = vmatpush2.bf16.msra.mxu0 0
      %722 = vmatprep.subr.bf16.mxu0 0
      %723 = vmatpush2.bf16.msra.mxu0 0
      %724 = vmatprep.subr.bf16.mxu0 0
      %725 = vmatpush2.bf16.msra.mxu0 0
      %726 = vmatprep.subr.bf16.mxu0 0
      %727 = vmatpush2.bf16.msra.mxu0 0
      %728 = vmatprep.mubr.bf16.mxu0 0
      %729 = vmatmul.mubr.bf16.gmra.mxu0 %v685
      %v730 = vpop.f32.mrf.mxu0
      %v731 = vadd.f32 0.0, %v730
      %v732 = vpop.f32.mrf.mxu0
      %v733 = vpop.f32.mrf.mxu0
      %v734 = vadd.f32 0.0, %v733
      %v735 = vpop.f32.mrf.mxu0
      %736 = vmatprep.mubr.bf16.mxu0 0
      %737 = vmatmul.mubr.bf16.gmra.mxu0 %v688
      %v738 = vpop.f32.mrf.mxu0
      %v739 = vadd.f32 0.0, %v738
      %v740 = vpop.f32.mrf.mxu0
      %v741 = vpop.f32.mrf.mxu0
      %v742 = vadd.f32 0.0, %v741
      %v743 = vpop.f32.mrf.mxu0
      %744 = vmatprep.mubr.bf16.mxu0 0
      %745 = vmatmul.mubr.bf16.gmra.mxu0 %v691
      %v746 = vpop.f32.mrf.mxu0
      %v747 = vadd.f32 0.0, %v746
      %v748 = vpop.f32.mrf.mxu0
      %v749 = vpop.f32.mrf.mxu0
      %v750 = vadd.f32 0.0, %v749
      %v751 = vpop.f32.mrf.mxu0
      %752 = vmatprep.mubr.bf16.mxu0 0
      %753 = vmatmul.mubr.bf16.gmra.mxu0 %v694
      %v754 = vpop.f32.mrf.mxu0
      %v755 = vadd.f32 0.0, %v754
      %v756 = vpop.f32.mrf.mxu0
      %v757 = vpop.f32.mrf.mxu0
      %v758 = vadd.f32 0.0, %v757
      %v759 = vpop.f32.mrf.mxu0
      %760 = vdwg.mxu0
      %v762 = vunpack.c.l.b16 %v596
      %v763 = vpack.c.b16 %v647, %v762
      %v764 = vpack.c.b16 %v649, %v648
      %v765 = vpack.c.b16 %v651, %v650
      %v766 = vpack.c.b16 %v653, %v652
      %v775 = vunpack.c.l.b16 %v611
      %v776 = vunpack.c.l.b16 %v612
      %v777 = vunpack.c.l.b16 %v613
      %v778 = vunpack.c.l.b16 %v614
      %v779 = vunpack.c.l.b16 %v615
      %v780 = vunpack.c.l.b16 %v616
      %v781 = vunpack.c.l.b16 %v617
      %v782 = vunpack.c.l.b16 %v618
      %v783 = vpack.c.b16 %v776, %v775
      %v784 = vpack.c.b16 %v778, %v777
      %v785 = vpack.c.b16 %v780, %v779
      %v786 = vpack.c.b16 %v782, %v781
      %v792 = vsel %vm683, %v763, 0
      %v795 = vsel %vm683, %v764, 0
      %v798 = vsel %vm683, %v765, 0
      %v801 = vsel %vm683, %v766, 0
      %803 = vmatprep.subr.bf16.mxu0 0
      %804 = vmatpush1.bf16.msra.mxu0 0
      %805 = vmatprep.subr.bf16.mxu0 0
      %806 = vmatpush1.bf16.msra.mxu0 0
      %807 = vmatprep.subr.bf16.mxu0 0
      %808 = vmatpush1.bf16.msra.mxu0 0
      %809 = vmatprep.subr.bf16.mxu0 0
      %810 = vmatpush1.bf16.msra.mxu0 0
      %811 = vmatprep.subr.bf16.mxu0 0
      %812 = vmatpush1.bf16.msra.mxu0 %v786
      %813 = vmatprep.subr.bf16.mxu0 0
      %814 = vmatpush1.bf16.msra.mxu0 %v785
      %815 = vmatprep.subr.bf16.mxu0 0
      %816 = vmatpush1.bf16.msra.mxu0 %v784
      %817 = vmatprep.subr.bf16.mxu0 0
      %818 = vmatpush1.bf16.msra.mxu0 %v783
      %819 = vmatprep.subr.bf16.mxu0 0
      %820 = vmatpush2.bf16.msra.mxu0 0
      %821 = vmatprep.subr.bf16.mxu0 0
      %822 = vmatpush2.bf16.msra.mxu0 0
      %823 = vmatprep.subr.bf16.mxu0 0
      %824 = vmatpush2.bf16.msra.mxu0 0
      %825 = vmatprep.subr.bf16.mxu0 0
      %826 = vmatpush2.bf16.msra.mxu0 0
      %827 = vmatprep.subr.bf16.mxu0 0
      %828 = vmatpush2.bf16.msra.mxu0 0
      %829 = vmatprep.subr.bf16.mxu0 0
      %830 = vmatpush2.bf16.msra.mxu0 0
      %831 = vmatprep.subr.bf16.mxu0 0
      %832 = vmatpush2.bf16.msra.mxu0 0
      %833 = vmatprep.subr.bf16.mxu0 0
      %834 = vmatpush2.bf16.msra.mxu0 0
      %835 = vmatprep.mubr.bf16.mxu0 0
      %836 = vmatmul.mubr.bf16.gmra.mxu0 %v792
      %v837 = vpop.f32.mrf.mxu0
      %v838 = vadd.f32 %v731, %v837
      %v839 = vpop.f32.mrf.mxu0
      %v840 = vpop.f32.mrf.mxu0
      %v841 = vadd.f32 %v734, %v840
      %v842 = vpop.f32.mrf.mxu0
      %843 = vmatprep.mubr.bf16.mxu0 0
      %844 = vmatmul.mubr.bf16.gmra.mxu0 %v795
      %v845 = vpop.f32.mrf.mxu0
      %v846 = vadd.f32 %v739, %v845
      %v847 = vpop.f32.mrf.mxu0
      %v848 = vpop.f32.mrf.mxu0
      %v849 = vadd.f32 %v742, %v848
      %v850 = vpop.f32.mrf.mxu0
      %851 = vmatprep.mubr.bf16.mxu0 0
      %852 = vmatmul.mubr.bf16.gmra.mxu0 %v798
      %v853 = vpop.f32.mrf.mxu0
      %v854 = vadd.f32 %v747, %v853
      %v855 = vpop.f32.mrf.mxu0
      %v856 = vpop.f32.mrf.mxu0
      %v857 = vadd.f32 %v750, %v856
      %v858 = vpop.f32.mrf.mxu0
      %859 = vmatprep.mubr.bf16.mxu0 0
      %860 = vmatmul.mubr.bf16.gmra.mxu0 %v801
      %v861 = vpop.f32.mrf.mxu0
      %v862 = vadd.f32 %v755, %v861
      %v863 = vpop.f32.mrf.mxu0
      %v864 = vpop.f32.mrf.mxu0
      %v865 = vadd.f32 %v758, %v864
      %v866 = vpop.f32.mrf.mxu0
      %867 = vdwg.mxu0
      %v869 = vlaneseq
      %v870 = vshrl.u32 %v869, 7
      %v871 = vsub.s32 0, %v870
      %v872 = vrot.slane %v521, %v871
      %v874 = vadd.f32 %v838, %v872
      %v875 = vadd.f32 %v841, %v872
      %v876 = vadd.f32 %v846, %v872
      %v877 = vadd.f32 %v849, %v872
      %v878 = vadd.f32 %v854, %v872
      %v879 = vadd.f32 %v857, %v872
      %v880 = vadd.f32 %v862, %v872
      %v881 = vadd.f32 %v865, %v872
      %v882 = vunpack.c.h.b16 %v596
      %v883 = vunpack.c.h.b16 %v598
      %v884 = vunpack.c.h.b16 %v600
      %v885 = vunpack.c.h.b16 %v602
      %v886 = vunpack.c.h.b16 %v604
      %v887 = vunpack.c.h.b16 %v606
      %v888 = vunpack.c.h.b16 %v608
      %v889 = vunpack.c.h.b16 %v610
      %v890 = vpack.c.b16 %v762, %v762
      %v891 = vpack.c.b16 %v882, %v882
      %v892 = vpack.c.b16 %v647, %v647
      %v893 = vpack.c.b16 %v883, %v883
      %v894 = vpack.c.b16 %v648, %v648
      %v895 = vpack.c.b16 %v884, %v884
      %v896 = vpack.c.b16 %v649, %v649
      %v897 = vpack.c.b16 %v885, %v885
      %v898 = vpack.c.b16 %v650, %v650
      %v899 = vpack.c.b16 %v886, %v886
      %v900 = vpack.c.b16 %v651, %v651
      %v901 = vpack.c.b16 %v887, %v887
      %v902 = vpack.c.b16 %v652, %v652
      %v903 = vpack.c.b16 %v888, %v888
      %v904 = vpack.c.b16 %v653, %v653
      %v905 = vpack.c.b16 %v889, %v889
      %vm906 = vsmask.f32 3328
      %vm907 = vsmask.f32 7440
      %vm908 = vmor %vm906, %vm907
      %v910 = vshrl.u32 %v890, 16
      %v912 = vrot.slane %v910, 4
      %v913 = vshll.u32 %v890, 16
      %v915 = vrot.slane %v913, 5
      %v916 = vor.u32 %v912, %v915
      %v917 = vrot.slane %v916, 4
      %v919 = vshll.u32 %v891, 16
      %v921 = vrot.slane %v919, 5
      %v922 = vsel %vm908, %v917, %v921
      %v924 = vshrl.u32 %v892, 16
      %v926 = vrot.slane %v924, 4
      %v927 = vshll.u32 %v892, 16
      %v929 = vrot.slane %v927, 5
      %v930 = vor.u32 %v926, %v929
      %v931 = vrot.slane %v930, 4
      %v933 = vshll.u32 %v893, 16
      %v935 = vrot.slane %v933, 5
      %v936 = vsel %vm908, %v931, %v935
      %v938 = vshrl.u32 %v894, 16
      %v940 = vrot.slane %v938, 4
      %v941 = vshll.u32 %v894, 16
      %v943 = vrot.slane %v941, 5
      %v944 = vor.u32 %v940, %v943
      %v945 = vrot.slane %v944, 4
      %v947 = vshll.u32 %v895, 16
      %v949 = vrot.slane %v947, 5
      %v950 = vsel %vm908, %v945, %v949
      %v952 = vshrl.u32 %v896, 16
      %v954 = vrot.slane %v952, 4
      %v955 = vshll.u32 %v896, 16
      %v957 = vrot.slane %v955, 5
      %v958 = vor.u32 %v954, %v957
      %v959 = vrot.slane %v958, 4
      %v961 = vshll.u32 %v897, 16
      %v963 = vrot.slane %v961, 5
      %v964 = vsel %vm908, %v959, %v963
      %v966 = vshrl.u32 %v898, 16
      %v968 = vrot.slane %v966, 4
      %v969 = vshll.u32 %v898, 16
      %v971 = vrot.slane %v969, 5
      %v972 = vor.u32 %v968, %v971
      %v973 = vrot.slane %v972, 4
      %v975 = vshll.u32 %v899, 16
      %v977 = vrot.slane %v975, 5
      %v978 = vsel %vm908, %v973, %v977
      %v980 = vshrl.u32 %v900, 16
      %v982 = vrot.slane %v980, 4
      %v983 = vshll.u32 %v900, 16
      %v985 = vrot.slane %v983, 5
      %v986 = vor.u32 %v982, %v985
      %v987 = vrot.slane %v986, 4
      %v989 = vshll.u32 %v901, 16
      %v991 = vrot.slane %v989, 5
      %v992 = vsel %vm908, %v987, %v991
      %v994 = vshrl.u32 %v902, 16
      %v996 = vrot.slane %v994, 4
      %v997 = vshll.u32 %v902, 16
      %v999 = vrot.slane %v997, 5
      %v1000 = vor.u32 %v996, %v999
      %v1001 = vrot.slane %v1000, 4
      %v1003 = vshll.u32 %v903, 16
      %v1005 = vrot.slane %v1003, 5
      %v1006 = vsel %vm908, %v1001, %v1005
      %v1008 = vshrl.u32 %v904, 16
      %v1010 = vrot.slane %v1008, 4
      %v1011 = vshll.u32 %v904, 16
      %v1013 = vrot.slane %v1011, 5
      %v1014 = vor.u32 %v1010, %v1013
      %v1015 = vrot.slane %v1014, 4
      %v1017 = vshll.u32 %v905, 16
      %v1019 = vrot.slane %v1017, 5
      %v1020 = vsel %vm908, %v1015, %v1019
      %s1021 = scalar_lea.vmem %s3, 64
      %v1022 = vld [vmem:[%s1021] sm:$0xf]
      %v1023 = vld [vmem:[%s1021 + $0x4] sm:$0xf]
      %v1024 = vld [vmem:[%s1021 + $0x8] sm:$0xf]
      %v1025 = vld [vmem:[%s1021 + $0xc] sm:$0xf]
      %v1026 = vld [vmem:[%s1021 + $0x10] sm:$0xf]
      %v1027 = vld [vmem:[%s1021 + $0x14] sm:$0xf]
      %v1028 = vld [vmem:[%s1021 + $0x18] sm:$0xf]
      %v1029 = vld [vmem:[%s1021 + $0x1c] sm:$0xf]
      %v1030 = vunpack.c.h.b16 %v629
      %v1031 = vpack.c.b16 %v654, %v654
      %v1032 = vpack.c.b16 %v1030, %v1030
      %v1034 = vshrl.u32 %v1031, 16
      %v1036 = vrot.slane %v1034, 4
      %v1037 = vshll.u32 %v1031, 16
      %v1039 = vrot.slane %v1037, 5
      %v1040 = vor.u32 %v1036, %v1039
      %v1041 = vrot.slane %v1040, 4
      %v1043 = vshll.u32 %v1032, 16
      %v1045 = vrot.slane %v1043, 5
      %v1046 = vsel %vm908, %v1041, %v1045
      %s1047 = scalar_lea.vmem %s3, 96
      %v1048 = vld [vmem:[%s1047] sm:$0xf]
      %v1049 = vld [vmem:[%s1047 + $0x4] sm:$0xf]
      %v1050 = vld [vmem:[%s1047 + $0x8] sm:$0xf]
      %v1051 = vld [vmem:[%s1047 + $0xc] sm:$0xf]
      %v1052 = vld [vmem:[%s1047 + $0x10] sm:$0xf]
      %v1053 = vld [vmem:[%s1047 + $0x14] sm:$0xf]
      %v1054 = vld [vmem:[%s1047 + $0x18] sm:$0xf]
      %v1055 = vld [vmem:[%s1047 + $0x1c] sm:$0xf]
      %v1056 = vunpack.c.l.b16 %v936
      %v1057 = vunpack.c.l.b16 %v950
      %v1058 = vunpack.c.l.b16 %v964
      %v1059 = vunpack.c.l.b16 %v978
      %v1060 = vunpack.c.l.b16 %v992
      %v1061 = vunpack.c.l.b16 %v1006
      %v1062 = vunpack.c.l.b16 %v1020
      %v1063 = vunpack.c.l.b16 %v1046
      %v1064 = vpack.c.b16 %v1057, %v1056
      %v1065 = vpack.c.b16 %v1059, %v1058
      %v1066 = vpack.c.b16 %v1061, %v1060
      %v1067 = vpack.c.b16 %v1063, %v1062
      %v1076 = vunpack.c.l.b16 %v1048
      %v1077 = vunpack.c.l.b16 %v1049
      %v1078 = vunpack.c.l.b16 %v1050
      %v1079 = vunpack.c.l.b16 %v1051
      %v1080 = vunpack.c.l.b16 %v1052
      %v1081 = vunpack.c.l.b16 %v1053
      %v1082 = vunpack.c.l.b16 %v1054
      %v1083 = vunpack.c.l.b16 %v1055
      %v1084 = vpack.c.b16 %v1077, %v1076
      %v1085 = vpack.c.b16 %v1079, %v1078
      %v1086 = vpack.c.b16 %v1081, %v1080
      %v1087 = vpack.c.b16 %v1083, %v1082
      %v1093 = vsel %vm683, %v1064, 0
      %v1096 = vsel %vm683, %v1065, 0
      %v1099 = vsel %vm683, %v1066, 0
      %v1102 = vsel %vm683, %v1067, 0
      %1104 = vmatprep.subr.bf16.mxu0 0
      %1105 = vmatpush1.bf16.msra.mxu0 0
      %1106 = vmatprep.subr.bf16.mxu0 0
      %1107 = vmatpush1.bf16.msra.mxu0 0
      %1108 = vmatprep.subr.bf16.mxu0 0
      %1109 = vmatpush1.bf16.msra.mxu0 0
      %1110 = vmatprep.subr.bf16.mxu0 0
      %1111 = vmatpush1.bf16.msra.mxu0 0
      %1112 = vmatprep.subr.bf16.mxu0 0
      %1113 = vmatpush1.bf16.msra.mxu0 %v1087
      %1114 = vmatprep.subr.bf16.mxu0 0
      %1115 = vmatpush1.bf16.msra.mxu0 %v1086
      %1116 = vmatprep.subr.bf16.mxu0 0
      %1117 = vmatpush1.bf16.msra.mxu0 %v1085
      %1118 = vmatprep.subr.bf16.mxu0 0
      %1119 = vmatpush1.bf16.msra.mxu0 %v1084
      %1120 = vmatprep.subr.bf16.mxu0 0
      %1121 = vmatpush2.bf16.msra.mxu0 0
      %1122 = vmatprep.subr.bf16.mxu0 0
      %1123 = vmatpush2.bf16.msra.mxu0 0
      %1124 = vmatprep.subr.bf16.mxu0 0
      %1125 = vmatpush2.bf16.msra.mxu0 0
      %1126 = vmatprep.subr.bf16.mxu0 0
      %1127 = vmatpush2.bf16.msra.mxu0 0
      %1128 = vmatprep.subr.bf16.mxu0 0
      %1129 = vmatpush2.bf16.msra.mxu0 0
      %1130 = vmatprep.subr.bf16.mxu0 0
      %1131 = vmatpush2.bf16.msra.mxu0 0
      %1132 = vmatprep.subr.bf16.mxu0 0
      %1133 = vmatpush2.bf16.msra.mxu0 0
      %1134 = vmatprep.subr.bf16.mxu0 0
      %1135 = vmatpush2.bf16.msra.mxu0 0
      %1136 = vmatprep.mubr.bf16.mxu0 0
      %1137 = vmatmul.mubr.bf16.gmra.mxu0 %v1093
      %v1138 = vpop.f32.mrf.mxu0
      %v1139 = vadd.f32 0.0, %v1138
      %v1140 = vpop.f32.mrf.mxu0
      %v1141 = vpop.f32.mrf.mxu0
      %v1142 = vadd.f32 0.0, %v1141
      %v1143 = vpop.f32.mrf.mxu0
      %1144 = vmatprep.mubr.bf16.mxu0 0
      %1145 = vmatmul.mubr.bf16.gmra.mxu0 %v1096
      %v1146 = vpop.f32.mrf.mxu0
      %v1147 = vadd.f32 0.0, %v1146
      %v1148 = vpop.f32.mrf.mxu0
      %v1149 = vpop.f32.mrf.mxu0
      %v1150 = vadd.f32 0.0, %v1149
      %v1151 = vpop.f32.mrf.mxu0
      %1152 = vmatprep.mubr.bf16.mxu0 0
      %1153 = vmatmul.mubr.bf16.gmra.mxu0 %v1099
      %v1154 = vpop.f32.mrf.mxu0
      %v1155 = vadd.f32 0.0, %v1154
      %v1156 = vpop.f32.mrf.mxu0
      %v1157 = vpop.f32.mrf.mxu0
      %v1158 = vadd.f32 0.0, %v1157
      %v1159 = vpop.f32.mrf.mxu0
      %1160 = vmatprep.mubr.bf16.mxu0 0
      %1161 = vmatmul.mubr.bf16.gmra.mxu0 %v1102
      %v1162 = vpop.f32.mrf.mxu0
      %v1163 = vadd.f32 0.0, %v1162
      %v1164 = vpop.f32.mrf.mxu0
      %v1165 = vpop.f32.mrf.mxu0
      %v1166 = vadd.f32 0.0, %v1165
      %v1167 = vpop.f32.mrf.mxu0
      %1168 = vdwg.mxu0
      %v1169 = vunpack.c.l.b16 %v922
      %v1170 = vpack.c.b16 %v1056, %v1169
      %v1171 = vpack.c.b16 %v1058, %v1057
      %v1172 = vpack.c.b16 %v1060, %v1059
      %v1173 = vpack.c.b16 %v1062, %v1061
      %v1182 = vunpack.c.l.b16 %v1022
      %v1183 = vunpack.c.l.b16 %v1023
      %v1184 = vunpack.c.l.b16 %v1024
      %v1185 = vunpack.c.l.b16 %v1025
      %v1186 = vunpack.c.l.b16 %v1026
      %v1187 = vunpack.c.l.b16 %v1027
      %v1188 = vunpack.c.l.b16 %v1028
      %v1189 = vunpack.c.l.b16 %v1029
      %v1190 = vpack.c.b16 %v1183, %v1182
      %v1191 = vpack.c.b16 %v1185, %v1184
      %v1192 = vpack.c.b16 %v1187, %v1186
      %v1193 = vpack.c.b16 %v1189, %v1188
      %v1199 = vsel %vm683, %v1170, 0
      %v1202 = vsel %vm683, %v1171, 0
      %v1205 = vsel %vm683, %v1172, 0
      %v1208 = vsel %vm683, %v1173, 0
      %1210 = vmatprep.subr.bf16.mxu0 0
      %1211 = vmatpush1.bf16.msra.mxu0 0
      %1212 = vmatprep.subr.bf16.mxu0 0
      %1213 = vmatpush1.bf16.msra.mxu0 0
      %1214 = vmatprep.subr.bf16.mxu0 0
      %1215 = vmatpush1.bf16.msra.mxu0 0
      %1216 = vmatprep.subr.bf16.mxu0 0
      %1217 = vmatpush1.bf16.msra.mxu0 0
      %1218 = vmatprep.subr.bf16.mxu0 0
      %1219 = vmatpush1.bf16.msra.mxu0 %v1193
      %1220 = vmatprep.subr.bf16.mxu0 0
      %1221 = vmatpush1.bf16.msra.mxu0 %v1192
      %1222 = vmatprep.subr.bf16.mxu0 0
      %1223 = vmatpush1.bf16.msra.mxu0 %v1191
      %1224 = vmatprep.subr.bf16.mxu0 0
      %1225 = vmatpush1.bf16.msra.mxu0 %v1190
      %1226 = vmatprep.subr.bf16.mxu0 0
      %1227 = vmatpush2.bf16.msra.mxu0 0
      %1228 = vmatprep.subr.bf16.mxu0 0
      %1229 = vmatpush2.bf16.msra.mxu0 0
      %1230 = vmatprep.subr.bf16.mxu0 0
      %1231 = vmatpush2.bf16.msra.mxu0 0
      %1232 = vmatprep.subr.bf16.mxu0 0
      %1233 = vmatpush2.bf16.msra.mxu0 0
      %1234 = vmatprep.subr.bf16.mxu0 0
      %1235 = vmatpush2.bf16.msra.mxu0 0
      %1236 = vmatprep.subr.bf16.mxu0 0
      %1237 = vmatpush2.bf16.msra.mxu0 0
      %1238 = vmatprep.subr.bf16.mxu0 0
      %1239 = vmatpush2.bf16.msra.mxu0 0
      %1240 = vmatprep.subr.bf16.mxu0 0
      %1241 = vmatpush2.bf16.msra.mxu0 0
      %1242 = vmatprep.mubr.bf16.mxu0 0
      %1243 = vmatmul.mubr.bf16.gmra.mxu0 %v1199
      %v1244 = vpop.f32.mrf.mxu0
      %v1245 = vadd.f32 %v1139, %v1244
      %v1246 = vpop.f32.mrf.mxu0
      %v1247 = vpop.f32.mrf.mxu0
      %v1248 = vadd.f32 %v1142, %v1247
      %v1249 = vpop.f32.mrf.mxu0
      %1250 = vmatprep.mubr.bf16.mxu0 0
      %1251 = vmatmul.mubr.bf16.gmra.mxu0 %v1202
      %v1252 = vpop.f32.mrf.mxu0
      %v1253 = vadd.f32 %v1147, %v1252
      %v1254 = vpop.f32.mrf.mxu0
      %v1255 = vpop.f32.mrf.mxu0
      %v1256 = vadd.f32 %v1150, %v1255
      %v1257 = vpop.f32.mrf.mxu0
      %1258 = vmatprep.mubr.bf16.mxu0 0
      %1259 = vmatmul.mubr.bf16.gmra.mxu0 %v1205
      %v1260 = vpop.f32.mrf.mxu0
      %v1261 = vadd.f32 %v1155, %v1260
      %v1262 = vpop.f32.mrf.mxu0
      %v1263 = vpop.f32.mrf.mxu0
      %v1264 = vadd.f32 %v1158, %v1263
      %v1265 = vpop.f32.mrf.mxu0
      %1266 = vmatprep.mubr.bf16.mxu0 0
      %1267 = vmatmul.mubr.bf16.gmra.mxu0 %v1208
      %v1268 = vpop.f32.mrf.mxu0
      %v1269 = vadd.f32 %v1163, %v1268
      %v1270 = vpop.f32.mrf.mxu0
      %v1271 = vpop.f32.mrf.mxu0
      %v1272 = vadd.f32 %v1166, %v1271
      %v1273 = vpop.f32.mrf.mxu0
      %1274 = vdwg.mxu0
      %v1275 = vadd.f32 %v1245, %v872
      %v1276 = vadd.f32 %v1248, %v872
      %v1277 = vadd.f32 %v1253, %v872
      %v1278 = vadd.f32 %v1256, %v872
      %v1279 = vadd.f32 %v1261, %v872
      %v1280 = vadd.f32 %v1264, %v872
      %v1281 = vadd.f32 %v1269, %v872
      %v1282 = vadd.f32 %v1272, %v872
      %1291 = vrot.lane.b32.xlu0 %v1275, 32
      %v1292 = vpop.permute.xlu0 %1291
      %1293 = vrot.lane.b32.xlu0 %v1276, 32
      %v1294 = vpop.permute.xlu0 %1293
      %1295 = vrot.lane.b32.xlu0 %v1277, 32
      %v1296 = vpop.permute.xlu0 %1295
      %1297 = vrot.lane.b32.xlu0 %v1278, 32
      %v1298 = vpop.permute.xlu0 %1297
      %1299 = vrot.lane.b32.xlu0 %v1279, 32
      %v1300 = vpop.permute.xlu0 %1299
      %1301 = vrot.lane.b32.xlu0 %v1280, 32
      %v1302 = vpop.permute.xlu0 %1301
      %1303 = vrot.lane.b32.xlu0 %v1281, 32
      %v1304 = vpop.permute.xlu0 %1303
      %1305 = vrot.lane.b32.xlu0 %v1282, 32
      %v1306 = vpop.permute.xlu0 %1305
      %v1315 = vsel %vm594, %v874, %v1292
      %v1316 = vsel %vm594, %v875, %v1294
      %v1317 = vsel %vm594, %v876, %v1296
      %v1318 = vsel %vm594, %v877, %v1298
      %v1319 = vsel %vm594, %v878, %v1300
      %v1320 = vsel %vm594, %v879, %v1302
      %v1321 = vsel %vm594, %v880, %v1304
      %v1322 = vsel %vm594, %v881, %v1306
      %s1323 = scalar_lea.vmem %s3, 128
      %v1324 = vld [vmem:[%s1323] sm:$0xf]
      %v1325 = vld [vmem:[%s1323 + $0x4] sm:$0xf]
      %v1326 = vld [vmem:[%s1323 + $0x8] sm:$0xf]
      %v1327 = vld [vmem:[%s1323 + $0xc] sm:$0xf]
      %v1328 = vld [vmem:[%s1323 + $0x10] sm:$0xf]
      %v1329 = vld [vmem:[%s1323 + $0x14] sm:$0xf]
      %v1330 = vld [vmem:[%s1323 + $0x18] sm:$0xf]
      %v1331 = vld [vmem:[%s1323 + $0x1c] sm:$0xf]
      %v1333 = vshrl.u32 %v520, 16
      %v1335 = vshll.u32 %v520, 16
      %v1337 = vrot.slane %v1335, 1
      %v1338 = vor.u32 %v1333, %v1337
      %1339 = vrot.lane.b32.xlu0 %v1338, 32
      %v1340 = vpop.permute.xlu0 %1339
      %v1342 = vsel %vm594, %v520, %v1340
      %s1343 = scalar_lea.vmem %s3, 160
      %v1344 = vld [vmem:[%s1343] sm:$0xf]
      %v1345 = vld [vmem:[%s1343 + $0x4] sm:$0xf]
      %v1346 = vld [vmem:[%s1343 + $0x8] sm:$0xf]
      %v1347 = vld [vmem:[%s1343 + $0xc] sm:$0xf]
      %v1348 = vld [vmem:[%s1343 + $0x10] sm:$0xf]
      %v1349 = vld [vmem:[%s1343 + $0x14] sm:$0xf]
      %v1350 = vld [vmem:[%s1343 + $0x18] sm:$0xf]
      %v1351 = vld [vmem:[%s1343 + $0x1c] sm:$0xf]
      %v1353 = vunpack.c.l.b16 %v1342
      %v1354 = vpack.c.b16 %v1353, %v654
      %v1363 = vunpack.c.l.b16 %v1344
      %v1364 = vunpack.c.l.b16 %v1345
      %v1365 = vunpack.c.l.b16 %v1346
      %v1366 = vunpack.c.l.b16 %v1347
      %v1367 = vunpack.c.l.b16 %v1348
      %v1368 = vunpack.c.l.b16 %v1349
      %v1369 = vunpack.c.l.b16 %v1350
      %v1370 = vunpack.c.l.b16 %v1351
      %v1371 = vpack.c.b16 %v1364, %v1363
      %v1372 = vpack.c.b16 %v1366, %v1365
      %v1373 = vpack.c.b16 %v1368, %v1367
      %v1374 = vpack.c.b16 %v1370, %v1369
      %v1380 = vsel %vm683, %v1354, 0
      %1382 = vmatprep.subr.bf16.mxu0 0
      %1383 = vmatpush1.bf16.msra.mxu0 0
      %1384 = vmatprep.subr.bf16.mxu0 0
      %1385 = vmatpush1.bf16.msra.mxu0 0
      %1386 = vmatprep.subr.bf16.mxu0 0
      %1387 = vmatpush1.bf16.msra.mxu0 0
      %1388 = vmatprep.subr.bf16.mxu0 0
      %1389 = vmatpush1.bf16.msra.mxu0 0
      %1390 = vmatprep.subr.bf16.mxu0 0
      %1391 = vmatpush1.bf16.msra.mxu0 %v1374
      %1392 = vmatprep.subr.bf16.mxu0 0
      %1393 = vmatpush1.bf16.msra.mxu0 %v1373
      %1394 = vmatprep.subr.bf16.mxu0 0
      %1395 = vmatpush1.bf16.msra.mxu0 %v1372
      %1396 = vmatprep.subr.bf16.mxu0 0
      %1397 = vmatpush1.bf16.msra.mxu0 %v1371
      %1398 = vmatprep.subr.bf16.mxu0 0
      %1399 = vmatpush2.bf16.msra.mxu0 0
      %1400 = vmatprep.subr.bf16.mxu0 0
      %1401 = vmatpush2.bf16.msra.mxu0 0
      %1402 = vmatprep.subr.bf16.mxu0 0
      %1403 = vmatpush2.bf16.msra.mxu0 0
      %1404 = vmatprep.subr.bf16.mxu0 0
      %1405 = vmatpush2.bf16.msra.mxu0 0
      %1406 = vmatprep.subr.bf16.mxu0 0
      %1407 = vmatpush2.bf16.msra.mxu0 0
      %1408 = vmatprep.subr.bf16.mxu0 0
      %1409 = vmatpush2.bf16.msra.mxu0 0
      %1410 = vmatprep.subr.bf16.mxu0 0
      %1411 = vmatpush2.bf16.msra.mxu0 0
      %1412 = vmatprep.subr.bf16.mxu0 0
      %1413 = vmatpush2.bf16.msra.mxu0 0
      %1414 = vmatprep.mubr.bf16.mxu0 0
      %1415 = vmatmul.mubr.bf16.gmra.mxu0 %v795
      %v1416 = vpop.f32.mrf.mxu0
      %v1417 = vadd.f32 0.0, %v1416
      %v1418 = vpop.f32.mrf.mxu0
      %v1419 = vpop.f32.mrf.mxu0
      %v1420 = vadd.f32 0.0, %v1419
      %v1421 = vpop.f32.mrf.mxu0
      %1422 = vmatprep.mubr.bf16.mxu0 0
      %1423 = vmatmul.mubr.bf16.gmra.mxu0 %v798
      %v1424 = vpop.f32.mrf.mxu0
      %v1425 = vadd.f32 0.0, %v1424
      %v1426 = vpop.f32.mrf.mxu0
      %v1427 = vpop.f32.mrf.mxu0
      %v1428 = vadd.f32 0.0, %v1427
      %v1429 = vpop.f32.mrf.mxu0
      %1430 = vmatprep.mubr.bf16.mxu0 0
      %1431 = vmatmul.mubr.bf16.gmra.mxu0 %v801
      %v1432 = vpop.f32.mrf.mxu0
      %v1433 = vadd.f32 0.0, %v1432
      %v1434 = vpop.f32.mrf.mxu0
      %v1435 = vpop.f32.mrf.mxu0
      %v1436 = vadd.f32 0.0, %v1435
      %v1437 = vpop.f32.mrf.mxu0
      %1438 = vmatprep.mubr.bf16.mxu0 0
      %1439 = vmatmul.mubr.bf16.gmra.mxu0 %v1380
      %v1440 = vpop.f32.mrf.mxu0
      %v1441 = vadd.f32 0.0, %v1440
      %v1442 = vpop.f32.mrf.mxu0
      %v1443 = vpop.f32.mrf.mxu0
      %v1444 = vadd.f32 0.0, %v1443
      %v1445 = vpop.f32.mrf.mxu0
      %1446 = vdwg.mxu0
      %v1455 = vunpack.c.l.b16 %v1324
      %v1456 = vunpack.c.l.b16 %v1325
      %v1457 = vunpack.c.l.b16 %v1326
      %v1458 = vunpack.c.l.b16 %v1327
      %v1459 = vunpack.c.l.b16 %v1328
      %v1460 = vunpack.c.l.b16 %v1329
      %v1461 = vunpack.c.l.b16 %v1330
      %v1462 = vunpack.c.l.b16 %v1331
      %v1463 = vpack.c.b16 %v1456, %v1455
      %v1464 = vpack.c.b16 %v1458, %v1457
      %v1465 = vpack.c.b16 %v1460, %v1459
      %v1466 = vpack.c.b16 %v1462, %v1461
      %1471 = vmatprep.subr.bf16.mxu0 0
      %1472 = vmatpush1.bf16.msra.mxu0 0
      %1473 = vmatprep.subr.bf16.mxu0 0
      %1474 = vmatpush1.bf16.msra.mxu0 0
      %1475 = vmatprep.subr.bf16.mxu0 0
      %1476 = vmatpush1.bf16.msra.mxu0 0
      %1477 = vmatprep.subr.bf16.mxu0 0
      %1478 = vmatpush1.bf16.msra.mxu0 0
      %1479 = vmatprep.subr.bf16.mxu0 0
      %1480 = vmatpush1.bf16.msra.mxu0 %v1466
      %1481 = vmatprep.subr.bf16.mxu0 0
      %1482 = vmatpush1.bf16.msra.mxu0 %v1465
      %1483 = vmatprep.subr.bf16.mxu0 0
      %1484 = vmatpush1.bf16.msra.mxu0 %v1464
      %1485 = vmatprep.subr.bf16.mxu0 0
      %1486 = vmatpush1.bf16.msra.mxu0 %v1463
      %1487 = vmatprep.subr.bf16.mxu0 0
      %1488 = vmatpush2.bf16.msra.mxu0 0
      %1489 = vmatprep.subr.bf16.mxu0 0
      %1490 = vmatpush2.bf16.msra.mxu0 0
      %1491 = vmatprep.subr.bf16.mxu0 0
      %1492 = vmatpush2.bf16.msra.mxu0 0
      %1493 = vmatprep.subr.bf16.mxu0 0
      %1494 = vmatpush2.bf16.msra.mxu0 0
      %1495 = vmatprep.subr.bf16.mxu0 0
      %1496 = vmatpush2.bf16.msra.mxu0 0
      %1497 = vmatprep.subr.bf16.mxu0 0
      %1498 = vmatpush2.bf16.msra.mxu0 0
      %1499 = vmatprep.subr.bf16.mxu0 0
      %1500 = vmatpush2.bf16.msra.mxu0 0
      %1501 = vmatprep.subr.bf16.mxu0 0
      %1502 = vmatpush2.bf16.msra.mxu0 0
      %1503 = vmatprep.mubr.bf16.mxu0 0
      %1504 = vmatmul.mubr.bf16.gmra.mxu0 %v685
      %v1505 = vpop.f32.mrf.mxu0
      %v1506 = vadd.f32 %v1417, %v1505
      %v1507 = vpop.f32.mrf.mxu0
      %v1508 = vpop.f32.mrf.mxu0
      %v1509 = vadd.f32 %v1420, %v1508
      %v1510 = vpop.f32.mrf.mxu0
      %1511 = vmatprep.mubr.bf16.mxu0 0
      %1512 = vmatmul.mubr.bf16.gmra.mxu0 %v688
      %v1513 = vpop.f32.mrf.mxu0
      %v1514 = vadd.f32 %v1425, %v1513
      %v1515 = vpop.f32.mrf.mxu0
      %v1516 = vpop.f32.mrf.mxu0
      %v1517 = vadd.f32 %v1428, %v1516
      %v1518 = vpop.f32.mrf.mxu0
      %1519 = vmatprep.mubr.bf16.mxu0 0
      %1520 = vmatmul.mubr.bf16.gmra.mxu0 %v691
      %v1521 = vpop.f32.mrf.mxu0
      %v1522 = vadd.f32 %v1433, %v1521
      %v1523 = vpop.f32.mrf.mxu0
      %v1524 = vpop.f32.mrf.mxu0
      %v1525 = vadd.f32 %v1436, %v1524
      %v1526 = vpop.f32.mrf.mxu0
      %1527 = vmatprep.mubr.bf16.mxu0 0
      %1528 = vmatmul.mubr.bf16.gmra.mxu0 %v694
      %v1529 = vpop.f32.mrf.mxu0
      %v1530 = vadd.f32 %v1441, %v1529
      %v1531 = vpop.f32.mrf.mxu0
      %v1532 = vpop.f32.mrf.mxu0
      %v1533 = vadd.f32 %v1444, %v1532
      %v1534 = vpop.f32.mrf.mxu0
      %1535 = vdwg.mxu0
      %v1536 = vadd.f32 %v1506, %v872
      %v1537 = vadd.f32 %v1509, %v872
      %v1538 = vadd.f32 %v1514, %v872
      %v1539 = vadd.f32 %v1517, %v872
      %v1540 = vadd.f32 %v1522, %v872
      %v1541 = vadd.f32 %v1525, %v872
      %v1542 = vadd.f32 %v1530, %v872
      %v1543 = vadd.f32 %v1533, %v872
      %s1544 = scalar_lea.vmem %s3, 192
      %v1545 = vld [vmem:[%s1544] sm:$0xf]
      %v1546 = vld [vmem:[%s1544 + $0x4] sm:$0xf]
      %v1547 = vld [vmem:[%s1544 + $0x8] sm:$0xf]
      %v1548 = vld [vmem:[%s1544 + $0xc] sm:$0xf]
      %v1549 = vld [vmem:[%s1544 + $0x10] sm:$0xf]
      %v1550 = vld [vmem:[%s1544 + $0x14] sm:$0xf]
      %v1551 = vld [vmem:[%s1544 + $0x18] sm:$0xf]
      %v1552 = vld [vmem:[%s1544 + $0x1c] sm:$0xf]
      %v1553 = vunpack.c.h.b16 %v1342
      %v1554 = vpack.c.b16 %v1353, %v1353
      %v1555 = vpack.c.b16 %v1553, %v1553
      %v1557 = vshrl.u32 %v1554, 16
      %v1559 = vrot.slane %v1557, 4
      %v1560 = vshll.u32 %v1554, 16
      %v1562 = vrot.slane %v1560, 5
      %v1563 = vor.u32 %v1559, %v1562
      %v1564 = vrot.slane %v1563, 4
      %v1566 = vshll.u32 %v1555, 16
      %v1568 = vrot.slane %v1566, 5
      %v1569 = vsel %vm908, %v1564, %v1568
      %s1570 = scalar_lea.vmem %s3, 224
      %v1571 = vld [vmem:[%s1570] sm:$0xf]
      %v1572 = vld [vmem:[%s1570 + $0x4] sm:$0xf]
      %v1573 = vld [vmem:[%s1570 + $0x8] sm:$0xf]
      %v1574 = vld [vmem:[%s1570 + $0xc] sm:$0xf]
      %v1575 = vld [vmem:[%s1570 + $0x10] sm:$0xf]
      %v1576 = vld [vmem:[%s1570 + $0x14] sm:$0xf]
      %v1577 = vld [vmem:[%s1570 + $0x18] sm:$0xf]
      %v1578 = vld [vmem:[%s1570 + $0x1c] sm:$0xf]
      %v1579 = vunpack.c.l.b16 %v1569
      %v1580 = vpack.c.b16 %v1579, %v1063
      %v1589 = vunpack.c.l.b16 %v1571
      %v1590 = vunpack.c.l.b16 %v1572
      %v1591 = vunpack.c.l.b16 %v1573
      %v1592 = vunpack.c.l.b16 %v1574
      %v1593 = vunpack.c.l.b16 %v1575
      %v1594 = vunpack.c.l.b16 %v1576
      %v1595 = vunpack.c.l.b16 %v1577
      %v1596 = vunpack.c.l.b16 %v1578
      %v1597 = vpack.c.b16 %v1590, %v1589
      %v1598 = vpack.c.b16 %v1592, %v1591
      %v1599 = vpack.c.b16 %v1594, %v1593
      %v1600 = vpack.c.b16 %v1596, %v1595
      %v1606 = vsel %vm683, %v1580, 0
      %1608 = vmatprep.subr.bf16.mxu0 0
      %1609 = vmatpush1.bf16.msra.mxu0 0
      %1610 = vmatprep.subr.bf16.mxu0 0
      %1611 = vmatpush1.bf16.msra.mxu0 0
      %1612 = vmatprep.subr.bf16.mxu0 0
      %1613 = vmatpush1.bf16.msra.mxu0 0
      %1614 = vmatprep.subr.bf16.mxu0 0
      %1615 = vmatpush1.bf16.msra.mxu0 0
      %1616 = vmatprep.subr.bf16.mxu0 0
      %1617 = vmatpush1.bf16.msra.mxu0 %v1600
      %1618 = vmatprep.subr.bf16.mxu0 0
      %1619 = vmatpush1.bf16.msra.mxu0 %v1599
      %1620 = vmatprep.subr.bf16.mxu0 0
      %1621 = vmatpush1.bf16.msra.mxu0 %v1598
      %1622 = vmatprep.subr.bf16.mxu0 0
      %1623 = vmatpush1.bf16.msra.mxu0 %v1597
      %1624 = vmatprep.subr.bf16.mxu0 0
      %1625 = vmatpush2.bf16.msra.mxu0 0
      %1626 = vmatprep.subr.bf16.mxu0 0
      %1627 = vmatpush2.bf16.msra.mxu0 0
      %1628 = vmatprep.subr.bf16.mxu0 0
      %1629 = vmatpush2.bf16.msra.mxu0 0
      %1630 = vmatprep.subr.bf16.mxu0 0
      %1631 = vmatpush2.bf16.msra.mxu0 0
      %1632 = vmatprep.subr.bf16.mxu0 0
      %1633 = vmatpush2.bf16.msra.mxu0 0
      %1634 = vmatprep.subr.bf16.mxu0 0
      %1635 = vmatpush2.bf16.msra.mxu0 0
      %1636 = vmatprep.subr.bf16.mxu0 0
      %1637 = vmatpush2.bf16.msra.mxu0 0
      %1638 = vmatprep.subr.bf16.mxu0 0
      %1639 = vmatpush2.bf16.msra.mxu0 0
      %1640 = vmatprep.mubr.bf16.mxu0 0
      %1641 = vmatmul.mubr.bf16.gmra.mxu0 %v1202
      %v1642 = vpop.f32.mrf.mxu0
      %v1643 = vadd.f32 0.0, %v1642
      %v1644 = vpop.f32.mrf.mxu0
      %v1645 = vpop.f32.mrf.mxu0
      %v1646 = vadd.f32 0.0, %v1645
      %v1647 = vpop.f32.mrf.mxu0
      %1648 = vmatprep.mubr.bf16.mxu0 0
      %1649 = vmatmul.mubr.bf16.gmra.mxu0 %v1205
      %v1650 = vpop.f32.mrf.mxu0
      %v1651 = vadd.f32 0.0, %v1650
      %v1652 = vpop.f32.mrf.mxu0
      %v1653 = vpop.f32.mrf.mxu0
      %v1654 = vadd.f32 0.0, %v1653
      %v1655 = vpop.f32.mrf.mxu0
      %1656 = vmatprep.mubr.bf16.mxu0 0
      %1657 = vmatmul.mubr.bf16.gmra.mxu0 %v1208
      %v1658 = vpop.f32.mrf.mxu0
      %v1659 = vadd.f32 0.0, %v1658
      %v1660 = vpop.f32.mrf.mxu0
      %v1661 = vpop.f32.mrf.mxu0
      %v1662 = vadd.f32 0.0, %v1661
      %v1663 = vpop.f32.mrf.mxu0
      %1664 = vmatprep.mubr.bf16.mxu0 0
      %1665 = vmatmul.mubr.bf16.gmra.mxu0 %v1606
      %v1666 = vpop.f32.mrf.mxu0
      %v1667 = vadd.f32 0.0, %v1666
      %v1668 = vpop.f32.mrf.mxu0
      %v1669 = vpop.f32.mrf.mxu0
      %v1670 = vadd.f32 0.0, %v1669
      %v1671 = vpop.f32.mrf.mxu0
      %1672 = vdwg.mxu0
      %v1681 = vunpack.c.l.b16 %v1545
      %v1682 = vunpack.c.l.b16 %v1546
      %v1683 = vunpack.c.l.b16 %v1547
      %v1684 = vunpack.c.l.b16 %v1548
      %v1685 = vunpack.c.l.b16 %v1549
      %v1686 = vunpack.c.l.b16 %v1550
      %v1687 = vunpack.c.l.b16 %v1551
      %v1688 = vunpack.c.l.b16 %v1552
      %v1689 = vpack.c.b16 %v1682, %v1681
      %v1690 = vpack.c.b16 %v1684, %v1683
      %v1691 = vpack.c.b16 %v1686, %v1685
      %v1692 = vpack.c.b16 %v1688, %v1687
      %1697 = vmatprep.subr.bf16.mxu0 0
      %1698 = vmatpush1.bf16.msra.mxu0 0
      %1699 = vmatprep.subr.bf16.mxu0 0
      %1700 = vmatpush1.bf16.msra.mxu0 0
      %1701 = vmatprep.subr.bf16.mxu0 0
      %1702 = vmatpush1.bf16.msra.mxu0 0
      %1703 = vmatprep.subr.bf16.mxu0 0
      %1704 = vmatpush1.bf16.msra.mxu0 0
      %1705 = vmatprep.subr.bf16.mxu0 0
      %1706 = vmatpush1.bf16.msra.mxu0 %v1692
      %1707 = vmatprep.subr.bf16.mxu0 0
      %1708 = vmatpush1.bf16.msra.mxu0 %v1691
      %1709 = vmatprep.subr.bf16.mxu0 0
      %1710 = vmatpush1.bf16.msra.mxu0 %v1690
      %1711 = vmatprep.subr.bf16.mxu0 0
      %1712 = vmatpush1.bf16.msra.mxu0 %v1689
      %1713 = vmatprep.subr.bf16.mxu0 0
      %1714 = vmatpush2.bf16.msra.mxu0 0
      %1715 = vmatprep.subr.bf16.mxu0 0
      %1716 = vmatpush2.bf16.msra.mxu0 0
      %1717 = vmatprep.subr.bf16.mxu0 0
      %1718 = vmatpush2.bf16.msra.mxu0 0
      %1719 = vmatprep.subr.bf16.mxu0 0
      %1720 = vmatpush2.bf16.msra.mxu0 0
      %1721 = vmatprep.subr.bf16.mxu0 0
      %1722 = vmatpush2.bf16.msra.mxu0 0
      %1723 = vmatprep.subr.bf16.mxu0 0
      %1724 = vmatpush2.bf16.msra.mxu0 0
      %1725 = vmatprep.subr.bf16.mxu0 0
      %1726 = vmatpush2.bf16.msra.mxu0 0
      %1727 = vmatprep.subr.bf16.mxu0 0
      %1728 = vmatpush2.bf16.msra.mxu0 0
      %1729 = vmatprep.mubr.bf16.mxu0 0
      %1730 = vmatmul.mubr.bf16.gmra.mxu0 %v1093
      %v1731 = vpop.f32.mrf.mxu0
      %v1732 = vadd.f32 %v1643, %v1731
      %v1733 = vpop.f32.mrf.mxu0
      %v1734 = vpop.f32.mrf.mxu0
      %v1735 = vadd.f32 %v1646, %v1734
      %v1736 = vpop.f32.mrf.mxu0
      %1737 = vmatprep.mubr.bf16.mxu0 0
      %1738 = vmatmul.mubr.bf16.gmra.mxu0 %v1096
      %v1739 = vpop.f32.mrf.mxu0
      %v1740 = vadd.f32 %v1651, %v1739
      %v1741 = vpop.f32.mrf.mxu0
      %v1742 = vpop.f32.mrf.mxu0
      %v1743 = vadd.f32 %v1654, %v1742
      %v1744 = vpop.f32.mrf.mxu0
      %1745 = vmatprep.mubr.bf16.mxu0 0
      %1746 = vmatmul.mubr.bf16.gmra.mxu0 %v1099
      %v1747 = vpop.f32.mrf.mxu0
      %v1748 = vadd.f32 %v1659, %v1747
      %v1749 = vpop.f32.mrf.mxu0
      %v1750 = vpop.f32.mrf.mxu0
      %v1751 = vadd.f32 %v1662, %v1750
      %v1752 = vpop.f32.mrf.mxu0
      %1753 = vmatprep.mubr.bf16.mxu0 0
      %1754 = vmatmul.mubr.bf16.gmra.mxu0 %v1102
      %v1755 = vpop.f32.mrf.mxu0
      %v1756 = vadd.f32 %v1667, %v1755
      %v1757 = vpop.f32.mrf.mxu0
      %v1758 = vpop.f32.mrf.mxu0
      %v1759 = vadd.f32 %v1670, %v1758
      %v1760 = vpop.f32.mrf.mxu0
      %1761 = vdwg.mxu0
      %v1762 = vadd.f32 %v1732, %v872
      %v1763 = vadd.f32 %v1735, %v872
      %v1764 = vadd.f32 %v1740, %v872
      %v1765 = vadd.f32 %v1743, %v872
      %v1766 = vadd.f32 %v1748, %v872
      %v1767 = vadd.f32 %v1751, %v872
      %v1768 = vadd.f32 %v1756, %v872
      %v1769 = vadd.f32 %v1759, %v872
      %1778 = vrot.lane.b32.xlu0 %v1762, 32
      %v1779 = vpop.permute.xlu0 %1778
      %1780 = vrot.lane.b32.xlu0 %v1763, 32
      %v1781 = vpop.permute.xlu0 %1780
      %1782 = vrot.lane.b32.xlu0 %v1764, 32
      %v1783 = vpop.permute.xlu0 %1782
      %1784 = vrot.lane.b32.xlu0 %v1765, 32
      %v1785 = vpop.permute.xlu0 %1784
      %1786 = vrot.lane.b32.xlu0 %v1766, 32
      %v1787 = vpop.permute.xlu0 %1786
      %1788 = vrot.lane.b32.xlu0 %v1767, 32
      %v1789 = vpop.permute.xlu0 %1788
      %1790 = vrot.lane.b32.xlu0 %v1768, 32
      %v1791 = vpop.permute.xlu0 %1790
      %1792 = vrot.lane.b32.xlu0 %v1769, 32
      %v1793 = vpop.permute.xlu0 %1792
      %v1802 = vsel %vm594, %v1536, %v1779
      %v1803 = vsel %vm594, %v1537, %v1781
      %v1804 = vsel %vm594, %v1538, %v1783
      %v1805 = vsel %vm594, %v1539, %v1785
      %v1806 = vsel %vm594, %v1540, %v1787
      %v1807 = vsel %vm594, %v1541, %v1789
      %v1808 = vsel %vm594, %v1542, %v1791
      %v1809 = vsel %vm594, %v1543, %v1793
      %1810 = vst.msk [vmem:[%s382] sm:$0xff] %vm683, %v1315
      %1811 = vst.msk [vmem:[%s382 + $0x8] sm:$0xff] %vm683, %v1802
      %1812 = vst.msk [vmem:[%s382 + $0x10] sm:$0xff] %vm683, %v1316
      %1813 = vst.msk [vmem:[%s382 + $0x18] sm:$0xff] %vm683, %v1803
      %1814 = vst.msk [vmem:[%s382 + $0x20] sm:$0xff] %vm683, %v1317
      %1815 = vst.msk [vmem:[%s382 + $0x28] sm:$0xff] %vm683, %v1804
      %1816 = vst.msk [vmem:[%s382 + $0x30] sm:$0xff] %vm683, %v1318
      %1817 = vst.msk [vmem:[%s382 + $0x38] sm:$0xff] %vm683, %v1805
      %1818 = vst.msk [vmem:[%s382 + $0x40] sm:$0xff] %vm683, %v1319
      %1819 = vst.msk [vmem:[%s382 + $0x48] sm:$0xff] %vm683, %v1806
      %1820 = vst.msk [vmem:[%s382 + $0x50] sm:$0xff] %vm683, %v1320
      %1821 = vst.msk [vmem:[%s382 + $0x58] sm:$0xff] %vm683, %v1807
      %1822 = vst.msk [vmem:[%s382 + $0x60] sm:$0xff] %vm683, %v1321
      %1823 = vst.msk [vmem:[%s382 + $0x68] sm:$0xff] %vm683, %v1808
      %1824 = vst.msk [vmem:[%s382 + $0x70] sm:$0xff] %vm683, %v1322
      %1825 = vst.msk [vmem:[%s382 + $0x78] sm:$0xff] %vm683, %v1809
      %s1826 = smul.u32 8, %s21
      %p1827 = scmp.lt.s32.totalorder %s20, 1
      %s1828 = scalar_select %p1827, %s20, 1
      %p1829 = scmp.lt.s32.totalorder %s1826, 7
      %s1830 = scalar_select %p1829, %s1826, 7
      %s1831 = smul.addr %s1830, 2
      %s1832 = smul.addr %s1828, 16
      %s1833 = sadd.s32 %s1831, %s1832
      %s1834 = smul.addr %s1833, 8
      %s1835 = scalar_lea.vmem %s5, %s1834
      // Predicated region
      $region41: #{up_decoder_block_2d.7} parent=39 // pred_check
        %p1836 = pneg %p190
      $region42: #{up_decoder_block_2d.7} parent=39 // pred_check_branch
        %1838 = sbr.rel (%p1836) target = $region44
      $region43: #{up_decoder_block_2d.7} parent=39 // pred_region
        %s1839 = smul.u32 8, %s21
      $region44: #{up_decoder_block_2d.7} parent=39 // pred_fallthru
        _
    $region40: #{up_decoder_block_2d.7} parent=5 // pred_fallthru
      _
    %p1840 = scmp.le.s32.totalorder 2, %s11
    // Predicated region
    $region45: #{up_decoder_block_2d.7} parent=5 // pred_check
      %p1841 = pneg %p1840
    $region46: #{up_decoder_block_2d.7} parent=5 // pred_check_branch
      %1843 = sbr.rel (%p1841) target = $region48
    $region47: #{up_decoder_block_2d.7} parent=5 // pred_region
      %s1844 = ssub.s32 %s11, 2
      // Predicated region
      $region49: #{up_decoder_block_2d.7} parent=47 // pred_check
        %p1845 = pneg %p196
      $region50: #{up_decoder_block_2d.7} parent=47 // pred_check_branch
        %1847 = sbr.rel (%p1845) target = $region52
      $region51: #{up_decoder_block_2d.7} parent=47 // pred_region
        %s1848 = smul.u32 8, %s23
        %p1849 = scmp.lt.s32.totalorder %s22, 1
        %s1850 = scalar_select %p1849, %s22, 1
        %p1851 = scmp.lt.s32.totalorder %s1848, 7
        %s1852 = scalar_select %p1851, %s1848, 7
        %s1853 = smul.addr %s1852, 2
        %s1854 = smul.addr %s1850, 16
        %s1855 = sadd.s32 %s1853, %s1854
        %s1856 = smul.addr %s1855, 8
        %s1857 = scalar_lea.vmem %s5, %s1856
      $region52: #{up_decoder_block_2d.7} parent=47 // pred_fallthru
        _
    $region48: #{up_decoder_block_2d.7} parent=5 // pred_fallthru
      _
  $region6: #{up_decoder_block_2d.7} parent=0 // loop_footer
    %s15 = sadd.s32 1, %s11
  $region7: #{up_decoder_block_2d.7} parent=0 // loop_footer_branch
    %10 = sbr.rel target = $region3
  $region8: #{up_decoder_block_2d.7} parent=0 // loop_exit
    _

</llo_original>
